<compile_context>
chip_gen: v7x
topology: tpu7x:2x2x1
jax: 0.10.0
libtpu: 0.0.40
codegen_flags: <defaults>
</compile_context>

<pallas_src>
import jax
import jax.numpy as jnp
from jax import lax
from jax.experimental import pallas as pl
from jax.experimental.pallas import tpu as pltpu


def pnn_kernel(idx_ref, val_ref, tbl_ref, w12_ref, wl1_ref, bl1_ref,
               wl2_ref, bl2_ref, whead_ref, bhead_ref, out_ref):
    TB, F = idx_ref.shape            # batch tile, field count
    FV, FE = tbl_ref.shape           # flattened vocab, flattened emb width
    D1 = w12_ref.shape[1] // 2

    idx = idx_ref[...]               # (TB, F) int32, pre-offset per field
    val = val_ref[...]               # (TB, F) f32 feature values

    # Fused embedding gather: value-scaled one-hot over the flattened
    # (field, vocab) axis. Fields occupy disjoint lane ranges, so the
    # accumulation below is exact.
    lane = lax.broadcasted_iota(jnp.int32, (TB, FV), 1)
    onehot = jnp.zeros((TB, FV), jnp.float32)
    for j in range(F):               # F is small and static
        onehot = onehot + jnp.where(lane == idx[:, j:j + 1],
                                    val[:, j:j + 1], 0.0)

    # emb[b, j*E+e] = tables[j, Xi[b,j], e] * Xv[b,j]  (block-diagonal table)
    emb = jnp.dot(onehot, tbl_ref[...], preferred_element_type=jnp.float32)

    # Product layer: first-order + inner-product parts in ONE fused matmul.
    x12 = jnp.dot(emb, w12_ref[...], preferred_element_type=jnp.float32)
    first = x12[:, :D1]
    s = x12[:, D1:]
    x = first + s * s                                              # (TB, D1)

    # Deep MLP (relu; eval-mode dropout == identity). Bias reads hoisted.
    b1 = bl1_ref[...]
    b2 = bl2_ref[...]
    x = jnp.maximum(
        jnp.dot(x, wl1_ref[...], preferred_element_type=jnp.float32) + b1, 0.0)
    x = jnp.maximum(
        jnp.dot(x, wl2_ref[...], preferred_element_type=jnp.float32) + b2, 0.0)

    # Collapsed head: out[b] = sum_c (x @ Wlast + blast)[b,c]
    #               = x @ Wlast.sum(axis=1) + blast.sum()
    # Computed as (1, D3) x (TB, D3)^T -> (1, TB): lane-dense output row.
    y = lax.dot_general(whead_ref[...], x, (((1,), (1,)), ((), ())),
                        preferred_element_type=jnp.float32)
    out_ref[...] = y + bhead_ref[0, 0]                              # (1, TB)


def pnn_forward(flat_idx, xv, kp, *, batch_tile=256):
    """flat_idx: (B, F) int32 field-offset indices; xv: (B, F) f32 values."""
    B, F = flat_idx.shape
    FV, FE = kp["tbl"].shape
    twoD1 = kp["w12"].shape[1]
    D1 = twoD1 // 2
    D2 = kp["wl1"].shape[1]
    D3 = kp["wl2"].shape[1]

    # Pad batch to a multiple of the tile (padded rows have value 0 -> garbage
    # output rows that get sliced off below).
    Bp = ((B + batch_tile - 1) // batch_tile) * batch_tile
    if Bp != B:
        flat_idx = jnp.pad(flat_idx, ((0, Bp - B), (0, 0)))
        xv = jnp.pad(xv, ((0, Bp - B), (0, 0)))
    num_tiles = Bp // batch_tile

    full = lambda shape: pl.BlockSpec(shape, lambda i: (0, 0))

    out = pl.pallas_call(
        pnn_kernel,
        out_shape=jax.ShapeDtypeStruct((1, Bp), jnp.float32),
        grid_spec=pltpu.PrefetchScalarGridSpec(
            num_scalar_prefetch=0,
            grid=(num_tiles,),
            in_specs=[
                pl.BlockSpec((batch_tile, F), lambda i: (i, 0)),   # flat_idx
                pl.BlockSpec((batch_tile, F), lambda i: (i, 0)),   # xv
                full((FV, FE)),                                    # block-diag tables
                full((FE, twoD1)),                                 # [w1 | w2]
                full((D1, D2)),                                    # wl1
                full((1, D2)),                                     # bl1
                full((D2, D3)),                                    # wl2
                full((1, D3)),                                     # bl2
                full((1, D3)),                                     # collapsed head weight
                full((1, 1)),                                      # collapsed head bias
            ],
            out_specs=pl.BlockSpec((1, batch_tile), lambda i: (0, i)),
        ),
        compiler_params=pltpu.CompilerParams(
            dimension_semantics=("parallel",)),
    )(flat_idx, xv, kp["tbl"], kp["w12"],
      kp["wl1"], kp["bl1"], kp["wl2"], kp["bl2"],
      kp["whead"], kp["bhead"])
    return out[0, :B]


def make_params(key, field_size, vocab, embedding_size, deep_layers, n_class):
    F, E = field_size, embedding_size
    D1, D2, D3 = deep_layers
    keys = jax.random.split(key, 10)
    p = {
        # embedding tables: all fields share the same vocab size -> stackable
        "tables": jax.random.normal(keys[0], (F, vocab, E), jnp.float32) * 0.1,
        # first_order_weight: (D1, F, E) flattened to (F*E, D1)
        "w1": (jax.random.normal(keys[1], (D1, F * E), jnp.float32) * 0.1).T,
        # inner_second_weight_emb: (D1, F, E) flattened to (F*E, D1)
        "w2": (jax.random.normal(keys[2], (D1, F * E), jnp.float32) * 0.1).T,
        # linear_1 / linear_2 / deep_last_layer, stored (in, out)
        "wl1": jax.random.normal(keys[3], (D1, D2), jnp.float32) * 0.1,
        "bl1": jax.random.normal(keys[4], (1, D2), jnp.float32) * 0.1,
        "wl2": jax.random.normal(keys[5], (D2, D3), jnp.float32) * 0.1,
        "bl2": jax.random.normal(keys[6], (1, D3), jnp.float32) * 0.1,
        "wlast": jax.random.normal(keys[7], (D3, n_class), jnp.float32) * 0.1,
        "blast": jax.random.normal(keys[8], (1, n_class), jnp.float32) * 0.1,
    }
    return p


def prepare_kernel_params(p):
    """Layout transforms done once in the wrapper (no matmuls, exact)."""
    F, V, E = p["tables"].shape
    # Block-diagonal (F*V, F*E) table: scaled-one-hot @ tbl == gather * Xv.
    tbl = jnp.zeros((F * V, F * E), jnp.float32)
    for j in range(F):
        tbl = tbl.at[j * V:(j + 1) * V, j * E:(j + 1) * E].set(p["tables"][j])
    return {
        "tbl": tbl,
        "w12": jnp.concatenate([p["w1"], p["w2"]], axis=1),    # (F*E, 2*D1)
        "wl1": p["wl1"], "bl1": p["bl1"],
        "wl2": p["wl2"], "bl2": p["bl2"],
        # Collapsed n_class head (exact for n_class=1).
        "whead": p["wlast"].sum(axis=1, keepdims=True).T,      # (1, D3)
        "bhead": p["blast"].sum().reshape(1, 1),               # (1, 1)
    }


def reference_forward(Xi, Xv, p):
    """Pure-JAX reference matching the PyTorch module's forward (eval mode)."""
    B, F, _ = Xi.shape
    idx = Xi[:, :, 0]
    gathered = jnp.take_along_axis(
        p["tables"][None, :, :, :], idx[:, :, None, None], axis=2)[:, :, 0, :]
    emb_flat = (gathered * Xv[:, :, None]).reshape(B, -1).astype(jnp.float32)
    first = emb_flat @ p["w1"]
    s = emb_flat @ p["w2"]
    x = first + s * s
    x = jnp.maximum(x @ p["wl1"] + p["bl1"], 0.0)
    x = jnp.maximum(x @ p["wl2"] + p["bl2"], 0.0)
    y = x @ p["wlast"] + p["blast"]
    return jnp.sum(y, axis=1)


if __name__ == "__main__":
    # Shapes consistent with the module's defaults (batch > tile to exercise
    # both padding and a >=2-step parallel grid).
    B = 500                 # batch (padded to 512 inside the wrapper)
    F = 4                   # field_size
    V = 10                  # vocab size per field (feature_sizes = [10]*4)
    E = 4                   # embedding_size
    deep_layers = [32, 32, 32]
    n_class = 1

    key = jax.random.PRNGKey(0)
    k_param, k_xi, k_xv = jax.random.split(key, 3)
    params = make_params(k_param, F, V, E, deep_layers, n_class)
    kparams = prepare_kernel_params(params)

    Xi = jax.random.randint(k_xi, (B, F, 1), 0, V, dtype=jnp.int32)
    Xv = jax.random.uniform(k_xv, (B, F), jnp.float32)

    # Flatten (field, index) -> single index into the stacked vocab axis.
    field_offsets = (jnp.arange(F, dtype=jnp.int32) * V)[None, :]
    flat_idx = Xi[:, :, 0] + field_offsets                     # (B, F) int32

    out = pnn_forward(flat_idx, Xv, kparams, batch_tile=256)
    out = jax.block_until_ready(out)

    ref = reference_forward(Xi, Xv, params)
    assert out.shape == (B,)
    assert jnp.allclose(out, ref, atol=1e-4, rtol=1e-3), (
        float(jnp.max(jnp.abs(out - ref))))

    print("KERNEL_OK")
</pallas_src>

<mosaic_0001>
module attributes {stable_mosaic.version = 11 : i64} {
  func.func @pnn_kernel(%arg0: i32, %arg1: memref<256x4xi32, #tpu.memory_space<vmem>>, %arg2: memref<256x4xf32, #tpu.memory_space<vmem>>, %arg3: memref<40x16xf32, #tpu.memory_space<vmem>>, %arg4: memref<16x64xf32, #tpu.memory_space<vmem>>, %arg5: memref<32x32xf32, #tpu.memory_space<vmem>>, %arg6: memref<1x32xf32, #tpu.memory_space<vmem>>, %arg7: memref<32x32xf32, #tpu.memory_space<vmem>>, %arg8: memref<1x32xf32, #tpu.memory_space<vmem>>, %arg9: memref<1x32xf32, #tpu.memory_space<vmem>>, %arg10: memref<1x1xf32, #tpu.memory_space<vmem>>, %arg11: memref<1x256xf32, #tpu.memory_space<vmem>>) attributes {dimension_semantics = [#tpu.dimension_semantics<parallel>], iteration_bounds = array<i64: 2>, scalar_prefetch = 0 : i64, scratch_operands = 0 : i64, tpu.core_type = #tpu.core_type<tc>, window_params = [{transform_indices = @transform_0, window_bounds = array<i64: 256, 4>}, {transform_indices = @transform_1, window_bounds = array<i64: 256, 4>}, {pipeline_mode = #tpu.pipeline_mode<synchronous>, transform_indices = @transform_2, window_bounds = array<i64: 40, 16>}, {pipeline_mode = #tpu.pipeline_mode<synchronous>, transform_indices = @transform_3, window_bounds = array<i64: 16, 64>}, {pipeline_mode = #tpu.pipeline_mode<synchronous>, transform_indices = @transform_4, window_bounds = array<i64: 32, 32>}, {pipeline_mode = #tpu.pipeline_mode<synchronous>, transform_indices = @transform_5, window_bounds = array<i64: 1, 32>}, {pipeline_mode = #tpu.pipeline_mode<synchronous>, transform_indices = @transform_6, window_bounds = array<i64: 32, 32>}, {pipeline_mode = #tpu.pipeline_mode<synchronous>, transform_indices = @transform_7, window_bounds = array<i64: 1, 32>}, {pipeline_mode = #tpu.pipeline_mode<synchronous>, transform_indices = @transform_8, window_bounds = array<i64: 1, 32>}, {pipeline_mode = #tpu.pipeline_mode<synchronous>, transform_indices = @transform_9, window_bounds = array<i64: 1, 1>}, {transform_indices = @transform_10, window_bounds = array<i64: 1, 256>}]} {
    %c0 = arith.constant 0 : index
    %c0_0 = arith.constant 0 : index
    %0 = vector.load %arg1[%c0, %c0_0] : memref<256x4xi32, #tpu.memory_space<vmem>>, vector<256x4xi32>
    %c0_1 = arith.constant 0 : index
    %c0_2 = arith.constant 0 : index
    %1 = vector.load %arg2[%c0_1, %c0_2] : memref<256x4xf32, #tpu.memory_space<vmem>>, vector<256x4xf32>
    %2 = tpu.iota {dimensions = array<i32: 1>} : vector<256x40xi32>
    %cst = arith.constant 0.000000e+00 : f32
    %3 = vector.broadcast %cst : f32 to vector<256x40xf32>
    %4 = vector.extract_strided_slice %0 {offsets = [0, 0], sizes = [256, 1], strides = [1, 1]} : vector<256x4xi32> to vector<256x1xi32>
    %5 = vector.broadcast %4 : vector<256x1xi32> to vector<256x40xi32>
    %6 = arith.cmpi eq, %2, %5 : vector<256x40xi32>
    %7 = vector.extract_strided_slice %1 {offsets = [0, 0], sizes = [256, 1], strides = [1, 1]} : vector<256x4xf32> to vector<256x1xf32>
    %cst_3 = arith.constant 0.000000e+00 : f32
    %8 = vector.shape_cast %7 : vector<256x1xf32> to vector<256x1xf32>
    %9 = vector.broadcast %8 : vector<256x1xf32> to vector<256x40xf32>
    %10 = vector.broadcast %cst_3 : f32 to vector<256x40xf32>
    %11 = arith.select %6, %9, %10 : vector<256x40xi1>, vector<256x40xf32>
    %12 = arith.addf %3, %11 : vector<256x40xf32>
    %13 = vector.extract_strided_slice %0 {offsets = [0, 1], sizes = [256, 1], strides = [1, 1]} : vector<256x4xi32> to vector<256x1xi32>
    %14 = vector.broadcast %13 : vector<256x1xi32> to vector<256x40xi32>
    %15 = arith.cmpi eq, %2, %14 : vector<256x40xi32>
    %16 = vector.extract_strided_slice %1 {offsets = [0, 1], sizes = [256, 1], strides = [1, 1]} : vector<256x4xf32> to vector<256x1xf32>
    %cst_4 = arith.constant 0.000000e+00 : f32
    %17 = vector.shape_cast %16 : vector<256x1xf32> to vector<256x1xf32>
    %18 = vector.broadcast %17 : vector<256x1xf32> to vector<256x40xf32>
    %19 = vector.broadcast %cst_4 : f32 to vector<256x40xf32>
    %20 = arith.select %15, %18, %19 : vector<256x40xi1>, vector<256x40xf32>
    %21 = arith.addf %12, %20 : vector<256x40xf32>
    %22 = vector.extract_strided_slice %0 {offsets = [0, 2], sizes = [256, 1], strides = [1, 1]} : vector<256x4xi32> to vector<256x1xi32>
    %23 = vector.broadcast %22 : vector<256x1xi32> to vector<256x40xi32>
    %24 = arith.cmpi eq, %2, %23 : vector<256x40xi32>
    %25 = vector.extract_strided_slice %1 {offsets = [0, 2], sizes = [256, 1], strides = [1, 1]} : vector<256x4xf32> to vector<256x1xf32>
    %cst_5 = arith.constant 0.000000e+00 : f32
    %26 = vector.shape_cast %25 : vector<256x1xf32> to vector<256x1xf32>
    %27 = vector.broadcast %26 : vector<256x1xf32> to vector<256x40xf32>
    %28 = vector.broadcast %cst_5 : f32 to vector<256x40xf32>
    %29 = arith.select %24, %27, %28 : vector<256x40xi1>, vector<256x40xf32>
    %30 = arith.addf %21, %29 : vector<256x40xf32>
    %31 = vector.extract_strided_slice %0 {offsets = [0, 3], sizes = [256, 1], strides = [1, 1]} : vector<256x4xi32> to vector<256x1xi32>
    %32 = vector.broadcast %31 : vector<256x1xi32> to vector<256x40xi32>
    %33 = arith.cmpi eq, %2, %32 : vector<256x40xi32>
    %34 = vector.extract_strided_slice %1 {offsets = [0, 3], sizes = [256, 1], strides = [1, 1]} : vector<256x4xf32> to vector<256x1xf32>
    %cst_6 = arith.constant 0.000000e+00 : f32
    %35 = vector.shape_cast %34 : vector<256x1xf32> to vector<256x1xf32>
    %36 = vector.broadcast %35 : vector<256x1xf32> to vector<256x40xf32>
    %37 = vector.broadcast %cst_6 : f32 to vector<256x40xf32>
    %38 = arith.select %33, %36, %37 : vector<256x40xi1>, vector<256x40xf32>
    %39 = arith.addf %30, %38 : vector<256x40xf32>
    %c0_7 = arith.constant 0 : index
    %c0_8 = arith.constant 0 : index
    %40 = vector.load %arg3[%c0_7, %c0_8] : memref<40x16xf32, #tpu.memory_space<vmem>>, vector<40x16xf32>
    %cst_9 = arith.constant dense<0.000000e+00> : vector<256x16xf32>
    %41 = tpu.matmul %39, %40, %cst_9 {dimension_numbers = #tpu.dot_dimension_numbers<[1], [0], [0], [1], [0, 0, 1, 1], [], []>} : vector<256x40xf32>, vector<40x16xf32>, vector<256x16xf32> -> vector<256x16xf32>
    %c0_10 = arith.constant 0 : index
    %c0_11 = arith.constant 0 : index
    %42 = vector.load %arg4[%c0_10, %c0_11] : memref<16x64xf32, #tpu.memory_space<vmem>>, vector<16x64xf32>
    %cst_12 = arith.constant dense<0.000000e+00> : vector<256x64xf32>
    %43 = tpu.matmul %41, %42, %cst_12 {dimension_numbers = #tpu.dot_dimension_numbers<[1], [0], [0], [1], [0, 0, 1, 1], [], []>} : vector<256x16xf32>, vector<16x64xf32>, vector<256x64xf32> -> vector<256x64xf32>
    %44 = vector.extract_strided_slice %43 {offsets = [0, 0], sizes = [256, 32], strides = [1, 1]} : vector<256x64xf32> to vector<256x32xf32>
    %45 = vector.extract_strided_slice %43 {offsets = [0, 32], sizes = [256, 32], strides = [1, 1]} : vector<256x64xf32> to vector<256x32xf32>
    %46 = arith.mulf %45, %45 : vector<256x32xf32>
    %47 = arith.addf %44, %46 : vector<256x32xf32>
    %c0_13 = arith.constant 0 : index
    %c0_14 = arith.constant 0 : index
    %48 = vector.load %arg6[%c0_13, %c0_14] : memref<1x32xf32, #tpu.memory_space<vmem>>, vector<1x32xf32>
    %c0_15 = arith.constant 0 : index
    %c0_16 = arith.constant 0 : index
    %49 = vector.load %arg8[%c0_15, %c0_16] : memref<1x32xf32, #tpu.memory_space<vmem>>, vector<1x32xf32>
    %c0_17 = arith.constant 0 : index
    %c0_18 = arith.constant 0 : index
    %50 = vector.load %arg5[%c0_17, %c0_18] : memref<32x32xf32, #tpu.memory_space<vmem>>, vector<32x32xf32>
    %cst_19 = arith.constant dense<0.000000e+00> : vector<256x32xf32>
    %51 = tpu.matmul %47, %50, %cst_19 {dimension_numbers = #tpu.dot_dimension_numbers<[1], [0], [0], [1], [0, 0, 1, 1], [], []>} : vector<256x32xf32>, vector<32x32xf32>, vector<256x32xf32> -> vector<256x32xf32>
    %52 = vector.broadcast %48 : vector<1x32xf32> to vector<256x32xf32>
    %53 = arith.addf %51, %52 : vector<256x32xf32>
    %cst_20 = arith.constant 0.000000e+00 : f32
    %54 = vector.broadcast %cst_20 : f32 to vector<256x32xf32>
    %55 = arith.maximumf %53, %54 : vector<256x32xf32>
    %c0_21 = arith.constant 0 : index
    %c0_22 = arith.constant 0 : index
    %56 = vector.load %arg7[%c0_21, %c0_22] : memref<32x32xf32, #tpu.memory_space<vmem>>, vector<32x32xf32>
    %cst_23 = arith.constant dense<0.000000e+00> : vector<256x32xf32>
    %57 = tpu.matmul %55, %56, %cst_23 {dimension_numbers = #tpu.dot_dimension_numbers<[1], [0], [0], [1], [0, 0, 1, 1], [], []>} : vector<256x32xf32>, vector<32x32xf32>, vector<256x32xf32> -> vector<256x32xf32>
    %58 = vector.broadcast %49 : vector<1x32xf32> to vector<256x32xf32>
    %59 = arith.addf %57, %58 : vector<256x32xf32>
    %cst_24 = arith.constant 0.000000e+00 : f32
    %60 = vector.broadcast %cst_24 : f32 to vector<256x32xf32>
    %61 = arith.maximumf %59, %60 : vector<256x32xf32>
    %c0_25 = arith.constant 0 : index
    %c0_26 = arith.constant 0 : index
    %62 = vector.load %arg9[%c0_25, %c0_26] : memref<1x32xf32, #tpu.memory_space<vmem>>, vector<1x32xf32>
    %cst_27 = arith.constant dense<0.000000e+00> : vector<1x256xf32>
    %63 = tpu.matmul %62, %61, %cst_27 {dimension_numbers = #tpu.dot_dimension_numbers<[1], [1], [0], [0], [0, 0, 1, 0], [], []>} : vector<1x32xf32>, vector<256x32xf32>, vector<1x256xf32> -> vector<1x256xf32>
    %c0_28 = arith.constant 0 : index
    %c0_29 = arith.constant 0 : index
    %64 = vector.load %arg10[%c0_28, %c0_29] : memref<1x1xf32, #tpu.memory_space<vmem>>, vector<1x1xf32>
    %65 = vector.extract %64[0, 0] : f32 from vector<1x1xf32>
    %66 = vector.broadcast %65 : f32 to vector<1x256xf32>
    %67 = arith.addf %63, %66 : vector<1x256xf32>
    %c0_30 = arith.constant 0 : index
    %c0_31 = arith.constant 0 : index
    %68 = vector.load %arg11[%c0_30, %c0_31] : memref<1x256xf32, #tpu.memory_space<vmem>>, vector<1x256xf32>
    tpu.vector_store %arg11[%c0_30, %c0_31], %67 {strides = array<i32>} : memref<1x256xf32, #tpu.memory_space<vmem>>, vector<1x256xf32>,
    return
  }
  func.func @transform_0(%arg0: i32) -> (i32, i32) {
    %c0_i32 = arith.constant 0 : i32
    %c0_i32_0 = arith.constant 0 : i32
    return %arg0, %c0_i32 : i32, i32
  }
  func.func @transform_1(%arg0: i32) -> (i32, i32) {
    %c0_i32 = arith.constant 0 : i32
    %c0_i32_0 = arith.constant 0 : i32
    return %arg0, %c0_i32 : i32, i32
  }
  func.func @transform_2(%arg0: i32) -> (i32, i32) {
    %c0_i32 = arith.constant 0 : i32
    %c0_i32_0 = arith.constant 0 : i32
    %c0_i32_1 = arith.constant 0 : i32
    return %c0_i32, %c0_i32_0 : i32, i32
  }
  func.func @transform_3(%arg0: i32) -> (i32, i32) {
    %c0_i32 = arith.constant 0 : i32
    %c0_i32_0 = arith.constant 0 : i32
    %c0_i32_1 = arith.constant 0 : i32
    return %c0_i32, %c0_i32_0 : i32, i32
  }
  func.func @transform_4(%arg0: i32) -> (i32, i32) {
    %c0_i32 = arith.constant 0 : i32
    %c0_i32_0 = arith.constant 0 : i32
    %c0_i32_1 = arith.constant 0 : i32
    return %c0_i32, %c0_i32_0 : i32, i32
  }
  func.func @transform_5(%arg0: i32) -> (i32, i32) {
    %c0_i32 = arith.constant 0 : i32
    %c0_i32_0 = arith.constant 0 : i32
    %c0_i32_1 = arith.constant 0 : i32
    return %c0_i32, %c0_i32_0 : i32, i32
  }
  func.func @transform_6(%arg0: i32) -> (i32, i32) {
    %c0_i32 = arith.constant 0 : i32
    %c0_i32_0 = arith.constant 0 : i32
    %c0_i32_1 = arith.constant 0 : i32
    return %c0_i32, %c0_i32_0 : i32, i32
  }
  func.func @transform_7(%arg0: i32) -> (i32, i32) {
    %c0_i32 = arith.constant 0 : i32
    %c0_i32_0 = arith.constant 0 : i32
    %c0_i32_1 = arith.constant 0 : i32
    return %c0_i32, %c0_i32_0 : i32, i32
  }
  func.func @transform_8(%arg0: i32) -> (i32, i32) {
    %c0_i32 = arith.constant 0 : i32
    %c0_i32_0 = arith.constant 0 : i32
    %c0_i32_1 = arith.constant 0 : i32
    return %c0_i32, %c0_i32_0 : i32, i32
  }
  func.func @transform_9(%arg0: i32) -> (i32, i32) {
    %c0_i32 = arith.constant 0 : i32
    %c0_i32_0 = arith.constant 0 : i32
    %c0_i32_1 = arith.constant 0 : i32
    return %c0_i32, %c0_i32_0 : i32, i32
  }
  func.func @transform_10(%arg0: i32) -> (i32, i32) {
    %c0_i32 = arith.constant 0 : i32
    %c0_i32_0 = arith.constant 0 : i32
    return %c0_i32, %arg0 : i32, i32
  }
}

</mosaic_0001>

<llo_original>
// kernel: tpu_custom_call.1
$region0: #{tpu_custom_call.1}
  #allocation0 [shape = 'u32[]', space=smem, size = 0x4, offset = 0x4, fixed_abs, tag = 'smem constant byte address 0x4 - core index']
  #allocation1 [shape = 'u32[144,128]{1,0:T(1,128)}', space=vmem, size = 0x12000, scoped, tag = 'internal scratch']
  #allocation2 [shape = 'f32[1,1]{1,0:T(1,128)S(1)}', space=vmem, size = 0x200, scoped, tag = 'scoped memory for tpu_custom_call.1']
  %s0 = inlined_call_operand.vmem [shape: s32[512,4], index: 0, kind: input, shape index: {}]
  %s1 = inlined_call_operand.vmem [shape: f32[512,4], index: 1, kind: input, shape index: {}]
  %s2 = inlined_call_operand.vmem [shape: f32[40,16], index: 2, kind: input, shape index: {}]
  %s3 = inlined_call_operand.vmem [shape: f32[16,64], index: 3, kind: input, shape index: {}]
  %s4 = inlined_call_operand.vmem [shape: f32[32,32], index: 4, kind: input, shape index: {}]
  %s5 = inlined_call_operand.vmem [shape: f32[1,32], index: 5, kind: input, shape index: {}]
  %s6 = inlined_call_operand.vmem [shape: f32[32,32], index: 6, kind: input, shape index: {}]
  %s7 = inlined_call_operand.vmem [shape: f32[1,32], index: 7, kind: input, shape index: {}]
  %s8 = inlined_call_operand.vmem [shape: f32[1,32], index: 8, kind: input, shape index: {}]
  %s9 = inlined_call_operand.<no memory space> [shape: f32[1,1], index: 9, kind: input, shape index: {}]
  %s10 = inlined_call_operand.hbm [shape: f32[1,512], index: 10, kind: output, shape index: {}]
  %s11 = sld [smem:[#allocation0]]
  $region73: #{tpu_custom_call.1} parent=0
    _
  %s13 = ssub.s32 1, %s11
  %s14 = scalar_select 0, %s13, %s11
  %v15 = vstv %s9
  %16 = vst [vmem:[#allocation2] sm:$0x1] %v15
  $region1: #{tpu_custom_call.1} parent=0
    #allocation3 [shape = 'u8[2048]{0}', space=vmem, size = 0x800, scoped, tag = 'output window, operand 0']
    #allocation4 [shape = 's32[2]{0}', space=sflag, size = 0x8, scoped, tag = 'scoped memory for tpu_custom_call.1']
    %17 = vsyncpa [#allocation4], 0
    %s18 = scalar_lea.sflag [#allocation4], 1
    %19 = vsyncpa %s18, 0
    loop: start=0, step=1, limit=4
    $region2: #{tpu_custom_call.1} parent=1 // loop_pre_header
      _
    $region3: #{tpu_custom_call.1} parent=1 // loop_header
      %s21 = sphi 0, %s25
      %p22 = scmp.ge.s32.totalorder %s21, 4
      %s31 = sphi 0, %s33
      %s34 = sphi 0, %s31
      %s35 = sphi 0, %s34
      %s51 = sphi 0, %s35
      %s57 = sphi 0, %s59
      %s60 = sphi 0, %s57
      %s61 = sphi 0, %s60
      %s77 = sphi 0, %s61
      %s81 = sphi 0, %s81
      %s83 = sphi 0, %s81
      %s84 = sphi 0, %s83
      %s98 = sphi 0, %s84
      %s102 = sphi 0, %s102
      %s104 = sphi 0, %s102
      %s105 = sphi 0, %s104
      %s119 = sphi 0, %s105
      %s123 = sphi 0, %s123
      %s125 = sphi 0, %s123
      %s126 = sphi 0, %s125
      %s140 = sphi 0, %s126
      %s144 = sphi 0, %s144
      %s146 = sphi 0, %s144
      %s147 = sphi 0, %s146
      %s161 = sphi 0, %s147
      %s165 = sphi 0, %s165
      %s167 = sphi 0, %s165
      %s168 = sphi 0, %s167
      %s182 = sphi 0, %s168
      %s186 = sphi 0, %s186
      %s188 = sphi 0, %s186
      %s189 = sphi 0, %s188
      %s203 = sphi 0, %s189
      %s207 = sphi 0, %s207
      %s209 = sphi 0, %s207
      %s210 = sphi 0, %s209
      %s224 = sphi 0, %s210
      %s228 = sphi 0, %s228
      %s230 = sphi 0, %s228
      %s231 = sphi 0, %s230
      %s245 = sphi 0, %s231
      %s251 = sphi 0, %s253
      %s254 = sphi 0, %s251
      %s255 = sphi 0, %s254
      %s271 = sphi 0, %s255
    $region4: #{tpu_custom_call.1} parent=1 // loop_header_branch
      %24 = sbr.rel (%p22) target = $region8
    $region5: #{tpu_custom_call.1} parent=1 // loop_body
      %s26 = ssub.s32 %s21, 1
      %s27 = ssub.s32 %s21, 2
      %s28 = sadd.s32 %s21, 1
      %s29 = ssub.s32 %s21, %s28
      %p30 = scmp.eq.s32.totalorder %s29, 0
      %s32 = sadd.s32 %s31, 1
      %s33 = scalar_select %p30, %s31, %s32
      %p36 = pneg %p30
      %p37 = scmp.eq.s32.totalorder %s21, 1
      %p38 = por %p36, %p37
      %p39 = scmp.ne.s32.totalorder %s31, %s34
      %p40 = scmp.eq.s32.totalorder %s21, 0
      %p41 = por %p39, %p40
      %p42 = scmp.ne.s32.totalorder %s31, %s34
      %p43 = scmp.eq.s32.totalorder %s26, 1
      %p44 = por %p42, %p43
      %p45 = scmp.ne.s32.totalorder %s34, %s35
      %p46 = scmp.eq.s32.totalorder %s26, 0
      %p47 = por %p45, %p46
      %p48 = scmp.ne.s32.totalorder %s34, %s35
      %p49 = scmp.eq.s32.totalorder %s27, 1
      %p50 = por %p48, %p49
      %p52 = scmp.ne.s32.totalorder %s35, %s51
      %p53 = scmp.eq.s32.totalorder %s27, 0
      %p54 = por %p52, %p53
      %s55 = ssub.s32 %s21, %s28
      %p56 = scmp.eq.s32.totalorder %s55, 0
      %s58 = sadd.s32 %s57, 1
      %s59 = scalar_select %p56, %s57, %s58
      %p62 = pneg %p56
      %p63 = scmp.eq.s32.totalorder %s21, 1
      %p64 = por %p62, %p63
      %p65 = scmp.ne.s32.totalorder %s57, %s60
      %p66 = scmp.eq.s32.totalorder %s21, 0
      %p67 = por %p65, %p66
      %p68 = scmp.ne.s32.totalorder %s57, %s60
      %p69 = scmp.eq.s32.totalorder %s26, 1
      %p70 = por %p68, %p69
      %p71 = scmp.ne.s32.totalorder %s60, %s61
      %p72 = scmp.eq.s32.totalorder %s26, 0
      %p73 = por %p71, %p72
      %p74 = scmp.ne.s32.totalorder %s60, %s61
      %p75 = scmp.eq.s32.totalorder %s27, 1
      %p76 = por %p74, %p75
      %p78 = scmp.ne.s32.totalorder %s61, %s77
      %p79 = scmp.eq.s32.totalorder %s27, 0
      %p80 = por %p78, %p79
      %s82 = sadd.s32 %s81, 1
      %p85 = scmp.eq.s32.totalorder %s21, 1
      %p86 = scmp.ne.s32.totalorder %s81, %s83
      %p87 = scmp.eq.s32.totalorder %s21, 0
      %p88 = por %p86, %p87
      %p89 = scmp.ne.s32.totalorder %s81, %s83
      %p90 = scmp.eq.s32.totalorder %s26, 1
      %p91 = por %p89, %p90
      %p92 = scmp.ne.s32.totalorder %s83, %s84
      %p93 = scmp.eq.s32.totalorder %s26, 0
      %p94 = por %p92, %p93
      %p95 = scmp.ne.s32.totalorder %s83, %s84
      %p96 = scmp.eq.s32.totalorder %s27, 1
      %p97 = por %p95, %p96
      %p99 = scmp.ne.s32.totalorder %s84, %s98
      %p100 = scmp.eq.s32.totalorder %s27, 0
      %p101 = por %p99, %p100
      %s103 = sadd.s32 %s102, 1
      %p106 = scmp.eq.s32.totalorder %s21, 1
      %p107 = scmp.ne.s32.totalorder %s102, %s104
      %p108 = scmp.eq.s32.totalorder %s21, 0
      %p109 = por %p107, %p108
      %p110 = scmp.ne.s32.totalorder %s102, %s104
      %p111 = scmp.eq.s32.totalorder %s26, 1
      %p112 = por %p110, %p111
      %p113 = scmp.ne.s32.totalorder %s104, %s105
      %p114 = scmp.eq.s32.totalorder %s26, 0
      %p115 = por %p113, %p114
      %p116 = scmp.ne.s32.totalorder %s104, %s105
      %p117 = scmp.eq.s32.totalorder %s27, 1
      %p118 = por %p116, %p117
      %p120 = scmp.ne.s32.totalorder %s105, %s119
      %p121 = scmp.eq.s32.totalorder %s27, 0
      %p122 = por %p120, %p121
      %s124 = sadd.s32 %s123, 1
      %p127 = scmp.eq.s32.totalorder %s21, 1
      %p128 = scmp.ne.s32.totalorder %s123, %s125
      %p129 = scmp.eq.s32.totalorder %s21, 0
      %p130 = por %p128, %p129
      %p131 = scmp.ne.s32.totalorder %s123, %s125
      %p132 = scmp.eq.s32.totalorder %s26, 1
      %p133 = por %p131, %p132
      %p134 = scmp.ne.s32.totalorder %s125, %s126
      %p135 = scmp.eq.s32.totalorder %s26, 0
      %p136 = por %p134, %p135
      %p137 = scmp.ne.s32.totalorder %s125, %s126
      %p138 = scmp.eq.s32.totalorder %s27, 1
      %p139 = por %p137, %p138
      %p141 = scmp.ne.s32.totalorder %s126, %s140
      %p142 = scmp.eq.s32.totalorder %s27, 0
      %p143 = por %p141, %p142
      %s145 = sadd.s32 %s144, 1
      %p148 = scmp.eq.s32.totalorder %s21, 1
      %p149 = scmp.ne.s32.totalorder %s144, %s146
      %p150 = scmp.eq.s32.totalorder %s21, 0
      %p151 = por %p149, %p150
      %p152 = scmp.ne.s32.totalorder %s144, %s146
      %p153 = scmp.eq.s32.totalorder %s26, 1
      %p154 = por %p152, %p153
      %p155 = scmp.ne.s32.totalorder %s146, %s147
      %p156 = scmp.eq.s32.totalorder %s26, 0
      %p157 = por %p155, %p156
      %p158 = scmp.ne.s32.totalorder %s146, %s147
      %p159 = scmp.eq.s32.totalorder %s27, 1
      %p160 = por %p158, %p159
      %p162 = scmp.ne.s32.totalorder %s147, %s161
      %p163 = scmp.eq.s32.totalorder %s27, 0
      %p164 = por %p162, %p163
      %s166 = sadd.s32 %s165, 1
      %p169 = scmp.eq.s32.totalorder %s21, 1
      %p170 = scmp.ne.s32.totalorder %s165, %s167
      %p171 = scmp.eq.s32.totalorder %s21, 0
      %p172 = por %p170, %p171
      %p173 = scmp.ne.s32.totalorder %s165, %s167
      %p174 = scmp.eq.s32.totalorder %s26, 1
      %p175 = por %p173, %p174
      %p176 = scmp.ne.s32.totalorder %s167, %s168
      %p177 = scmp.eq.s32.totalorder %s26, 0
      %p178 = por %p176, %p177
      %p179 = scmp.ne.s32.totalorder %s167, %s168
      %p180 = scmp.eq.s32.totalorder %s27, 1
      %p181 = por %p179, %p180
      %p183 = scmp.ne.s32.totalorder %s168, %s182
      %p184 = scmp.eq.s32.totalorder %s27, 0
      %p185 = por %p183, %p184
      %s187 = sadd.s32 %s186, 1
      %p190 = scmp.eq.s32.totalorder %s21, 1
      %p191 = scmp.ne.s32.totalorder %s186, %s188
      %p192 = scmp.eq.s32.totalorder %s21, 0
      %p193 = por %p191, %p192
      %p194 = scmp.ne.s32.totalorder %s186, %s188
      %p195 = scmp.eq.s32.totalorder %s26, 1
      %p196 = por %p194, %p195
      %p197 = scmp.ne.s32.totalorder %s188, %s189
      %p198 = scmp.eq.s32.totalorder %s26, 0
      %p199 = por %p197, %p198
      %p200 = scmp.ne.s32.totalorder %s188, %s189
      %p201 = scmp.eq.s32.totalorder %s27, 1
      %p202 = por %p200, %p201
      %p204 = scmp.ne.s32.totalorder %s189, %s203
      %p205 = scmp.eq.s32.totalorder %s27, 0
      %p206 = por %p204, %p205
      %s208 = sadd.s32 %s207, 1
      %p211 = scmp.eq.s32.totalorder %s21, 1
      %p212 = scmp.ne.s32.totalorder %s207, %s209
      %p213 = scmp.eq.s32.totalorder %s21, 0
      %p214 = por %p212, %p213
      %p215 = scmp.ne.s32.totalorder %s207, %s209
      %p216 = scmp.eq.s32.totalorder %s26, 1
      %p217 = por %p215, %p216
      %p218 = scmp.ne.s32.totalorder %s209, %s210
      %p219 = scmp.eq.s32.totalorder %s26, 0
      %p220 = por %p218, %p219
      %p221 = scmp.ne.s32.totalorder %s209, %s210
      %p222 = scmp.eq.s32.totalorder %s27, 1
      %p223 = por %p221, %p222
      %p225 = scmp.ne.s32.totalorder %s210, %s224
      %p226 = scmp.eq.s32.totalorder %s27, 0
      %p227 = por %p225, %p226
      %s229 = sadd.s32 %s228, 1
      %p232 = scmp.eq.s32.totalorder %s21, 1
      %p233 = scmp.ne.s32.totalorder %s228, %s230
      %p234 = scmp.eq.s32.totalorder %s21, 0
      %p235 = por %p233, %p234
      %p236 = scmp.ne.s32.totalorder %s228, %s230
      %p237 = scmp.eq.s32.totalorder %s26, 1
      %p238 = por %p236, %p237
      %p239 = scmp.ne.s32.totalorder %s230, %s231
      %p240 = scmp.eq.s32.totalorder %s26, 0
      %p241 = por %p239, %p240
      %p242 = scmp.ne.s32.totalorder %s230, %s231
      %p243 = scmp.eq.s32.totalorder %s27, 1
      %p244 = por %p242, %p243
      %p246 = scmp.ne.s32.totalorder %s231, %s245
      %p247 = scmp.eq.s32.totalorder %s27, 0
      %p248 = por %p246, %p247
      %s249 = ssub.s32 %s21, %s28
      %p250 = scmp.eq.s32.totalorder %s249, 0
      %s252 = sadd.s32 %s251, 1
      %s253 = scalar_select %p250, %s251, %s252
      %p256 = pneg %p250
      %p257 = scmp.eq.s32.totalorder %s21, 1
      %p258 = por %p256, %p257
      %p259 = scmp.ne.s32.totalorder %s251, %s254
      %p260 = scmp.eq.s32.totalorder %s21, 0
      %p261 = por %p259, %p260
      %p262 = scmp.ne.s32.totalorder %s251, %s254
      %p263 = scmp.eq.s32.totalorder %s26, 1
      %p264 = por %p262, %p263
      %p265 = scmp.ne.s32.totalorder %s254, %s255
      %p266 = scmp.eq.s32.totalorder %s26, 0
      %p267 = por %p265, %p266
      %p268 = scmp.ne.s32.totalorder %s254, %s255
      %p269 = scmp.eq.s32.totalorder %s27, 1
      %p270 = por %p268, %p269
      %p272 = scmp.ne.s32.totalorder %s255, %s271
      %p273 = scmp.eq.s32.totalorder %s27, 0
      %p274 = por %p272, %p273
      %p275 = scmp.le.s32.totalorder 1, %s21
      %p276 = scmp.lt.s32.totalorder %s21, 3
      %p277 = pnand %p275, %p276
      %p278 = pneg %p277
      // Predicated region
      $region9: #{tpu_custom_call.1} parent=5 // pred_check
        _
      $region10: #{tpu_custom_call.1} parent=5 // pred_check_branch
        %280 = sbr.rel (%p277) target = $region12
      $region11: #{tpu_custom_call.1} parent=5 // pred_region
        %s281 = ssub.s32 %s21, 1
        // Predicated region
        $region13: #{tpu_custom_call.1} parent=11 // pred_check
          %p282 = pneg %p94
        $region14: #{tpu_custom_call.1} parent=11 // pred_check_branch
          %284 = sbr.rel (%p282) target = $region16
        $region15: #{tpu_custom_call.1} parent=11 // pred_region
          _
        $region16: #{tpu_custom_call.1} parent=11 // pred_fallthru
          _
        // Predicated region
        $region17: #{tpu_custom_call.1} parent=11 // pred_check
          %p285 = pneg %p115
        $region18: #{tpu_custom_call.1} parent=11 // pred_check_branch
          %287 = sbr.rel (%p285) target = $region20
        $region19: #{tpu_custom_call.1} parent=11 // pred_region
          _
        $region20: #{tpu_custom_call.1} parent=11 // pred_fallthru
          _
        // Predicated region
        $region21: #{tpu_custom_call.1} parent=11 // pred_check
          %p288 = pneg %p136
        $region22: #{tpu_custom_call.1} parent=11 // pred_check_branch
          %290 = sbr.rel (%p288) target = $region24
        $region23: #{tpu_custom_call.1} parent=11 // pred_region
          _
        $region24: #{tpu_custom_call.1} parent=11 // pred_fallthru
          _
        // Predicated region
        $region25: #{tpu_custom_call.1} parent=11 // pred_check
          %p291 = pneg %p157
        $region26: #{tpu_custom_call.1} parent=11 // pred_check_branch
          %293 = sbr.rel (%p291) target = $region28
        $region27: #{tpu_custom_call.1} parent=11 // pred_region
          _
        $region28: #{tpu_custom_call.1} parent=11 // pred_fallthru
          _
        // Predicated region
        $region29: #{tpu_custom_call.1} parent=11 // pred_check
          %p294 = pneg %p178
        $region30: #{tpu_custom_call.1} parent=11 // pred_check_branch
          %296 = sbr.rel (%p294) target = $region32
        $region31: #{tpu_custom_call.1} parent=11 // pred_region
          _
        $region32: #{tpu_custom_call.1} parent=11 // pred_fallthru
          _
        // Predicated region
        $region33: #{tpu_custom_call.1} parent=11 // pred_check
          %p297 = pneg %p199
        $region34: #{tpu_custom_call.1} parent=11 // pred_check_branch
          %299 = sbr.rel (%p297) target = $region36
        $region35: #{tpu_custom_call.1} parent=11 // pred_region
          _
        $region36: #{tpu_custom_call.1} parent=11 // pred_fallthru
          _
        // Predicated region
        $region37: #{tpu_custom_call.1} parent=11 // pred_check
          %p300 = pneg %p220
        $region38: #{tpu_custom_call.1} parent=11 // pred_check_branch
          %302 = sbr.rel (%p300) target = $region40
        $region39: #{tpu_custom_call.1} parent=11 // pred_region
          _
        $region40: #{tpu_custom_call.1} parent=11 // pred_fallthru
          _
        // Predicated region
        $region41: #{tpu_custom_call.1} parent=11 // pred_check
          %p303 = pneg %p241
        $region42: #{tpu_custom_call.1} parent=11 // pred_check_branch
          %305 = sbr.rel (%p303) target = $region44
        $region43: #{tpu_custom_call.1} parent=11 // pred_region
          _
        $region44: #{tpu_custom_call.1} parent=11 // pred_fallthru
          _
      $region12: #{tpu_custom_call.1} parent=5 // pred_fallthru
        _
      %p306 = scmp.lt.s32.totalorder %s21, 2
      // Predicated region
      $region45: #{tpu_custom_call.1} parent=5 // pred_check
        %p307 = pneg %p306
      $region46: #{tpu_custom_call.1} parent=5 // pred_check_branch
        %309 = sbr.rel (%p307) target = $region48
      $region47: #{tpu_custom_call.1} parent=5 // pred_region
        // Predicated region
        $region49: #{tpu_custom_call.1} parent=47 // pred_check
          %p310 = pneg %p41
        $region50: #{tpu_custom_call.1} parent=47 // pred_check_branch
          %312 = sbr.rel (%p310) target = $region52
        $region51: #{tpu_custom_call.1} parent=47 // pred_region
          %s313 = smul.u32 32, %s21
          %p314 = scmp.lt.s32.totalorder %s313, 63
          %s315 = scalar_select %p314, %s313, 63
          %s316 = smul.addr %s315, 8
          %s317 = scalar_lea.vmem %s0, %s316
          %s318 = smul.u32 32, %s21
        $region52: #{tpu_custom_call.1} parent=47 // pred_fallthru
          _
        // Predicated region
        $region53: #{tpu_custom_call.1} parent=47 // pred_check
          %p319 = pneg %p67
        $region54: #{tpu_custom_call.1} parent=47 // pred_check_branch
          %321 = sbr.rel (%p319) target = $region56
        $region55: #{tpu_custom_call.1} parent=47 // pred_region
          %s322 = smul.u32 32, %s21
          %p323 = scmp.lt.s32.totalorder %s322, 63
          %s324 = scalar_select %p323, %s322, 63
          %s325 = smul.addr %s324, 8
          %s326 = scalar_lea.vmem %s1, %s325
          %s327 = smul.u32 32, %s21
        $region56: #{tpu_custom_call.1} parent=47 // pred_fallthru
          _
      $region48: #{tpu_custom_call.1} parent=5 // pred_fallthru
        _
      %p328 = scmp.le.s32.totalorder 1, %s21
      %p329 = scmp.lt.s32.totalorder %s21, 3
      %p330 = pnand %p328, %p329
      %p331 = pneg %p330
      // Predicated region
      $region57: #{tpu_custom_call.1} parent=5 // pred_check
        _
      $region58: #{tpu_custom_call.1} parent=5 // pred_check_branch
        %333 = sbr.rel (%p330) target = $region60
      $region59: #{tpu_custom_call.1} parent=5 // pred_region
        %s334 = ssub.s32 %s21, 1
        %s335 = smul.u32 32, %s26
        %p336 = scmp.lt.s32.totalorder %s335, 63
        %s337 = scalar_select %p336, %s335, 63
        %s338 = smul.addr %s337, 8
        %s339 = scalar_lea.vmem %s0, %s338
        %p340 = pneg %p47
        %p341 = pneg %p44
        %s342 = smul.u32 32, %s26
        %p343 = scmp.lt.s32.totalorder %s342, 63
        %s344 = scalar_select %p343, %s342, 63
        %s345 = smul.addr %s344, 8
        %s346 = scalar_lea.vmem %s1, %s345
        %p347 = pneg %p73
        %p348 = pneg %p70
        %p349 = pneg %p94
        %p350 = pneg %p91
        %p351 = pneg %p115
        %p352 = pneg %p112
        %p353 = pneg %p136
        %p354 = pneg %p133
        %p355 = pneg %p157
        %p356 = pneg %p154
        %p357 = pneg %p178
        %p358 = pneg %p175
        %p359 = pneg %p199
        %p360 = pneg %p196
        %p361 = pneg %p220
        %p362 = pneg %p217
        %p363 = pneg %p241
        %p364 = pneg %p238
        %p365 = pneg %p267
        %p366 = pneg %p264
        %s367 = sand.u32 %s254, 1
        %s368 = scalar_lea.sflag [#allocation4], %s367
        %s369 = sand.u32 %s254, 1
        %s370 = smul.addr %s369, 2
        %s371 = scalar_lea.vmem [#allocation3], %s370
        %s372 = smul.u32 32, %s26
        %p373 = scmp.lt.s32.totalorder %s372, 63
        %s374 = scalar_select %p373, %s372, 63
        %s375 = smul.addr %s374, 8
        %s376 = scalar_lea.vmem %s0, %s375
        %s377 = smul.u32 32, %s26
        %s378 = smul.u32 32, %s26
        %p379 = scmp.lt.s32.totalorder %s378, 63
        %s380 = scalar_select %p379, %s378, 63
        %s381 = smul.addr %s380, 8
        %s382 = scalar_lea.vmem %s1, %s381
        %s383 = smul.u32 32, %s26
        %s384 = smul.u32 2, %s26
        %v385 = vld [vmem:[%s376] sm:$0xff]
        %v386 = vld [vmem:[%s376 + $0x8] sm:$0xff]
        %v387 = vld [vmem:[%s376 + $0x10] sm:$0xff]
        %v388 = vld [vmem:[%s376 + $0x18] sm:$0xff]
        %v389 = vld [vmem:[%s376 + $0x20] sm:$0xff]
        %v390 = vld [vmem:[%s376 + $0x28] sm:$0xff]
        %v391 = vld [vmem:[%s376 + $0x30] sm:$0xff]
        %v392 = vld [vmem:[%s376 + $0x38] sm:$0xff]
        %v393 = vld [vmem:[%s376 + $0x40] sm:$0xff]
        %v394 = vld [vmem:[%s376 + $0x48] sm:$0xff]
        %v395 = vld [vmem:[%s376 + $0x50] sm:$0xff]
        %v396 = vld [vmem:[%s376 + $0x58] sm:$0xff]
        %v397 = vld [vmem:[%s376 + $0x60] sm:$0xff]
        %v398 = vld [vmem:[%s376 + $0x68] sm:$0xff]
        %v399 = vld [vmem:[%s376 + $0x70] sm:$0xff]
        %v400 = vld [vmem:[%s376 + $0x78] sm:$0xff]
        %v401 = vld [vmem:[%s376 + $0x80] sm:$0xff]
        %v402 = vld [vmem:[%s376 + $0x88] sm:$0xff]
        %v403 = vld [vmem:[%s376 + $0x90] sm:$0xff]
        %v404 = vld [vmem:[%s376 + $0x98] sm:$0xff]
        %v405 = vld [vmem:[%s376 + $0xa0] sm:$0xff]
        %v406 = vld [vmem:[%s376 + $0xa8] sm:$0xff]
        %v407 = vld [vmem:[%s376 + $0xb0] sm:$0xff]
        %v408 = vld [vmem:[%s376 + $0xb8] sm:$0xff]
        %v409 = vld [vmem:[%s376 + $0xc0] sm:$0xff]
        %v410 = vld [vmem:[%s376 + $0xc8] sm:$0xff]
        %v411 = vld [vmem:[%s376 + $0xd0] sm:$0xff]
        %v412 = vld [vmem:[%s376 + $0xd8] sm:$0xff]
        %v413 = vld [vmem:[%s376 + $0xe0] sm:$0xff]
        %v414 = vld [vmem:[%s376 + $0xe8] sm:$0xff]
        %v415 = vld [vmem:[%s376 + $0xf0] sm:$0xff]
        %v416 = vld [vmem:[%s376 + $0xf8] sm:$0xff]
        %v417 = vld [vmem:[%s382] sm:$0xff]
        %v418 = vld [vmem:[%s382 + $0x8] sm:$0xff]
        %v419 = vld [vmem:[%s382 + $0x10] sm:$0xff]
        %v420 = vld [vmem:[%s382 + $0x18] sm:$0xff]
        %v421 = vld [vmem:[%s382 + $0x20] sm:$0xff]
        %v422 = vld [vmem:[%s382 + $0x28] sm:$0xff]
        %v423 = vld [vmem:[%s382 + $0x30] sm:$0xff]
        %v424 = vld [vmem:[%s382 + $0x38] sm:$0xff]
        %v425 = vld [vmem:[%s382 + $0x40] sm:$0xff]
        %v426 = vld [vmem:[%s382 + $0x48] sm:$0xff]
        %v427 = vld [vmem:[%s382 + $0x50] sm:$0xff]
        %v428 = vld [vmem:[%s382 + $0x58] sm:$0xff]
        %v429 = vld [vmem:[%s382 + $0x60] sm:$0xff]
        %v430 = vld [vmem:[%s382 + $0x68] sm:$0xff]
        %v431 = vld [vmem:[%s382 + $0x70] sm:$0xff]
        %v432 = vld [vmem:[%s382 + $0x78] sm:$0xff]
        %v433 = vld [vmem:[%s382 + $0x80] sm:$0xff]
        %v434 = vld [vmem:[%s382 + $0x88] sm:$0xff]
        %v435 = vld [vmem:[%s382 + $0x90] sm:$0xff]
        %v436 = vld [vmem:[%s382 + $0x98] sm:$0xff]
        %v437 = vld [vmem:[%s382 + $0xa0] sm:$0xff]
        %v438 = vld [vmem:[%s382 + $0xa8] sm:$0xff]
        %v439 = vld [vmem:[%s382 + $0xb0] sm:$0xff]
        %v440 = vld [vmem:[%s382 + $0xb8] sm:$0xff]
        %v441 = vld [vmem:[%s382 + $0xc0] sm:$0xff]
        %v442 = vld [vmem:[%s382 + $0xc8] sm:$0xff]
        %v443 = vld [vmem:[%s382 + $0xd0] sm:$0xff]
        %v444 = vld [vmem:[%s382 + $0xd8] sm:$0xff]
        %v445 = vld [vmem:[%s382 + $0xe0] sm:$0xff]
        %v446 = vld [vmem:[%s382 + $0xe8] sm:$0xff]
        %v447 = vld [vmem:[%s382 + $0xf0] sm:$0xff]
        %v448 = vld [vmem:[%s382 + $0xf8] sm:$0xff]
        %v449 = vlaneseq
        %v450 = vand.u32 %v449, 127
        %451 = vset.pattern.permute.xlu0 0
        %452 = vperm.xlu0 %451, %v385
        %v453 = vpop.permute.xlu0 %452
        %454 = vset.pattern.permute.xlu0 0
        %455 = vperm.xlu0 %454, %v386
        %v456 = vpop.permute.xlu0 %455
        %457 = vset.pattern.permute.xlu0 0
        %458 = vperm.xlu0 %457, %v387
        %v459 = vpop.permute.xlu0 %458
        %460 = vset.pattern.permute.xlu0 0
        %461 = vperm.xlu0 %460, %v388
        %v462 = vpop.permute.xlu0 %461
        %463 = vset.pattern.permute.xlu0 0
        %464 = vperm.xlu0 %463, %v389
        %v465 = vpop.permute.xlu0 %464
        %466 = vset.pattern.permute.xlu0 0
        %467 = vperm.xlu0 %466, %v390
        %v468 = vpop.permute.xlu0 %467
        %469 = vset.pattern.permute.xlu0 0
        %470 = vperm.xlu0 %469, %v391
        %v471 = vpop.permute.xlu0 %470
        %472 = vset.pattern.permute.xlu0 0
        %473 = vperm.xlu0 %472, %v392
        %v474 = vpop.permute.xlu0 %473
        %475 = vset.pattern.permute.xlu0 0
        %476 = vperm.xlu0 %475, %v393
        %v477 = vpop.permute.xlu0 %476
        %478 = vset.pattern.permute.xlu0 0
        %479 = vperm.xlu0 %478, %v394
        %v480 = vpop.permute.xlu0 %479
        %481 = vset.pattern.permute.xlu0 0
        %482 = vperm.xlu0 %481, %v395
        %v483 = vpop.permute.xlu0 %482
        %484 = vset.pattern.permute.xlu0 0
        %485 = vperm.xlu0 %484, %v396
        %v486 = vpop.permute.xlu0 %485
        %487 = vset.pattern.permute.xlu0 0
        %488 = vperm.xlu0 %487, %v397
        %v489 = vpop.permute.xlu0 %488
        %490 = vset.pattern.permute.xlu0 0
        %491 = vperm.xlu0 %490, %v398
        %v492 = vpop.permute.xlu0 %491
        %493 = vset.pattern.permute.xlu0 0
        %494 = vperm.xlu0 %493, %v399
        %v495 = vpop.permute.xlu0 %494
        %496 = vset.pattern.permute.xlu0 0
        %497 = vperm.xlu0 %496, %v400
        %v498 = vpop.permute.xlu0 %497
        %499 = vset.pattern.permute.xlu0 0
        %500 = vperm.xlu0 %499, %v401
        %v501 = vpop.permute.xlu0 %500
        %502 = vset.pattern.permute.xlu0 0
        %503 = vperm.xlu0 %502, %v402
        %v504 = vpop.permute.xlu0 %503
        %505 = vset.pattern.permute.xlu0 0
        %506 = vperm.xlu0 %505, %v403
        %v507 = vpop.permute.xlu0 %506
        %508 = vset.pattern.permute.xlu0 0
        %509 = vperm.xlu0 %508, %v404
        %v510 = vpop.permute.xlu0 %509
        %511 = vset.pattern.permute.xlu0 0
        %512 = vperm.xlu0 %511, %v405
        %v513 = vpop.permute.xlu0 %512
        %514 = vset.pattern.permute.xlu0 0
        %515 = vperm.xlu0 %514, %v406
        %v516 = vpop.permute.xlu0 %515
        %517 = vset.pattern.permute.xlu0 0
        %518 = vperm.xlu0 %517, %v407
        %v519 = vpop.permute.xlu0 %518
        %520 = vset.pattern.permute.xlu0 0
        %521 = vperm.xlu0 %520, %v408
        %v522 = vpop.permute.xlu0 %521
        %523 = vset.pattern.permute.xlu0 0
        %524 = vperm.xlu0 %523, %v409
        %v525 = vpop.permute.xlu0 %524
        %526 = vset.pattern.permute.xlu0 0
        %527 = vperm.xlu0 %526, %v410
        %v528 = vpop.permute.xlu0 %527
        %529 = vset.pattern.permute.xlu0 0
        %530 = vperm.xlu0 %529, %v411
        %v531 = vpop.permute.xlu0 %530
        %532 = vset.pattern.permute.xlu0 0
        %533 = vperm.xlu0 %532, %v412
        %v534 = vpop.permute.xlu0 %533
        %535 = vset.pattern.permute.xlu0 0
        %536 = vperm.xlu0 %535, %v413
        %v537 = vpop.permute.xlu0 %536
        %538 = vset.pattern.permute.xlu0 0
        %539 = vperm.xlu0 %538, %v414
        %v540 = vpop.permute.xlu0 %539
        %541 = vset.pattern.permute.xlu0 0
        %542 = vperm.xlu0 %541, %v415
        %v543 = vpop.permute.xlu0 %542
        %544 = vset.pattern.permute.xlu0 0
        %545 = vperm.xlu0 %544, %v416
        %v546 = vpop.permute.xlu0 %545
        %vm547 = vcmp.eq.s32.totalorder %v450, %v453
        %vm548 = vcmp.eq.s32.totalorder %v450, %v456
        %vm549 = vcmp.eq.s32.totalorder %v450, %v459
        %vm550 = vcmp.eq.s32.totalorder %v450, %v462
        %vm551 = vcmp.eq.s32.totalorder %v450, %v465
        %vm552 = vcmp.eq.s32.totalorder %v450, %v468
        %vm553 = vcmp.eq.s32.totalorder %v450, %v471
        %vm554 = vcmp.eq.s32.totalorder %v450, %v474
        %vm555 = vcmp.eq.s32.totalorder %v450, %v477
        %vm556 = vcmp.eq.s32.totalorder %v450, %v480
        %vm557 = vcmp.eq.s32.totalorder %v450, %v483
        %vm558 = vcmp.eq.s32.totalorder %v450, %v486
        %vm559 = vcmp.eq.s32.totalorder %v450, %v489
        %vm560 = vcmp.eq.s32.totalorder %v450, %v492
        %vm561 = vcmp.eq.s32.totalorder %v450, %v495
        %vm562 = vcmp.eq.s32.totalorder %v450, %v498
        %vm563 = vcmp.eq.s32.totalorder %v450, %v501
        %vm564 = vcmp.eq.s32.totalorder %v450, %v504
        %vm565 = vcmp.eq.s32.totalorder %v450, %v507
        %vm566 = vcmp.eq.s32.totalorder %v450, %v510
        %vm567 = vcmp.eq.s32.totalorder %v450, %v513
        %vm568 = vcmp.eq.s32.totalorder %v450, %v516
        %vm569 = vcmp.eq.s32.totalorder %v450, %v519
        %vm570 = vcmp.eq.s32.totalorder %v450, %v522
        %vm571 = vcmp.eq.s32.totalorder %v450, %v525
        %vm572 = vcmp.eq.s32.totalorder %v450, %v528
        %vm573 = vcmp.eq.s32.totalorder %v450, %v531
        %vm574 = vcmp.eq.s32.totalorder %v450, %v534
        %vm575 = vcmp.eq.s32.totalorder %v450, %v537
        %vm576 = vcmp.eq.s32.totalorder %v450, %v540
        %vm577 = vcmp.eq.s32.totalorder %v450, %v543
        %vm578 = vcmp.eq.s32.totalorder %v450, %v546
        %580 = vset.pattern.permute.xlu0 0
        %581 = vperm.xlu0 %580, %v417
        %v582 = vpop.permute.xlu0 %581
        %585 = vset.pattern.permute.xlu0 0
        %586 = vperm.xlu0 %585, %v418
        %v587 = vpop.permute.xlu0 %586
        %590 = vset.pattern.permute.xlu0 0
        %591 = vperm.xlu0 %590, %v419
        %v592 = vpop.permute.xlu0 %591
        %595 = vset.pattern.permute.xlu0 0
        %596 = vperm.xlu0 %595, %v420
        %v597 = vpop.permute.xlu0 %596
        %600 = vset.pattern.permute.xlu0 0
        %601 = vperm.xlu0 %600, %v421
        %v602 = vpop.permute.xlu0 %601
        %605 = vset.pattern.permute.xlu0 0
        %606 = vperm.xlu0 %605, %v422
        %v607 = vpop.permute.xlu0 %606
        %610 = vset.pattern.permute.xlu0 0
        %611 = vperm.xlu0 %610, %v423
        %v612 = vpop.permute.xlu0 %611
        %615 = vset.pattern.permute.xlu0 0
        %616 = vperm.xlu0 %615, %v424
        %v617 = vpop.permute.xlu0 %616
        %620 = vset.pattern.permute.xlu0 0
        %621 = vperm.xlu0 %620, %v425
        %v622 = vpop.permute.xlu0 %621
        %625 = vset.pattern.permute.xlu0 0
        %626 = vperm.xlu0 %625, %v426
        %v627 = vpop.permute.xlu0 %626
        %630 = vset.pattern.permute.xlu0 0
        %631 = vperm.xlu0 %630, %v427
        %v632 = vpop.permute.xlu0 %631
        %635 = vset.pattern.permute.xlu0 0
        %636 = vperm.xlu0 %635, %v428
        %v637 = vpop.permute.xlu0 %636
        %640 = vset.pattern.permute.xlu0 0
        %641 = vperm.xlu0 %640, %v429
        %v642 = vpop.permute.xlu0 %641
        %645 = vset.pattern.permute.xlu0 0
        %646 = vperm.xlu0 %645, %v430
        %v647 = vpop.permute.xlu0 %646
        %650 = vset.pattern.permute.xlu0 0
        %651 = vperm.xlu0 %650, %v431
        %v652 = vpop.permute.xlu0 %651
        %655 = vset.pattern.permute.xlu0 0
        %656 = vperm.xlu0 %655, %v432
        %v657 = vpop.permute.xlu0 %656
        %660 = vset.pattern.permute.xlu0 0
        %661 = vperm.xlu0 %660, %v433
        %v662 = vpop.permute.xlu0 %661
        %665 = vset.pattern.permute.xlu0 0
        %666 = vperm.xlu0 %665, %v434
        %v667 = vpop.permute.xlu0 %666
        %670 = vset.pattern.permute.xlu0 0
        %671 = vperm.xlu0 %670, %v435
        %v672 = vpop.permute.xlu0 %671
        %675 = vset.pattern.permute.xlu0 0
        %676 = vperm.xlu0 %675, %v436
        %v677 = vpop.permute.xlu0 %676
        %680 = vset.pattern.permute.xlu0 0
        %681 = vperm.xlu0 %680, %v437
        %v682 = vpop.permute.xlu0 %681
        %685 = vset.pattern.permute.xlu0 0
        %686 = vperm.xlu0 %685, %v438
        %v687 = vpop.permute.xlu0 %686
        %690 = vset.pattern.permute.xlu0 0
        %691 = vperm.xlu0 %690, %v439
        %v692 = vpop.permute.xlu0 %691
        %695 = vset.pattern.permute.xlu0 0
        %696 = vperm.xlu0 %695, %v440
        %v697 = vpop.permute.xlu0 %696
        %700 = vset.pattern.permute.xlu0 0
        %701 = vperm.xlu0 %700, %v441
        %v702 = vpop.permute.xlu0 %701
        %705 = vset.pattern.permute.xlu0 0
        %706 = vperm.xlu0 %705, %v442
        %v707 = vpop.permute.xlu0 %706
        %710 = vset.pattern.permute.xlu0 0
        %711 = vperm.xlu0 %710, %v443
        %v712 = vpop.permute.xlu0 %711
        %715 = vset.pattern.permute.xlu0 0
        %716 = vperm.xlu0 %715, %v444
        %v717 = vpop.permute.xlu0 %716
        %720 = vset.pattern.permute.xlu0 0
        %721 = vperm.xlu0 %720, %v445
        %v722 = vpop.permute.xlu0 %721
        %725 = vset.pattern.permute.xlu0 0
        %726 = vperm.xlu0 %725, %v446
        %v727 = vpop.permute.xlu0 %726
        %730 = vset.pattern.permute.xlu0 0
        %731 = vperm.xlu0 %730, %v447
        %v732 = vpop.permute.xlu0 %731
        %735 = vset.pattern.permute.xlu0 0
        %736 = vperm.xlu0 %735, %v448
        %v737 = vpop.permute.xlu0 %736
        %v739 = vsel %vm547, %v582, 0.0
        %v740 = vsel %vm548, %v587, 0.0
        %v741 = vsel %vm549, %v592, 0.0
        %v742 = vsel %vm550, %v597, 0.0
        %v743 = vsel %vm551, %v602, 0.0
        %v744 = vsel %vm552, %v607, 0.0
        %v745 = vsel %vm553, %v612, 0.0
        %v746 = vsel %vm554, %v617, 0.0
        %v747 = vsel %vm555, %v622, 0.0
        %v748 = vsel %vm556, %v627, 0.0
        %v749 = vsel %vm557, %v632, 0.0
        %v750 = vsel %vm558, %v637, 0.0
        %v751 = vsel %vm559, %v642, 0.0
        %v752 = vsel %vm560, %v647, 0.0
        %v753 = vsel %vm561, %v652, 0.0
        %v754 = vsel %vm562, %v657, 0.0
        %v755 = vsel %vm563, %v662, 0.0
        %v756 = vsel %vm564, %v667, 0.0
        %v757 = vsel %vm565, %v672, 0.0
        %v758 = vsel %vm566, %v677, 0.0
        %v759 = vsel %vm567, %v682, 0.0
        %v760 = vsel %vm568, %v687, 0.0
        %v761 = vsel %vm569, %v692, 0.0
        %v762 = vsel %vm570, %v697, 0.0
        %v763 = vsel %vm571, %v702, 0.0
        %v764 = vsel %vm572, %v707, 0.0
        %v765 = vsel %vm573, %v712, 0.0
        %v766 = vsel %vm574, %v717, 0.0
        %v767 = vsel %vm575, %v722, 0.0
        %v768 = vsel %vm576, %v727, 0.0
        %v769 = vsel %vm577, %v732, 0.0
        %v770 = vsel %vm578, %v737, 0.0
        %v771 = vadd.f32 %v739, 0.0
        %v772 = vadd.f32 %v740, 0.0
        %v773 = vadd.f32 %v741, 0.0
        %v774 = vadd.f32 %v742, 0.0
        %v775 = vadd.f32 %v743, 0.0
        %v776 = vadd.f32 %v744, 0.0
        %v777 = vadd.f32 %v745, 0.0
        %v778 = vadd.f32 %v746, 0.0
        %v779 = vadd.f32 %v747, 0.0
        %v780 = vadd.f32 %v748, 0.0
        %v781 = vadd.f32 %v749, 0.0
        %v782 = vadd.f32 %v750, 0.0
        %v783 = vadd.f32 %v751, 0.0
        %v784 = vadd.f32 %v752, 0.0
        %v785 = vadd.f32 %v753, 0.0
        %v786 = vadd.f32 %v754, 0.0
        %v787 = vadd.f32 %v755, 0.0
        %v788 = vadd.f32 %v756, 0.0
        %v789 = vadd.f32 %v757, 0.0
        %v790 = vadd.f32 %v758, 0.0
        %v791 = vadd.f32 %v759, 0.0
        %v792 = vadd.f32 %v760, 0.0
        %v793 = vadd.f32 %v761, 0.0
        %v794 = vadd.f32 %v762, 0.0
        %v795 = vadd.f32 %v763, 0.0
        %v796 = vadd.f32 %v764, 0.0
        %v797 = vadd.f32 %v765, 0.0
        %v798 = vadd.f32 %v766, 0.0
        %v799 = vadd.f32 %v767, 0.0
        %v800 = vadd.f32 %v768, 0.0
        %v801 = vadd.f32 %v769, 0.0
        %v802 = vadd.f32 %v770, 0.0
        %803 = vset.pattern.permute.xlu0 1
        %804 = vperm.xlu0 %803, %v385
        %v805 = vpop.permute.xlu0 %804
        %806 = vset.pattern.permute.xlu0 1
        %807 = vperm.xlu0 %806, %v386
        %v808 = vpop.permute.xlu0 %807
        %809 = vset.pattern.permute.xlu0 1
        %810 = vperm.xlu0 %809, %v387
        %v811 = vpop.permute.xlu0 %810
        %812 = vset.pattern.permute.xlu0 1
        %813 = vperm.xlu0 %812, %v388
        %v814 = vpop.permute.xlu0 %813
        %815 = vset.pattern.permute.xlu0 1
        %816 = vperm.xlu0 %815, %v389
        %v817 = vpop.permute.xlu0 %816
        %818 = vset.pattern.permute.xlu0 1
        %819 = vperm.xlu0 %818, %v390
        %v820 = vpop.permute.xlu0 %819
        %821 = vset.pattern.permute.xlu0 1
        %822 = vperm.xlu0 %821, %v391
        %v823 = vpop.permute.xlu0 %822
        %824 = vset.pattern.permute.xlu0 1
        %825 = vperm.xlu0 %824, %v392
        %v826 = vpop.permute.xlu0 %825
        %827 = vset.pattern.permute.xlu0 1
        %828 = vperm.xlu0 %827, %v393
        %v829 = vpop.permute.xlu0 %828
        %830 = vset.pattern.permute.xlu0 1
        %831 = vperm.xlu0 %830, %v394
        %v832 = vpop.permute.xlu0 %831
        %833 = vset.pattern.permute.xlu0 1
        %834 = vperm.xlu0 %833, %v395
        %v835 = vpop.permute.xlu0 %834
        %836 = vset.pattern.permute.xlu0 1
        %837 = vperm.xlu0 %836, %v396
        %v838 = vpop.permute.xlu0 %837
        %839 = vset.pattern.permute.xlu0 1
        %840 = vperm.xlu0 %839, %v397
        %v841 = vpop.permute.xlu0 %840
        %842 = vset.pattern.permute.xlu0 1
        %843 = vperm.xlu0 %842, %v398
        %v844 = vpop.permute.xlu0 %843
        %845 = vset.pattern.permute.xlu0 1
        %846 = vperm.xlu0 %845, %v399
        %v847 = vpop.permute.xlu0 %846
        %848 = vset.pattern.permute.xlu0 1
        %849 = vperm.xlu0 %848, %v400
        %v850 = vpop.permute.xlu0 %849
        %851 = vset.pattern.permute.xlu0 1
        %852 = vperm.xlu0 %851, %v401
        %v853 = vpop.permute.xlu0 %852
        %854 = vset.pattern.permute.xlu0 1
        %855 = vperm.xlu0 %854, %v402
        %v856 = vpop.permute.xlu0 %855
        %857 = vset.pattern.permute.xlu0 1
        %858 = vperm.xlu0 %857, %v403
        %v859 = vpop.permute.xlu0 %858
        %860 = vset.pattern.permute.xlu0 1
        %861 = vperm.xlu0 %860, %v404
        %v862 = vpop.permute.xlu0 %861
        %863 = vset.pattern.permute.xlu0 1
        %864 = vperm.xlu0 %863, %v405
        %v865 = vpop.permute.xlu0 %864
        %866 = vset.pattern.permute.xlu0 1
        %867 = vperm.xlu0 %866, %v406
        %v868 = vpop.permute.xlu0 %867
        %869 = vset.pattern.permute.xlu0 1
        %870 = vperm.xlu0 %869, %v407
        %v871 = vpop.permute.xlu0 %870
        %872 = vset.pattern.permute.xlu0 1
        %873 = vperm.xlu0 %872, %v408
        %v874 = vpop.permute.xlu0 %873
        %875 = vset.pattern.permute.xlu0 1
        %876 = vperm.xlu0 %875, %v409
        %v877 = vpop.permute.xlu0 %876
        %878 = vset.pattern.permute.xlu0 1
        %879 = vperm.xlu0 %878, %v410
        %v880 = vpop.permute.xlu0 %879
        %881 = vset.pattern.permute.xlu0 1
        %882 = vperm.xlu0 %881, %v411
        %v883 = vpop.permute.xlu0 %882
        %884 = vset.pattern.permute.xlu0 1
        %885 = vperm.xlu0 %884, %v412
        %v886 = vpop.permute.xlu0 %885
        %887 = vset.pattern.permute.xlu0 1
        %888 = vperm.xlu0 %887, %v413
        %v889 = vpop.permute.xlu0 %888
        %890 = vset.pattern.permute.xlu0 1
        %891 = vperm.xlu0 %890, %v414
        %v892 = vpop.permute.xlu0 %891
        %893 = vset.pattern.permute.xlu0 1
        %894 = vperm.xlu0 %893, %v415
        %v895 = vpop.permute.xlu0 %894
        %896 = vset.pattern.permute.xlu0 1
        %897 = vperm.xlu0 %896, %v416
        %v898 = vpop.permute.xlu0 %897
        %vm899 = vcmp.eq.s32.totalorder %v450, %v805
        %vm900 = vcmp.eq.s32.totalorder %v450, %v808
        %vm901 = vcmp.eq.s32.totalorder %v450, %v811
        %vm902 = vcmp.eq.s32.totalorder %v450, %v814
        %vm903 = vcmp.eq.s32.totalorder %v450, %v817
        %vm904 = vcmp.eq.s32.totalorder %v450, %v820
        %vm905 = vcmp.eq.s32.totalorder %v450, %v823
        %vm906 = vcmp.eq.s32.totalorder %v450, %v826
        %vm907 = vcmp.eq.s32.totalorder %v450, %v829
        %vm908 = vcmp.eq.s32.totalorder %v450, %v832
        %vm909 = vcmp.eq.s32.totalorder %v450, %v835
        %vm910 = vcmp.eq.s32.totalorder %v450, %v838
        %vm911 = vcmp.eq.s32.totalorder %v450, %v841
        %vm912 = vcmp.eq.s32.totalorder %v450, %v844
        %vm913 = vcmp.eq.s32.totalorder %v450, %v847
        %vm914 = vcmp.eq.s32.totalorder %v450, %v850
        %vm915 = vcmp.eq.s32.totalorder %v450, %v853
        %vm916 = vcmp.eq.s32.totalorder %v450, %v856
        %vm917 = vcmp.eq.s32.totalorder %v450, %v859
        %vm918 = vcmp.eq.s32.totalorder %v450, %v862
        %vm919 = vcmp.eq.s32.totalorder %v450, %v865
        %vm920 = vcmp.eq.s32.totalorder %v450, %v868
        %vm921 = vcmp.eq.s32.totalorder %v450, %v871
        %vm922 = vcmp.eq.s32.totalorder %v450, %v874
        %vm923 = vcmp.eq.s32.totalorder %v450, %v877
        %vm924 = vcmp.eq.s32.totalorder %v450, %v880
        %vm925 = vcmp.eq.s32.totalorder %v450, %v883
        %vm926 = vcmp.eq.s32.totalorder %v450, %v886
        %vm927 = vcmp.eq.s32.totalorder %v450, %v889
        %vm928 = vcmp.eq.s32.totalorder %v450, %v892
        %vm929 = vcmp.eq.s32.totalorder %v450, %v895
        %vm930 = vcmp.eq.s32.totalorder %v450, %v898
        %931 = vset.pattern.permute.xlu0 1
        %932 = vperm.xlu0 %931, %v417
        %v933 = vpop.permute.xlu0 %932
        %935 = vset.pattern.permute.xlu0 1
        %936 = vperm.xlu0 %935, %v418
        %v937 = vpop.permute.xlu0 %936
        %939 = vset.pattern.permute.xlu0 1
        %940 = vperm.xlu0 %939, %v419
        %v941 = vpop.permute.xlu0 %940
        %943 = vset.pattern.permute.xlu0 1
        %944 = vperm.xlu0 %943, %v420
        %v945 = vpop.permute.xlu0 %944
        %947 = vset.pattern.permute.xlu0 1
        %948 = vperm.xlu0 %947, %v421
        %v949 = vpop.permute.xlu0 %948
        %951 = vset.pattern.permute.xlu0 1
        %952 = vperm.xlu0 %951, %v422
        %v953 = vpop.permute.xlu0 %952
        %955 = vset.pattern.permute.xlu0 1
        %956 = vperm.xlu0 %955, %v423
        %v957 = vpop.permute.xlu0 %956
        %959 = vset.pattern.permute.xlu0 1
        %960 = vperm.xlu0 %959, %v424
        %v961 = vpop.permute.xlu0 %960
        %963 = vset.pattern.permute.xlu0 1
        %964 = vperm.xlu0 %963, %v425
        %v965 = vpop.permute.xlu0 %964
        %967 = vset.pattern.permute.xlu0 1
        %968 = vperm.xlu0 %967, %v426
        %v969 = vpop.permute.xlu0 %968
        %971 = vset.pattern.permute.xlu0 1
        %972 = vperm.xlu0 %971, %v427
        %v973 = vpop.permute.xlu0 %972
        %975 = vset.pattern.permute.xlu0 1
        %976 = vperm.xlu0 %975, %v428
        %v977 = vpop.permute.xlu0 %976
        %979 = vset.pattern.permute.xlu0 1
        %980 = vperm.xlu0 %979, %v429
        %v981 = vpop.permute.xlu0 %980
        %983 = vset.pattern.permute.xlu0 1
        %984 = vperm.xlu0 %983, %v430
        %v985 = vpop.permute.xlu0 %984
        %987 = vset.pattern.permute.xlu0 1
        %988 = vperm.xlu0 %987, %v431
        %v989 = vpop.permute.xlu0 %988
        %991 = vset.pattern.permute.xlu0 1
        %992 = vperm.xlu0 %991, %v432
        %v993 = vpop.permute.xlu0 %992
        %995 = vset.pattern.permute.xlu0 1
        %996 = vperm.xlu0 %995, %v433
        %v997 = vpop.permute.xlu0 %996
        %999 = vset.pattern.permute.xlu0 1
        %1000 = vperm.xlu0 %999, %v434
        %v1001 = vpop.permute.xlu0 %1000
        %1003 = vset.pattern.permute.xlu0 1
        %1004 = vperm.xlu0 %1003, %v435
        %v1005 = vpop.permute.xlu0 %1004
        %1007 = vset.pattern.permute.xlu0 1
        %1008 = vperm.xlu0 %1007, %v436
        %v1009 = vpop.permute.xlu0 %1008
        %1011 = vset.pattern.permute.xlu0 1
        %1012 = vperm.xlu0 %1011, %v437
        %v1013 = vpop.permute.xlu0 %1012
        %1015 = vset.pattern.permute.xlu0 1
        %1016 = vperm.xlu0 %1015, %v438
        %v1017 = vpop.permute.xlu0 %1016
        %1019 = vset.pattern.permute.xlu0 1
        %1020 = vperm.xlu0 %1019, %v439
        %v1021 = vpop.permute.xlu0 %1020
        %1023 = vset.pattern.permute.xlu0 1
        %1024 = vperm.xlu0 %1023, %v440
        %v1025 = vpop.permute.xlu0 %1024
        %1027 = vset.pattern.permute.xlu0 1
        %1028 = vperm.xlu0 %1027, %v441
        %v1029 = vpop.permute.xlu0 %1028
        %1031 = vset.pattern.permute.xlu0 1
        %1032 = vperm.xlu0 %1031, %v442
        %v1033 = vpop.permute.xlu0 %1032
        %1035 = vset.pattern.permute.xlu0 1
        %1036 = vperm.xlu0 %1035, %v443
        %v1037 = vpop.permute.xlu0 %1036
        %1039 = vset.pattern.permute.xlu0 1
        %1040 = vperm.xlu0 %1039, %v444
        %v1041 = vpop.permute.xlu0 %1040
        %1043 = vset.pattern.permute.xlu0 1
        %1044 = vperm.xlu0 %1043, %v445
        %v1045 = vpop.permute.xlu0 %1044
        %1047 = vset.pattern.permute.xlu0 1
        %1048 = vperm.xlu0 %1047, %v446
        %v1049 = vpop.permute.xlu0 %1048
        %1051 = vset.pattern.permute.xlu0 1
        %1052 = vperm.xlu0 %1051, %v447
        %v1053 = vpop.permute.xlu0 %1052
        %1055 = vset.pattern.permute.xlu0 1
        %1056 = vperm.xlu0 %1055, %v448
        %v1057 = vpop.permute.xlu0 %1056
        %v1059 = vsel %vm899, %v933, 0.0
        %v1060 = vsel %vm900, %v937, 0.0
        %v1061 = vsel %vm901, %v941, 0.0
        %v1062 = vsel %vm902, %v945, 0.0
        %v1063 = vsel %vm903, %v949, 0.0
        %v1064 = vsel %vm904, %v953, 0.0
        %v1065 = vsel %vm905, %v957, 0.0
        %v1066 = vsel %vm906, %v961, 0.0
        %v1067 = vsel %vm907, %v965, 0.0
        %v1068 = vsel %vm908, %v969, 0.0
        %v1069 = vsel %vm909, %v973, 0.0
        %v1070 = vsel %vm910, %v977, 0.0
        %v1071 = vsel %vm911, %v981, 0.0
        %v1072 = vsel %vm912, %v985, 0.0
        %v1073 = vsel %vm913, %v989, 0.0
        %v1074 = vsel %vm914, %v993, 0.0
        %v1075 = vsel %vm915, %v997, 0.0
        %v1076 = vsel %vm916, %v1001, 0.0
        %v1077 = vsel %vm917, %v1005, 0.0
        %v1078 = vsel %vm918, %v1009, 0.0
        %v1079 = vsel %vm919, %v1013, 0.0
        %v1080 = vsel %vm920, %v1017, 0.0
        %v1081 = vsel %vm921, %v1021, 0.0
        %v1082 = vsel %vm922, %v1025, 0.0
        %v1083 = vsel %vm923, %v1029, 0.0
        %v1084 = vsel %vm924, %v1033, 0.0
        %v1085 = vsel %vm925, %v1037, 0.0
        %v1086 = vsel %vm926, %v1041, 0.0
        %v1087 = vsel %vm927, %v1045, 0.0
        %v1088 = vsel %vm928, %v1049, 0.0
        %v1089 = vsel %vm929, %v1053, 0.0
        %v1090 = vsel %vm930, %v1057, 0.0
        %v1091 = vadd.f32 %v771, %v1059
        %v1092 = vadd.f32 %v772, %v1060
        %v1093 = vadd.f32 %v773, %v1061
        %v1094 = vadd.f32 %v774, %v1062
        %v1095 = vadd.f32 %v775, %v1063
        %v1096 = vadd.f32 %v776, %v1064
        %v1097 = vadd.f32 %v777, %v1065
        %v1098 = vadd.f32 %v778, %v1066
        %v1099 = vadd.f32 %v779, %v1067
        %v1100 = vadd.f32 %v780, %v1068
        %v1101 = vadd.f32 %v781, %v1069
        %v1102 = vadd.f32 %v782, %v1070
        %v1103 = vadd.f32 %v783, %v1071
        %v1104 = vadd.f32 %v784, %v1072
        %v1105 = vadd.f32 %v785, %v1073
        %v1106 = vadd.f32 %v786, %v1074
        %v1107 = vadd.f32 %v787, %v1075
        %v1108 = vadd.f32 %v788, %v1076
        %v1109 = vadd.f32 %v789, %v1077
        %v1110 = vadd.f32 %v790, %v1078
        %v1111 = vadd.f32 %v791, %v1079
        %v1112 = vadd.f32 %v792, %v1080
        %v1113 = vadd.f32 %v793, %v1081
        %v1114 = vadd.f32 %v794, %v1082
        %v1115 = vadd.f32 %v795, %v1083
        %v1116 = vadd.f32 %v796, %v1084
        %v1117 = vadd.f32 %v797, %v1085
        %v1118 = vadd.f32 %v798, %v1086
        %v1119 = vadd.f32 %v799, %v1087
        %v1120 = vadd.f32 %v800, %v1088
        %v1121 = vadd.f32 %v801, %v1089
        %v1122 = vadd.f32 %v802, %v1090
        %1123 = vset.pattern.permute.xlu0 2
        %1124 = vperm.xlu0 %1123, %v385
        %v1125 = vpop.permute.xlu0 %1124
        %1126 = vset.pattern.permute.xlu0 2
        %1127 = vperm.xlu0 %1126, %v386
        %v1128 = vpop.permute.xlu0 %1127
        %1129 = vset.pattern.permute.xlu0 2
        %1130 = vperm.xlu0 %1129, %v387
        %v1131 = vpop.permute.xlu0 %1130
        %1132 = vset.pattern.permute.xlu0 2
        %1133 = vperm.xlu0 %1132, %v388
        %v1134 = vpop.permute.xlu0 %1133
        %1135 = vset.pattern.permute.xlu0 2
        %1136 = vperm.xlu0 %1135, %v389
        %v1137 = vpop.permute.xlu0 %1136
        %1138 = vset.pattern.permute.xlu0 2
        %1139 = vperm.xlu0 %1138, %v390
        %v1140 = vpop.permute.xlu0 %1139
        %1141 = vset.pattern.permute.xlu0 2
        %1142 = vperm.xlu0 %1141, %v391
        %v1143 = vpop.permute.xlu0 %1142
        %1144 = vset.pattern.permute.xlu0 2
        %1145 = vperm.xlu0 %1144, %v392
        %v1146 = vpop.permute.xlu0 %1145
        %1147 = vset.pattern.permute.xlu0 2
        %1148 = vperm.xlu0 %1147, %v393
        %v1149 = vpop.permute.xlu0 %1148
        %1150 = vset.pattern.permute.xlu0 2
        %1151 = vperm.xlu0 %1150, %v394
        %v1152 = vpop.permute.xlu0 %1151
        %1153 = vset.pattern.permute.xlu0 2
        %1154 = vperm.xlu0 %1153, %v395
        %v1155 = vpop.permute.xlu0 %1154
        %1156 = vset.pattern.permute.xlu0 2
        %1157 = vperm.xlu0 %1156, %v396
        %v1158 = vpop.permute.xlu0 %1157
        %1159 = vset.pattern.permute.xlu0 2
        %1160 = vperm.xlu0 %1159, %v397
        %v1161 = vpop.permute.xlu0 %1160
        %1162 = vset.pattern.permute.xlu0 2
        %1163 = vperm.xlu0 %1162, %v398
        %v1164 = vpop.permute.xlu0 %1163
        %1165 = vset.pattern.permute.xlu0 2
        %1166 = vperm.xlu0 %1165, %v399
        %v1167 = vpop.permute.xlu0 %1166
        %1168 = vset.pattern.permute.xlu0 2
        %1169 = vperm.xlu0 %1168, %v400
        %v1170 = vpop.permute.xlu0 %1169
        %1171 = vset.pattern.permute.xlu0 2
        %1172 = vperm.xlu0 %1171, %v401
        %v1173 = vpop.permute.xlu0 %1172
        %1174 = vset.pattern.permute.xlu0 2
        %1175 = vperm.xlu0 %1174, %v402
        %v1176 = vpop.permute.xlu0 %1175
        %1177 = vset.pattern.permute.xlu0 2
        %1178 = vperm.xlu0 %1177, %v403
        %v1179 = vpop.permute.xlu0 %1178
        %1180 = vset.pattern.permute.xlu0 2
        %1181 = vperm.xlu0 %1180, %v404
        %v1182 = vpop.permute.xlu0 %1181
        %1183 = vset.pattern.permute.xlu0 2
        %1184 = vperm.xlu0 %1183, %v405
        %v1185 = vpop.permute.xlu0 %1184
        %1186 = vset.pattern.permute.xlu0 2
        %1187 = vperm.xlu0 %1186, %v406
        %v1188 = vpop.permute.xlu0 %1187
        %1189 = vset.pattern.permute.xlu0 2
        %1190 = vperm.xlu0 %1189, %v407
        %v1191 = vpop.permute.xlu0 %1190
        %1192 = vset.pattern.permute.xlu0 2
        %1193 = vperm.xlu0 %1192, %v408
        %v1194 = vpop.permute.xlu0 %1193
        %1195 = vset.pattern.permute.xlu0 2
        %1196 = vperm.xlu0 %1195, %v409
        %v1197 = vpop.permute.xlu0 %1196
        %1198 = vset.pattern.permute.xlu0 2
        %1199 = vperm.xlu0 %1198, %v410
        %v1200 = vpop.permute.xlu0 %1199
        %1201 = vset.pattern.permute.xlu0 2
        %1202 = vperm.xlu0 %1201, %v411
        %v1203 = vpop.permute.xlu0 %1202
        %1204 = vset.pattern.permute.xlu0 2
        %1205 = vperm.xlu0 %1204, %v412
        %v1206 = vpop.permute.xlu0 %1205
        %1207 = vset.pattern.permute.xlu0 2
        %1208 = vperm.xlu0 %1207, %v413
        %v1209 = vpop.permute.xlu0 %1208
        %1210 = vset.pattern.permute.xlu0 2
        %1211 = vperm.xlu0 %1210, %v414
        %v1212 = vpop.permute.xlu0 %1211
        %1213 = vset.pattern.permute.xlu0 2
        %1214 = vperm.xlu0 %1213, %v415
        %v1215 = vpop.permute.xlu0 %1214
        %1216 = vset.pattern.permute.xlu0 2
        %1217 = vperm.xlu0 %1216, %v416
        %v1218 = vpop.permute.xlu0 %1217
        %vm1219 = vcmp.eq.s32.totalorder %v450, %v1125
        %vm1220 = vcmp.eq.s32.totalorder %v450, %v1128
        %vm1221 = vcmp.eq.s32.totalorder %v450, %v1131
        %vm1222 = vcmp.eq.s32.totalorder %v450, %v1134
        %vm1223 = vcmp.eq.s32.totalorder %v450, %v1137
        %vm1224 = vcmp.eq.s32.totalorder %v450, %v1140
        %vm1225 = vcmp.eq.s32.totalorder %v450, %v1143
        %vm1226 = vcmp.eq.s32.totalorder %v450, %v1146
        %vm1227 = vcmp.eq.s32.totalorder %v450, %v1149
        %vm1228 = vcmp.eq.s32.totalorder %v450, %v1152
        %vm1229 = vcmp.eq.s32.totalorder %v450, %v1155
        %vm1230 = vcmp.eq.s32.totalorder %v450, %v1158
        %vm1231 = vcmp.eq.s32.totalorder %v450, %v1161
        %vm1232 = vcmp.eq.s32.totalorder %v450, %v1164
        %vm1233 = vcmp.eq.s32.totalorder %v450, %v1167
        %vm1234 = vcmp.eq.s32.totalorder %v450, %v1170
        %vm1235 = vcmp.eq.s32.totalorder %v450, %v1173
        %vm1236 = vcmp.eq.s32.totalorder %v450, %v1176
        %vm1237 = vcmp.eq.s32.totalorder %v450, %v1179
        %vm1238 = vcmp.eq.s32.totalorder %v450, %v1182
        %vm1239 = vcmp.eq.s32.totalorder %v450, %v1185
        %vm1240 = vcmp.eq.s32.totalorder %v450, %v1188
        %vm1241 = vcmp.eq.s32.totalorder %v450, %v1191
        %vm1242 = vcmp.eq.s32.totalorder %v450, %v1194
        %vm1243 = vcmp.eq.s32.totalorder %v450, %v1197
        %vm1244 = vcmp.eq.s32.totalorder %v450, %v1200
        %vm1245 = vcmp.eq.s32.totalorder %v450, %v1203
        %vm1246 = vcmp.eq.s32.totalorder %v450, %v1206
        %vm1247 = vcmp.eq.s32.totalorder %v450, %v1209
        %vm1248 = vcmp.eq.s32.totalorder %v450, %v1212
        %vm1249 = vcmp.eq.s32.totalorder %v450, %v1215
        %vm1250 = vcmp.eq.s32.totalorder %v450, %v1218
        %1251 = vset.pattern.permute.xlu0 2
        %1252 = vperm.xlu0 %1251, %v417
        %v1253 = vpop.permute.xlu0 %1252
        %1255 = vset.pattern.permute.xlu0 2
        %1256 = vperm.xlu0 %1255, %v418
        %v1257 = vpop.permute.xlu0 %1256
        %1259 = vset.pattern.permute.xlu0 2
        %1260 = vperm.xlu0 %1259, %v419
        %v1261 = vpop.permute.xlu0 %1260
        %1263 = vset.pattern.permute.xlu0 2
        %1264 = vperm.xlu0 %1263, %v420
        %v1265 = vpop.permute.xlu0 %1264
        %1267 = vset.pattern.permute.xlu0 2
        %1268 = vperm.xlu0 %1267, %v421
        %v1269 = vpop.permute.xlu0 %1268
        %1271 = vset.pattern.permute.xlu0 2
        %1272 = vperm.xlu0 %1271, %v422
        %v1273 = vpop.permute.xlu0 %1272
        %1275 = vset.pattern.permute.xlu0 2
        %1276 = vperm.xlu0 %1275, %v423
        %v1277 = vpop.permute.xlu0 %1276
        %1279 = vset.pattern.permute.xlu0 2
        %1280 = vperm.xlu0 %1279, %v424
        %v1281 = vpop.permute.xlu0 %1280
        %1283 = vset.pattern.permute.xlu0 2
        %1284 = vperm.xlu0 %1283, %v425
        %v1285 = vpop.permute.xlu0 %1284
        %1287 = vset.pattern.permute.xlu0 2
        %1288 = vperm.xlu0 %1287, %v426
        %v1289 = vpop.permute.xlu0 %1288
        %1291 = vset.pattern.permute.xlu0 2
        %1292 = vperm.xlu0 %1291, %v427
        %v1293 = vpop.permute.xlu0 %1292
        %1295 = vset.pattern.permute.xlu0 2
        %1296 = vperm.xlu0 %1295, %v428
        %v1297 = vpop.permute.xlu0 %1296
        %1299 = vset.pattern.permute.xlu0 2
        %1300 = vperm.xlu0 %1299, %v429
        %v1301 = vpop.permute.xlu0 %1300
        %1303 = vset.pattern.permute.xlu0 2
        %1304 = vperm.xlu0 %1303, %v430
        %v1305 = vpop.permute.xlu0 %1304
        %1307 = vset.pattern.permute.xlu0 2
        %1308 = vperm.xlu0 %1307, %v431
        %v1309 = vpop.permute.xlu0 %1308
        %1311 = vset.pattern.permute.xlu0 2
        %1312 = vperm.xlu0 %1311, %v432
        %v1313 = vpop.permute.xlu0 %1312
        %1315 = vset.pattern.permute.xlu0 2
        %1316 = vperm.xlu0 %1315, %v433
        %v1317 = vpop.permute.xlu0 %1316
        %1319 = vset.pattern.permute.xlu0 2
        %1320 = vperm.xlu0 %1319, %v434
        %v1321 = vpop.permute.xlu0 %1320
        %1323 = vset.pattern.permute.xlu0 2
        %1324 = vperm.xlu0 %1323, %v435
        %v1325 = vpop.permute.xlu0 %1324
        %1327 = vset.pattern.permute.xlu0 2
        %1328 = vperm.xlu0 %1327, %v436
        %v1329 = vpop.permute.xlu0 %1328
        %1331 = vset.pattern.permute.xlu0 2
        %1332 = vperm.xlu0 %1331, %v437
        %v1333 = vpop.permute.xlu0 %1332
        %1335 = vset.pattern.permute.xlu0 2
        %1336 = vperm.xlu0 %1335, %v438
        %v1337 = vpop.permute.xlu0 %1336
        %1339 = vset.pattern.permute.xlu0 2
        %1340 = vperm.xlu0 %1339, %v439
        %v1341 = vpop.permute.xlu0 %1340
        %1343 = vset.pattern.permute.xlu0 2
        %1344 = vperm.xlu0 %1343, %v440
        %v1345 = vpop.permute.xlu0 %1344
        %1347 = vset.pattern.permute.xlu0 2
        %1348 = vperm.xlu0 %1347, %v441
        %v1349 = vpop.permute.xlu0 %1348
        %1351 = vset.pattern.permute.xlu0 2
        %1352 = vperm.xlu0 %1351, %v442
        %v1353 = vpop.permute.xlu0 %1352
        %1355 = vset.pattern.permute.xlu0 2
        %1356 = vperm.xlu0 %1355, %v443
        %v1357 = vpop.permute.xlu0 %1356
        %1359 = vset.pattern.permute.xlu0 2
        %1360 = vperm.xlu0 %1359, %v444
        %v1361 = vpop.permute.xlu0 %1360
        %1363 = vset.pattern.permute.xlu0 2
        %1364 = vperm.xlu0 %1363, %v445
        %v1365 = vpop.permute.xlu0 %1364
        %1367 = vset.pattern.permute.xlu0 2
        %1368 = vperm.xlu0 %1367, %v446
        %v1369 = vpop.permute.xlu0 %1368
        %1371 = vset.pattern.permute.xlu0 2
        %1372 = vperm.xlu0 %1371, %v447
        %v1373 = vpop.permute.xlu0 %1372
        %1375 = vset.pattern.permute.xlu0 2
        %1376 = vperm.xlu0 %1375, %v448
        %v1377 = vpop.permute.xlu0 %1376
        %v1379 = vsel %vm1219, %v1253, 0.0
        %v1380 = vsel %vm1220, %v1257, 0.0
        %v1381 = vsel %vm1221, %v1261, 0.0
        %v1382 = vsel %vm1222, %v1265, 0.0
        %v1383 = vsel %vm1223, %v1269, 0.0
        %v1384 = vsel %vm1224, %v1273, 0.0
        %v1385 = vsel %vm1225, %v1277, 0.0
        %v1386 = vsel %vm1226, %v1281, 0.0
        %v1387 = vsel %vm1227, %v1285, 0.0
        %v1388 = vsel %vm1228, %v1289, 0.0
        %v1389 = vsel %vm1229, %v1293, 0.0
        %v1390 = vsel %vm1230, %v1297, 0.0
        %v1391 = vsel %vm1231, %v1301, 0.0
        %v1392 = vsel %vm1232, %v1305, 0.0
        %v1393 = vsel %vm1233, %v1309, 0.0
        %v1394 = vsel %vm1234, %v1313, 0.0
        %v1395 = vsel %vm1235, %v1317, 0.0
        %v1396 = vsel %vm1236, %v1321, 0.0
        %v1397 = vsel %vm1237, %v1325, 0.0
        %v1398 = vsel %vm1238, %v1329, 0.0
        %v1399 = vsel %vm1239, %v1333, 0.0
        %v1400 = vsel %vm1240, %v1337, 0.0
        %v1401 = vsel %vm1241, %v1341, 0.0
        %v1402 = vsel %vm1242, %v1345, 0.0
        %v1403 = vsel %vm1243, %v1349, 0.0
        %v1404 = vsel %vm1244, %v1353, 0.0
        %v1405 = vsel %vm1245, %v1357, 0.0
        %v1406 = vsel %vm1246, %v1361, 0.0
        %v1407 = vsel %vm1247, %v1365, 0.0
        %v1408 = vsel %vm1248, %v1369, 0.0
        %v1409 = vsel %vm1249, %v1373, 0.0
        %v1410 = vsel %vm1250, %v1377, 0.0
        %v1411 = vadd.f32 %v1091, %v1379
        %v1412 = vadd.f32 %v1092, %v1380
        %v1413 = vadd.f32 %v1093, %v1381
        %v1414 = vadd.f32 %v1094, %v1382
        %v1415 = vadd.f32 %v1095, %v1383
        %v1416 = vadd.f32 %v1096, %v1384
        %v1417 = vadd.f32 %v1097, %v1385
        %v1418 = vadd.f32 %v1098, %v1386
        %v1419 = vadd.f32 %v1099, %v1387
        %v1420 = vadd.f32 %v1100, %v1388
        %v1421 = vadd.f32 %v1101, %v1389
        %v1422 = vadd.f32 %v1102, %v1390
        %v1423 = vadd.f32 %v1103, %v1391
        %v1424 = vadd.f32 %v1104, %v1392
        %v1425 = vadd.f32 %v1105, %v1393
        %v1426 = vadd.f32 %v1106, %v1394
        %v1427 = vadd.f32 %v1107, %v1395
        %v1428 = vadd.f32 %v1108, %v1396
        %v1429 = vadd.f32 %v1109, %v1397
        %v1430 = vadd.f32 %v1110, %v1398
        %v1431 = vadd.f32 %v1111, %v1399
        %v1432 = vadd.f32 %v1112, %v1400
        %v1433 = vadd.f32 %v1113, %v1401
        %v1434 = vadd.f32 %v1114, %v1402
        %v1435 = vadd.f32 %v1115, %v1403
        %v1436 = vadd.f32 %v1116, %v1404
        %v1437 = vadd.f32 %v1117, %v1405
        %v1438 = vadd.f32 %v1118, %v1406
        %v1439 = vadd.f32 %v1119, %v1407
        %v1440 = vadd.f32 %v1120, %v1408
        %v1441 = vadd.f32 %v1121, %v1409
        %v1442 = vadd.f32 %v1122, %v1410
        %1443 = vset.pattern.permute.xlu0 3
        %1444 = vperm.xlu0 %1443, %v385
        %v1445 = vpop.permute.xlu0 %1444
        %1446 = vset.pattern.permute.xlu0 3
        %1447 = vperm.xlu0 %1446, %v386
        %v1448 = vpop.permute.xlu0 %1447
        %1449 = vset.pattern.permute.xlu0 3
        %1450 = vperm.xlu0 %1449, %v387
        %v1451 = vpop.permute.xlu0 %1450
        %1452 = vset.pattern.permute.xlu0 3
        %1453 = vperm.xlu0 %1452, %v388
        %v1454 = vpop.permute.xlu0 %1453
        %1455 = vset.pattern.permute.xlu0 3
        %1456 = vperm.xlu0 %1455, %v389
        %v1457 = vpop.permute.xlu0 %1456
        %1458 = vset.pattern.permute.xlu0 3
        %1459 = vperm.xlu0 %1458, %v390
        %v1460 = vpop.permute.xlu0 %1459
        %1461 = vset.pattern.permute.xlu0 3
        %1462 = vperm.xlu0 %1461, %v391
        %v1463 = vpop.permute.xlu0 %1462
        %1464 = vset.pattern.permute.xlu0 3
        %1465 = vperm.xlu0 %1464, %v392
        %v1466 = vpop.permute.xlu0 %1465
        %1467 = vset.pattern.permute.xlu0 3
        %1468 = vperm.xlu0 %1467, %v393
        %v1469 = vpop.permute.xlu0 %1468
        %1470 = vset.pattern.permute.xlu0 3
        %1471 = vperm.xlu0 %1470, %v394
        %v1472 = vpop.permute.xlu0 %1471
        %1473 = vset.pattern.permute.xlu0 3
        %1474 = vperm.xlu0 %1473, %v395
        %v1475 = vpop.permute.xlu0 %1474
        %1476 = vset.pattern.permute.xlu0 3
        %1477 = vperm.xlu0 %1476, %v396
        %v1478 = vpop.permute.xlu0 %1477
        %1479 = vset.pattern.permute.xlu0 3
        %1480 = vperm.xlu0 %1479, %v397
        %v1481 = vpop.permute.xlu0 %1480
        %1482 = vset.pattern.permute.xlu0 3
        %1483 = vperm.xlu0 %1482, %v398
        %v1484 = vpop.permute.xlu0 %1483
        %1485 = vset.pattern.permute.xlu0 3
        %1486 = vperm.xlu0 %1485, %v399
        %v1487 = vpop.permute.xlu0 %1486
        %1488 = vset.pattern.permute.xlu0 3
        %1489 = vperm.xlu0 %1488, %v400
        %v1490 = vpop.permute.xlu0 %1489
        %1491 = vset.pattern.permute.xlu0 3
        %1492 = vperm.xlu0 %1491, %v401
        %v1493 = vpop.permute.xlu0 %1492
        %1494 = vset.pattern.permute.xlu0 3
        %1495 = vperm.xlu0 %1494, %v402
        %v1496 = vpop.permute.xlu0 %1495
        %1497 = vset.pattern.permute.xlu0 3
        %1498 = vperm.xlu0 %1497, %v403
        %v1499 = vpop.permute.xlu0 %1498
        %1500 = vset.pattern.permute.xlu0 3
        %1501 = vperm.xlu0 %1500, %v404
        %v1502 = vpop.permute.xlu0 %1501
        %1503 = vset.pattern.permute.xlu0 3
        %1504 = vperm.xlu0 %1503, %v405
        %v1505 = vpop.permute.xlu0 %1504
        %1506 = vset.pattern.permute.xlu0 3
        %1507 = vperm.xlu0 %1506, %v406
        %v1508 = vpop.permute.xlu0 %1507
        %1509 = vset.pattern.permute.xlu0 3
        %1510 = vperm.xlu0 %1509, %v407
        %v1511 = vpop.permute.xlu0 %1510
        %1512 = vset.pattern.permute.xlu0 3
        %1513 = vperm.xlu0 %1512, %v408
        %v1514 = vpop.permute.xlu0 %1513
        %1515 = vset.pattern.permute.xlu0 3
        %1516 = vperm.xlu0 %1515, %v409
        %v1517 = vpop.permute.xlu0 %1516
        %1518 = vset.pattern.permute.xlu0 3
        %1519 = vperm.xlu0 %1518, %v410
        %v1520 = vpop.permute.xlu0 %1519
        %1521 = vset.pattern.permute.xlu0 3
        %1522 = vperm.xlu0 %1521, %v411
        %v1523 = vpop.permute.xlu0 %1522
        %1524 = vset.pattern.permute.xlu0 3
        %1525 = vperm.xlu0 %1524, %v412
        %v1526 = vpop.permute.xlu0 %1525
        %1527 = vset.pattern.permute.xlu0 3
        %1528 = vperm.xlu0 %1527, %v413
        %v1529 = vpop.permute.xlu0 %1528
        %1530 = vset.pattern.permute.xlu0 3
        %1531 = vperm.xlu0 %1530, %v414
        %v1532 = vpop.permute.xlu0 %1531
        %1533 = vset.pattern.permute.xlu0 3
        %1534 = vperm.xlu0 %1533, %v415
        %v1535 = vpop.permute.xlu0 %1534
        %1536 = vset.pattern.permute.xlu0 3
        %1537 = vperm.xlu0 %1536, %v416
        %v1538 = vpop.permute.xlu0 %1537
        %vm1539 = vcmp.eq.s32.totalorder %v450, %v1445
        %vm1540 = vcmp.eq.s32.totalorder %v450, %v1448
        %vm1541 = vcmp.eq.s32.totalorder %v450, %v1451
        %vm1542 = vcmp.eq.s32.totalorder %v450, %v1454
        %vm1543 = vcmp.eq.s32.totalorder %v450, %v1457
        %vm1544 = vcmp.eq.s32.totalorder %v450, %v1460
        %vm1545 = vcmp.eq.s32.totalorder %v450, %v1463
        %vm1546 = vcmp.eq.s32.totalorder %v450, %v1466
        %vm1547 = vcmp.eq.s32.totalorder %v450, %v1469
        %vm1548 = vcmp.eq.s32.totalorder %v450, %v1472
        %vm1549 = vcmp.eq.s32.totalorder %v450, %v1475
        %vm1550 = vcmp.eq.s32.totalorder %v450, %v1478
        %vm1551 = vcmp.eq.s32.totalorder %v450, %v1481
        %vm1552 = vcmp.eq.s32.totalorder %v450, %v1484
        %vm1553 = vcmp.eq.s32.totalorder %v450, %v1487
        %vm1554 = vcmp.eq.s32.totalorder %v450, %v1490
        %vm1555 = vcmp.eq.s32.totalorder %v450, %v1493
        %vm1556 = vcmp.eq.s32.totalorder %v450, %v1496
        %vm1557 = vcmp.eq.s32.totalorder %v450, %v1499
        %vm1558 = vcmp.eq.s32.totalorder %v450, %v1502
        %vm1559 = vcmp.eq.s32.totalorder %v450, %v1505
        %vm1560 = vcmp.eq.s32.totalorder %v450, %v1508
        %vm1561 = vcmp.eq.s32.totalorder %v450, %v1511
        %vm1562 = vcmp.eq.s32.totalorder %v450, %v1514
        %vm1563 = vcmp.eq.s32.totalorder %v450, %v1517
        %vm1564 = vcmp.eq.s32.totalorder %v450, %v1520
        %vm1565 = vcmp.eq.s32.totalorder %v450, %v1523
        %vm1566 = vcmp.eq.s32.totalorder %v450, %v1526
        %vm1567 = vcmp.eq.s32.totalorder %v450, %v1529
        %vm1568 = vcmp.eq.s32.totalorder %v450, %v1532
        %vm1569 = vcmp.eq.s32.totalorder %v450, %v1535
        %vm1570 = vcmp.eq.s32.totalorder %v450, %v1538
        %1571 = vset.pattern.permute.xlu0 3
        %1572 = vperm.xlu0 %1571, %v417
        %v1573 = vpop.permute.xlu0 %1572
        %1575 = vset.pattern.permute.xlu0 3
        %1576 = vperm.xlu0 %1575, %v418
        %v1577 = vpop.permute.xlu0 %1576
        %1579 = vset.pattern.permute.xlu0 3
        %1580 = vperm.xlu0 %1579, %v419
        %v1581 = vpop.permute.xlu0 %1580
        %1583 = vset.pattern.permute.xlu0 3
        %1584 = vperm.xlu0 %1583, %v420
        %v1585 = vpop.permute.xlu0 %1584
        %1587 = vset.pattern.permute.xlu0 3
        %1588 = vperm.xlu0 %1587, %v421
        %v1589 = vpop.permute.xlu0 %1588
        %1591 = vset.pattern.permute.xlu0 3
        %1592 = vperm.xlu0 %1591, %v422
        %v1593 = vpop.permute.xlu0 %1592
        %1595 = vset.pattern.permute.xlu0 3
        %1596 = vperm.xlu0 %1595, %v423
        %v1597 = vpop.permute.xlu0 %1596
        %1599 = vset.pattern.permute.xlu0 3
        %1600 = vperm.xlu0 %1599, %v424
        %v1601 = vpop.permute.xlu0 %1600
        %1603 = vset.pattern.permute.xlu0 3
        %1604 = vperm.xlu0 %1603, %v425
        %v1605 = vpop.permute.xlu0 %1604
        %1607 = vset.pattern.permute.xlu0 3
        %1608 = vperm.xlu0 %1607, %v426
        %v1609 = vpop.permute.xlu0 %1608
        %1611 = vset.pattern.permute.xlu0 3
        %1612 = vperm.xlu0 %1611, %v427
        %v1613 = vpop.permute.xlu0 %1612
        %1615 = vset.pattern.permute.xlu0 3
        %1616 = vperm.xlu0 %1615, %v428
        %v1617 = vpop.permute.xlu0 %1616
        %1619 = vset.pattern.permute.xlu0 3
        %1620 = vperm.xlu0 %1619, %v429
        %v1621 = vpop.permute.xlu0 %1620
        %1623 = vset.pattern.permute.xlu0 3
        %1624 = vperm.xlu0 %1623, %v430
        %v1625 = vpop.permute.xlu0 %1624
        %1627 = vset.pattern.permute.xlu0 3
        %1628 = vperm.xlu0 %1627, %v431
        %v1629 = vpop.permute.xlu0 %1628
        %1631 = vset.pattern.permute.xlu0 3
        %1632 = vperm.xlu0 %1631, %v432
        %v1633 = vpop.permute.xlu0 %1632
        %1635 = vset.pattern.permute.xlu0 3
        %1636 = vperm.xlu0 %1635, %v433
        %v1637 = vpop.permute.xlu0 %1636
        %1639 = vset.pattern.permute.xlu0 3
        %1640 = vperm.xlu0 %1639, %v434
        %v1641 = vpop.permute.xlu0 %1640
        %1643 = vset.pattern.permute.xlu0 3
        %1644 = vperm.xlu0 %1643, %v435
        %v1645 = vpop.permute.xlu0 %1644
        %1647 = vset.pattern.permute.xlu0 3
        %1648 = vperm.xlu0 %1647, %v436
        %v1649 = vpop.permute.xlu0 %1648
        %1651 = vset.pattern.permute.xlu0 3
        %1652 = vperm.xlu0 %1651, %v437
        %v1653 = vpop.permute.xlu0 %1652
        %1655 = vset.pattern.permute.xlu0 3
        %1656 = vperm.xlu0 %1655, %v438
        %v1657 = vpop.permute.xlu0 %1656
        %1659 = vset.pattern.permute.xlu0 3
        %1660 = vperm.xlu0 %1659, %v439
        %v1661 = vpop.permute.xlu0 %1660
        %1663 = vset.pattern.permute.xlu0 3
        %1664 = vperm.xlu0 %1663, %v440
        %v1665 = vpop.permute.xlu0 %1664
        %1667 = vset.pattern.permute.xlu0 3
        %1668 = vperm.xlu0 %1667, %v441
        %v1669 = vpop.permute.xlu0 %1668
        %1671 = vset.pattern.permute.xlu0 3
        %1672 = vperm.xlu0 %1671, %v442
        %v1673 = vpop.permute.xlu0 %1672
        %1675 = vset.pattern.permute.xlu0 3
        %1676 = vperm.xlu0 %1675, %v443
        %v1677 = vpop.permute.xlu0 %1676
        %1679 = vset.pattern.permute.xlu0 3
        %1680 = vperm.xlu0 %1679, %v444
        %v1681 = vpop.permute.xlu0 %1680
        %1683 = vset.pattern.permute.xlu0 3
        %1684 = vperm.xlu0 %1683, %v445
        %v1685 = vpop.permute.xlu0 %1684
        %1687 = vset.pattern.permute.xlu0 3
        %1688 = vperm.xlu0 %1687, %v446
        %v1689 = vpop.permute.xlu0 %1688
        %1691 = vset.pattern.permute.xlu0 3
        %1692 = vperm.xlu0 %1691, %v447
        %v1693 = vpop.permute.xlu0 %1692
        %1695 = vset.pattern.permute.xlu0 3
        %1696 = vperm.xlu0 %1695, %v448
        %v1697 = vpop.permute.xlu0 %1696
        %v1699 = vsel %vm1539, %v1573, 0.0
        %v1700 = vsel %vm1540, %v1577, 0.0
        %v1701 = vsel %vm1541, %v1581, 0.0
        %v1702 = vsel %vm1542, %v1585, 0.0
        %v1703 = vsel %vm1543, %v1589, 0.0
        %v1704 = vsel %vm1544, %v1593, 0.0
        %v1705 = vsel %vm1545, %v1597, 0.0
        %v1706 = vsel %vm1546, %v1601, 0.0
        %v1707 = vsel %vm1547, %v1605, 0.0
        %v1708 = vsel %vm1548, %v1609, 0.0
        %v1709 = vsel %vm1549, %v1613, 0.0
        %v1710 = vsel %vm1550, %v1617, 0.0
        %v1711 = vsel %vm1551, %v1621, 0.0
        %v1712 = vsel %vm1552, %v1625, 0.0
        %v1713 = vsel %vm1553, %v1629, 0.0
        %v1714 = vsel %vm1554, %v1633, 0.0
        %v1715 = vsel %vm1555, %v1637, 0.0
        %v1716 = vsel %vm1556, %v1641, 0.0
        %v1717 = vsel %vm1557, %v1645, 0.0
        %v1718 = vsel %vm1558, %v1649, 0.0
        %v1719 = vsel %vm1559, %v1653, 0.0
        %v1720 = vsel %vm1560, %v1657, 0.0
        %v1721 = vsel %vm1561, %v1661, 0.0
        %v1722 = vsel %vm1562, %v1665, 0.0
        %v1723 = vsel %vm1563, %v1669, 0.0
        %v1724 = vsel %vm1564, %v1673, 0.0
        %v1725 = vsel %vm1565, %v1677, 0.0
        %v1726 = vsel %vm1566, %v1681, 0.0
        %v1727 = vsel %vm1567, %v1685, 0.0
        %v1728 = vsel %vm1568, %v1689, 0.0
        %v1729 = vsel %vm1569, %v1693, 0.0
        %v1730 = vsel %vm1570, %v1697, 0.0
        %v1731 = vadd.f32 %v1411, %v1699
        %v1732 = vadd.f32 %v1412, %v1700
        %v1733 = vadd.f32 %v1413, %v1701
        %v1734 = vadd.f32 %v1414, %v1702
        %v1735 = vadd.f32 %v1415, %v1703
        %v1736 = vadd.f32 %v1416, %v1704
        %v1737 = vadd.f32 %v1417, %v1705
        %v1738 = vadd.f32 %v1418, %v1706
        %v1739 = vadd.f32 %v1419, %v1707
        %v1740 = vadd.f32 %v1420, %v1708
        %v1741 = vadd.f32 %v1421, %v1709
        %v1742 = vadd.f32 %v1422, %v1710
        %v1743 = vadd.f32 %v1423, %v1711
        %v1744 = vadd.f32 %v1424, %v1712
        %v1745 = vadd.f32 %v1425, %v1713
        %v1746 = vadd.f32 %v1426, %v1714
        %v1747 = vadd.f32 %v1427, %v1715
        %v1748 = vadd.f32 %v1428, %v1716
        %v1749 = vadd.f32 %v1429, %v1717
        %v1750 = vadd.f32 %v1430, %v1718
        %v1751 = vadd.f32 %v1431, %v1719
        %v1752 = vadd.f32 %v1432, %v1720
        %v1753 = vadd.f32 %v1433, %v1721
        %v1754 = vadd.f32 %v1434, %v1722
        %v1755 = vadd.f32 %v1435, %v1723
        %v1756 = vadd.f32 %v1436, %v1724
        %v1757 = vadd.f32 %v1437, %v1725
        %v1758 = vadd.f32 %v1438, %v1726
        %v1759 = vadd.f32 %v1439, %v1727
        %v1760 = vadd.f32 %v1440, %v1728
        %v1761 = vadd.f32 %v1441, %v1729
        %v1762 = vadd.f32 %v1442, %v1730
        %v1763 = vld [vmem:[%s2] sm:$0xff]
        %v1764 = vld [vmem:[%s2 + $0x8] sm:$0xff]
        %v1765 = vld [vmem:[%s2 + $0x10] sm:$0xff]
        %v1766 = vld [vmem:[%s2 + $0x18] sm:$0xff]
        %v1767 = vld [vmem:[%s2 + $0x20] sm:$0xff]
        %vm1768 = vcmask 326656
        %v1770 = vsel %vm1768, %v1731, 0
        %v1773 = vsel %vm1768, %v1732, 0
        %v1776 = vsel %vm1768, %v1733, 0
        %v1779 = vsel %vm1768, %v1734, 0
        %v1782 = vsel %vm1768, %v1735, 0
        %v1785 = vsel %vm1768, %v1736, 0
        %v1788 = vsel %vm1768, %v1737, 0
        %v1791 = vsel %vm1768, %v1738, 0
        %v1794 = vsel %vm1768, %v1739, 0
        %v1797 = vsel %vm1768, %v1740, 0
        %v1800 = vsel %vm1768, %v1741, 0
        %v1803 = vsel %vm1768, %v1742, 0
        %v1806 = vsel %vm1768, %v1743, 0
        %v1809 = vsel %vm1768, %v1744, 0
        %v1812 = vsel %vm1768, %v1745, 0
        %v1815 = vsel %vm1768, %v1746, 0
        %v1818 = vsel %vm1768, %v1747, 0
        %v1821 = vsel %vm1768, %v1748, 0
        %v1824 = vsel %vm1768, %v1749, 0
        %v1827 = vsel %vm1768, %v1750, 0
        %v1830 = vsel %vm1768, %v1751, 0
        %v1833 = vsel %vm1768, %v1752, 0
        %v1836 = vsel %vm1768, %v1753, 0
        %v1839 = vsel %vm1768, %v1754, 0
        %v1842 = vsel %vm1768, %v1755, 0
        %v1845 = vsel %vm1768, %v1756, 0
        %v1848 = vsel %vm1768, %v1757, 0
        %v1851 = vsel %vm1768, %v1758, 0
        %v1854 = vsel %vm1768, %v1759, 0
        %v1857 = vsel %vm1768, %v1760, 0
        %v1860 = vsel %vm1768, %v1761, 0
        %v1863 = vsel %vm1768, %v1762, 0
        %1865 = vmatprep.subr.mxu0 0.0
        %1866 = vmatpush1.msra.mxu0 %v1763
        %1867 = vmatprep.subr.mxu0 0.0
        %1868 = vmatpush1.msra.mxu0 %v1764
        %1869 = vmatprep.subr.mxu0 0.0
        %1870 = vmatpush1.msra.mxu0 %v1765
        %1871 = vmatprep.subr.mxu0 0.0
        %1872 = vmatpush1.msra.mxu0 %v1766
        %1873 = vmatprep.subr.mxu0 0.0
        %1874 = vmatpush1.msra.mxu0 %v1767
        %1875 = vmatprep.subr.mxu0 0.0
        %1876 = vmatpush1.msra.mxu0 0.0
        %1877 = vmatprep.subr.mxu0 0.0
        %1878 = vmatpush1.msra.mxu0 0.0
        %1879 = vmatprep.subr.mxu0 0.0
        %1880 = vmatpush1.msra.mxu0 0.0
        %1881 = vmatprep.subr.mxu0 0.0
        %1882 = vmatpush1.msra.mxu0 0.0
        %1883 = vmatprep.subr.mxu0 0.0
        %1884 = vmatpush1.msra.mxu0 0.0
        %1885 = vmatprep.subr.mxu0 0.0
        %1886 = vmatpush1.msra.mxu0 0.0
        %1887 = vmatprep.subr.mxu0 0.0
        %1888 = vmatpush1.msra.mxu0 0.0
        %1889 = vmatprep.subr.mxu0 0.0
        %1890 = vmatpush1.msra.mxu0 0.0
        %1891 = vmatprep.subr.mxu0 0.0
        %1892 = vmatpush1.msra.mxu0 0.0
        %1893 = vmatprep.subr.mxu0 0.0
        %1894 = vmatpush1.msra.mxu0 0.0
        %1895 = vmatprep.subr.mxu0 0.0
        %1896 = vmatpush1.msra.mxu0 0.0
        %1897 = vmatprep.subr.mxu0 0.0
        %1898 = vmatpush1.msra.mxu0 0.0
        %1899 = vmatprep.subr.mxu0 0.0
        %1900 = vmatpush1.msra.mxu0 0.0
        %1901 = vmatprep.subr.mxu0 0.0
        %1902 = vmatpush1.msra.mxu0 0.0
        %1903 = vmatprep.subr.mxu0 0.0
        %1904 = vmatpush1.msra.mxu0 0.0
        %1905 = vmatprep.subr.mxu0 0.0
        %1906 = vmatpush1.msra.mxu0 0.0
        %1907 = vmatprep.subr.mxu0 0.0
        %1908 = vmatpush1.msra.mxu0 0.0
        %1909 = vmatprep.subr.mxu0 0.0
        %1910 = vmatpush1.msra.mxu0 0.0
        %1911 = vmatprep.subr.mxu0 0.0
        %1912 = vmatpush1.msra.mxu0 0.0
        %1913 = vmatprep.subr.mxu0 0.0
        %1914 = vmatpush1.msra.mxu0 0.0
        %1915 = vmatprep.subr.mxu0 0.0
        %1916 = vmatpush1.msra.mxu0 0.0
        %1917 = vmatprep.subr.mxu0 0.0
        %1918 = vmatpush1.msra.mxu0 0.0
        %1919 = vmatprep.subr.mxu0 0.0
        %1920 = vmatpush1.msra.mxu0 0.0
        %1921 = vmatprep.subr.mxu0 0.0
        %1922 = vmatpush1.msra.mxu0 0.0
        %1923 = vmatprep.subr.mxu0 0.0
        %1924 = vmatpush1.msra.mxu0 0.0
        %1925 = vmatprep.subr.mxu0 0.0
        %1926 = vmatpush1.msra.mxu0 0.0
        %1927 = vmatprep.subr.mxu0 0.0
        %1928 = vmatpush1.msra.mxu0 0.0
        %1929 = vmatprep.mubr.f32.mxu0 0.0
        %1930 = vmatmul.mubr.f32.gmra.mrb[0].mxu0 %v1770
        %v1931 = vpop.f32.mrb[0].mxu0
        %v1932 = vadd.f32 0.0, %v1931
        %v1933 = vpop.f32.mrb[0].mxu0
        %1934 = vmatprep.mubr.f32.mxu0 0.0
        %1935 = vmatmul.mubr.f32.gmra.mrb[0].mxu0 %v1773
        %v1936 = vpop.f32.mrb[0].mxu0
        %v1937 = vadd.f32 0.0, %v1936
        %v1938 = vpop.f32.mrb[0].mxu0
        %1939 = vmatprep.mubr.f32.mxu0 0.0
        %1940 = vmatmul.mubr.f32.gmra.mrb[0].mxu0 %v1776
        %v1941 = vpop.f32.mrb[0].mxu0
        %v1942 = vadd.f32 0.0, %v1941
        %v1943 = vpop.f32.mrb[0].mxu0
        %1944 = vmatprep.mubr.f32.mxu0 0.0
        %1945 = vmatmul.mubr.f32.gmra.mrb[0].mxu0 %v1779
        %v1946 = vpop.f32.mrb[0].mxu0
        %v1947 = vadd.f32 0.0, %v1946
        %v1948 = vpop.f32.mrb[0].mxu0
        %1949 = vmatprep.mubr.f32.mxu0 0.0
        %1950 = vmatmul.mubr.f32.gmra.mrb[0].mxu0 %v1782
        %v1951 = vpop.f32.mrb[0].mxu0
        %v1952 = vadd.f32 0.0, %v1951
        %v1953 = vpop.f32.mrb[0].mxu0
        %1954 = vmatprep.mubr.f32.mxu0 0.0
        %1955 = vmatmul.mubr.f32.gmra.mrb[0].mxu0 %v1785
        %v1956 = vpop.f32.mrb[0].mxu0
        %v1957 = vadd.f32 0.0, %v1956
        %v1958 = vpop.f32.mrb[0].mxu0
        %1959 = vmatprep.mubr.f32.mxu0 0.0
        %1960 = vmatmul.mubr.f32.gmra.mrb[0].mxu0 %v1788
        %v1961 = vpop.f32.mrb[0].mxu0
        %v1962 = vadd.f32 0.0, %v1961
        %v1963 = vpop.f32.mrb[0].mxu0
        %1964 = vmatprep.mubr.f32.mxu0 0.0
        %1965 = vmatmul.mubr.f32.gmra.mrb[0].mxu0 %v1791
        %v1966 = vpop.f32.mrb[0].mxu0
        %v1967 = vadd.f32 0.0, %v1966
        %v1968 = vpop.f32.mrb[0].mxu0
        %1969 = vmatprep.mubr.f32.mxu0 0.0
        %1970 = vmatmul.mubr.f32.gmra.mrb[0].mxu0 %v1794
        %v1971 = vpop.f32.mrb[0].mxu0
        %v1972 = vadd.f32 0.0, %v1971
        %v1973 = vpop.f32.mrb[0].mxu0
        %1974 = vmatprep.mubr.f32.mxu0 0.0
        %1975 = vmatmul.mubr.f32.gmra.mrb[0].mxu0 %v1797
        %v1976 = vpop.f32.mrb[0].mxu0
        %v1977 = vadd.f32 0.0, %v1976
        %v1978 = vpop.f32.mrb[0].mxu0
        %1979 = vmatprep.mubr.f32.mxu0 0.0
        %1980 = vmatmul.mubr.f32.gmra.mrb[0].mxu0 %v1800
        %v1981 = vpop.f32.mrb[0].mxu0
        %v1982 = vadd.f32 0.0, %v1981
        %v1983 = vpop.f32.mrb[0].mxu0
        %1984 = vmatprep.mubr.f32.mxu0 0.0
        %1985 = vmatmul.mubr.f32.gmra.mrb[0].mxu0 %v1803
        %v1986 = vpop.f32.mrb[0].mxu0
        %v1987 = vadd.f32 0.0, %v1986
        %v1988 = vpop.f32.mrb[0].mxu0
        %1989 = vmatprep.mubr.f32.mxu0 0.0
        %1990 = vmatmul.mubr.f32.gmra.mrb[0].mxu0 %v1806
        %v1991 = vpop.f32.mrb[0].mxu0
        %v1992 = vadd.f32 0.0, %v1991
        %v1993 = vpop.f32.mrb[0].mxu0
        %1994 = vmatprep.mubr.f32.mxu0 0.0
        %1995 = vmatmul.mubr.f32.gmra.mrb[0].mxu0 %v1809
        %v1996 = vpop.f32.mrb[0].mxu0
        %v1997 = vadd.f32 0.0, %v1996
        %v1998 = vpop.f32.mrb[0].mxu0
        %1999 = vmatprep.mubr.f32.mxu0 0.0
        %2000 = vmatmul.mubr.f32.gmra.mrb[0].mxu0 %v1812
        %v2001 = vpop.f32.mrb[0].mxu0
        %v2002 = vadd.f32 0.0, %v2001
        %v2003 = vpop.f32.mrb[0].mxu0
        %2004 = vmatprep.mubr.f32.mxu0 0.0
        %2005 = vmatmul.mubr.f32.gmra.mrb[0].mxu0 %v1815
        %v2006 = vpop.f32.mrb[0].mxu0
        %v2007 = vadd.f32 0.0, %v2006
        %v2008 = vpop.f32.mrb[0].mxu0
        %2009 = vmatprep.mubr.f32.mxu0 0.0
        %2010 = vmatmul.mubr.f32.gmra.mrb[0].mxu0 %v1818
        %v2011 = vpop.f32.mrb[0].mxu0
        %v2012 = vadd.f32 0.0, %v2011
        %v2013 = vpop.f32.mrb[0].mxu0
        %2014 = vmatprep.mubr.f32.mxu0 0.0
        %2015 = vmatmul.mubr.f32.gmra.mrb[0].mxu0 %v1821
        %v2016 = vpop.f32.mrb[0].mxu0
        %v2017 = vadd.f32 0.0, %v2016
        %v2018 = vpop.f32.mrb[0].mxu0
        %2019 = vmatprep.mubr.f32.mxu0 0.0
        %2020 = vmatmul.mubr.f32.gmra.mrb[0].mxu0 %v1824
        %v2021 = vpop.f32.mrb[0].mxu0
        %v2022 = vadd.f32 0.0, %v2021
        %v2023 = vpop.f32.mrb[0].mxu0
        %2024 = vmatprep.mubr.f32.mxu0 0.0
        %2025 = vmatmul.mubr.f32.gmra.mrb[0].mxu0 %v1827
        %v2026 = vpop.f32.mrb[0].mxu0
        %v2027 = vadd.f32 0.0, %v2026
        %v2028 = vpop.f32.mrb[0].mxu0
        %2029 = vmatprep.mubr.f32.mxu0 0.0
        %2030 = vmatmul.mubr.f32.gmra.mrb[0].mxu0 %v1830
        %v2031 = vpop.f32.mrb[0].mxu0
        %v2032 = vadd.f32 0.0, %v2031
        %v2033 = vpop.f32.mrb[0].mxu0
        %2034 = vmatprep.mubr.f32.mxu0 0.0
        %2035 = vmatmul.mubr.f32.gmra.mrb[0].mxu0 %v1833
        %v2036 = vpop.f32.mrb[0].mxu0
        %v2037 = vadd.f32 0.0, %v2036
        %v2038 = vpop.f32.mrb[0].mxu0
        %2039 = vmatprep.mubr.f32.mxu0 0.0
        %2040 = vmatmul.mubr.f32.gmra.mrb[0].mxu0 %v1836
        %v2041 = vpop.f32.mrb[0].mxu0
        %v2042 = vadd.f32 0.0, %v2041
        %v2043 = vpop.f32.mrb[0].mxu0
        %2044 = vmatprep.mubr.f32.mxu0 0.0
        %2045 = vmatmul.mubr.f32.gmra.mrb[0].mxu0 %v1839
        %v2046 = vpop.f32.mrb[0].mxu0
        %v2047 = vadd.f32 0.0, %v2046
        %v2048 = vpop.f32.mrb[0].mxu0
        %2049 = vmatprep.mubr.f32.mxu0 0.0
        %2050 = vmatmul.mubr.f32.gmra.mrb[0].mxu0 %v1842
        %v2051 = vpop.f32.mrb[0].mxu0
        %v2052 = vadd.f32 0.0, %v2051
        %v2053 = vpop.f32.mrb[0].mxu0
        %2054 = vmatprep.mubr.f32.mxu0 0.0
        %2055 = vmatmul.mubr.f32.gmra.mrb[0].mxu0 %v1845
        %v2056 = vpop.f32.mrb[0].mxu0
        %v2057 = vadd.f32 0.0, %v2056
        %v2058 = vpop.f32.mrb[0].mxu0
        %2059 = vmatprep.mubr.f32.mxu0 0.0
        %2060 = vmatmul.mubr.f32.gmra.mrb[0].mxu0 %v1848
        %v2061 = vpop.f32.mrb[0].mxu0
        %v2062 = vadd.f32 0.0, %v2061
        %v2063 = vpop.f32.mrb[0].mxu0
        %2064 = vmatprep.mubr.f32.mxu0 0.0
        %2065 = vmatmul.mubr.f32.gmra.mrb[0].mxu0 %v1851
        %v2066 = vpop.f32.mrb[0].mxu0
        %v2067 = vadd.f32 0.0, %v2066
        %v2068 = vpop.f32.mrb[0].mxu0
        %2069 = vmatprep.mubr.f32.mxu0 0.0
        %2070 = vmatmul.mubr.f32.gmra.mrb[0].mxu0 %v1854
        %v2071 = vpop.f32.mrb[0].mxu0
        %v2072 = vadd.f32 0.0, %v2071
        %v2073 = vpop.f32.mrb[0].mxu0
        %2074 = vmatprep.mubr.f32.mxu0 0.0
        %2075 = vmatmul.mubr.f32.gmra.mrb[0].mxu0 %v1857
        %v2076 = vpop.f32.mrb[0].mxu0
        %v2077 = vadd.f32 0.0, %v2076
        %v2078 = vpop.f32.mrb[0].mxu0
        %2079 = vmatprep.mubr.f32.mxu0 0.0
        %2080 = vmatmul.mubr.f32.gmra.mrb[0].mxu0 %v1860
        %v2081 = vpop.f32.mrb[0].mxu0
        %v2082 = vadd.f32 0.0, %v2081
        %v2083 = vpop.f32.mrb[0].mxu0
        %2084 = vmatprep.mubr.f32.mxu0 0.0
        %2085 = vmatmul.mubr.f32.gmra.mrb[0].mxu0 %v1863
        %v2086 = vpop.f32.mrb[0].mxu0
        %v2087 = vadd.f32 0.0, %v2086
        %v2088 = vpop.f32.mrb[0].mxu0
        %2089 = vdwg.mxu0
        %v2090 = vld [vmem:[%s3] sm:$0xff]
        %v2091 = vld [vmem:[%s3 + $0x8] sm:$0xff]
        %vm2092 = vcmask 130048
        %v2094 = vsel %vm2092, %v1932, 0
        %v2097 = vsel %vm2092, %v1937, 0
        %v2100 = vsel %vm2092, %v1942, 0
        %v2103 = vsel %vm2092, %v1947, 0
        %v2106 = vsel %vm2092, %v1952, 0
        %v2109 = vsel %vm2092, %v1957, 0
        %v2112 = vsel %vm2092, %v1962, 0
        %v2115 = vsel %vm2092, %v1967, 0
        %v2118 = vsel %vm2092, %v1972, 0
        %v2121 = vsel %vm2092, %v1977, 0
        %v2124 = vsel %vm2092, %v1982, 0
        %v2127 = vsel %vm2092, %v1987, 0
        %v2130 = vsel %vm2092, %v1992, 0
        %v2133 = vsel %vm2092, %v1997, 0
        %v2136 = vsel %vm2092, %v2002, 0
        %v2139 = vsel %vm2092, %v2007, 0
        %v2142 = vsel %vm2092, %v2012, 0
        %v2145 = vsel %vm2092, %v2017, 0
        %v2148 = vsel %vm2092, %v2022, 0
        %v2151 = vsel %vm2092, %v2027, 0
        %v2154 = vsel %vm2092, %v2032, 0
        %v2157 = vsel %vm2092, %v2037, 0
        %v2160 = vsel %vm2092, %v2042, 0
        %v2163 = vsel %vm2092, %v2047, 0
        %v2166 = vsel %vm2092, %v2052, 0
        %v2169 = vsel %vm2092, %v2057, 0
        %v2172 = vsel %vm2092, %v2062, 0
        %v2175 = vsel %vm2092, %v2067, 0
        %v2178 = vsel %vm2092, %v2072, 0
        %v2181 = vsel %vm2092, %v2077, 0
        %v2184 = vsel %vm2092, %v2082, 0
        %v2187 = vsel %vm2092, %v2087, 0
        %2189 = vmatprep.subr.mxu0 0.0
        %2190 = vmatpush1.msra.mxu0 %v2090
        %2191 = vmatprep.subr.mxu0 0.0
        %2192 = vmatpush1.msra.mxu0 %v2091
        %2193 = vmatprep.subr.mxu0 0.0
        %2194 = vmatpush1.msra.mxu0 0.0
        %2195 = vmatprep.subr.mxu0 0.0
        %2196 = vmatpush1.msra.mxu0 0.0
        %2197 = vmatprep.subr.mxu0 0.0
        %2198 = vmatpush1.msra.mxu0 0.0
        %2199 = vmatprep.subr.mxu0 0.0
        %2200 = vmatpush1.msra.mxu0 0.0
        %2201 = vmatprep.subr.mxu0 0.0
        %2202 = vmatpush1.msra.mxu0 0.0
        %2203 = vmatprep.subr.mxu0 0.0
        %2204 = vmatpush1.msra.mxu0 0.0
        %2205 = vmatprep.subr.mxu0 0.0
        %2206 = vmatpush1.msra.mxu0 0.0
        %2207 = vmatprep.subr.mxu0 0.0
        %2208 = vmatpush1.msra.mxu0 0.0
        %2209 = vmatprep.subr.mxu0 0.0
        %2210 = vmatpush1.msra.mxu0 0.0
        %2211 = vmatprep.subr.mxu0 0.0
        %2212 = vmatpush1.msra.mxu0 0.0
        %2213 = vmatprep.subr.mxu0 0.0
        %2214 = vmatpush1.msra.mxu0 0.0
        %2215 = vmatprep.subr.mxu0 0.0
        %2216 = vmatpush1.msra.mxu0 0.0
        %2217 = vmatprep.subr.mxu0 0.0
        %2218 = vmatpush1.msra.mxu0 0.0
        %2219 = vmatprep.subr.mxu0 0.0
        %2220 = vmatpush1.msra.mxu0 0.0
        %2221 = vmatprep.subr.mxu0 0.0
        %2222 = vmatpush1.msra.mxu0 0.0
        %2223 = vmatprep.subr.mxu0 0.0
        %2224 = vmatpush1.msra.mxu0 0.0
        %2225 = vmatprep.subr.mxu0 0.0
        %2226 = vmatpush1.msra.mxu0 0.0
        %2227 = vmatprep.subr.mxu0 0.0
        %2228 = vmatpush1.msra.mxu0 0.0
        %2229 = vmatprep.subr.mxu0 0.0
        %2230 = vmatpush1.msra.mxu0 0.0
        %2231 = vmatprep.subr.mxu0 0.0
        %2232 = vmatpush1.msra.mxu0 0.0
        %2233 = vmatprep.subr.mxu0 0.0
        %2234 = vmatpush1.msra.mxu0 0.0
        %2235 = vmatprep.subr.mxu0 0.0
        %2236 = vmatpush1.msra.mxu0 0.0
        %2237 = vmatprep.subr.mxu0 0.0
        %2238 = vmatpush1.msra.mxu0 0.0
        %2239 = vmatprep.subr.mxu0 0.0
        %2240 = vmatpush1.msra.mxu0 0.0
        %2241 = vmatprep.subr.mxu0 0.0
        %2242 = vmatpush1.msra.mxu0 0.0
        %2243 = vmatprep.subr.mxu0 0.0
        %2244 = vmatpush1.msra.mxu0 0.0
        %2245 = vmatprep.subr.mxu0 0.0
        %2246 = vmatpush1.msra.mxu0 0.0
        %2247 = vmatprep.subr.mxu0 0.0
        %2248 = vmatpush1.msra.mxu0 0.0
        %2249 = vmatprep.subr.mxu0 0.0
        %2250 = vmatpush1.msra.mxu0 0.0
        %2251 = vmatprep.subr.mxu0 0.0
        %2252 = vmatpush1.msra.mxu0 0.0
        %2253 = vmatprep.mubr.f32.mxu0 0.0
        %2254 = vmatmul.mubr.f32.gmra.mrb[0].mxu0 %v2094
        %v2255 = vpop.f32.mrb[0].mxu0
        %v2256 = vadd.f32 0.0, %v2255
        %v2257 = vpop.f32.mrb[0].mxu0
        %2258 = vmatprep.mubr.f32.mxu0 0.0
        %2259 = vmatmul.mubr.f32.gmra.mrb[0].mxu0 %v2097
        %v2260 = vpop.f32.mrb[0].mxu0
        %v2261 = vadd.f32 0.0, %v2260
        %v2262 = vpop.f32.mrb[0].mxu0
        %2263 = vmatprep.mubr.f32.mxu0 0.0
        %2264 = vmatmul.mubr.f32.gmra.mrb[0].mxu0 %v2100
        %v2265 = vpop.f32.mrb[0].mxu0
        %v2266 = vadd.f32 0.0, %v2265
        %v2267 = vpop.f32.mrb[0].mxu0
        %2268 = vmatprep.mubr.f32.mxu0 0.0
        %2269 = vmatmul.mubr.f32.gmra.mrb[0].mxu0 %v2103
        %v2270 = vpop.f32.mrb[0].mxu0
        %v2271 = vadd.f32 0.0, %v2270
        %v2272 = vpop.f32.mrb[0].mxu0
        %2273 = vmatprep.mubr.f32.mxu0 0.0
        %2274 = vmatmul.mubr.f32.gmra.mrb[0].mxu0 %v2106
        %v2275 = vpop.f32.mrb[0].mxu0
        %v2276 = vadd.f32 0.0, %v2275
        %v2277 = vpop.f32.mrb[0].mxu0
        %2278 = vmatprep.mubr.f32.mxu0 0.0
        %2279 = vmatmul.mubr.f32.gmra.mrb[0].mxu0 %v2109
        %v2280 = vpop.f32.mrb[0].mxu0
        %v2281 = vadd.f32 0.0, %v2280
        %v2282 = vpop.f32.mrb[0].mxu0
        %2283 = vmatprep.mubr.f32.mxu0 0.0
        %2284 = vmatmul.mubr.f32.gmra.mrb[0].mxu0 %v2112
        %v2285 = vpop.f32.mrb[0].mxu0
        %v2286 = vadd.f32 0.0, %v2285
        %v2287 = vpop.f32.mrb[0].mxu0
        %2288 = vmatprep.mubr.f32.mxu0 0.0
        %2289 = vmatmul.mubr.f32.gmra.mrb[0].mxu0 %v2115
        %v2290 = vpop.f32.mrb[0].mxu0
        %v2291 = vadd.f32 0.0, %v2290
        %v2292 = vpop.f32.mrb[0].mxu0
        %2293 = vmatprep.mubr.f32.mxu0 0.0
        %2294 = vmatmul.mubr.f32.gmra.mrb[0].mxu0 %v2118
        %v2295 = vpop.f32.mrb[0].mxu0
        %v2296 = vadd.f32 0.0, %v2295
        %v2297 = vpop.f32.mrb[0].mxu0
        %2298 = vmatprep.mubr.f32.mxu0 0.0
        %2299 = vmatmul.mubr.f32.gmra.mrb[0].mxu0 %v2121
        %v2300 = vpop.f32.mrb[0].mxu0
        %v2301 = vadd.f32 0.0, %v2300
        %v2302 = vpop.f32.mrb[0].mxu0
        %2303 = vmatprep.mubr.f32.mxu0 0.0
        %2304 = vmatmul.mubr.f32.gmra.mrb[0].mxu0 %v2124
        %v2305 = vpop.f32.mrb[0].mxu0
        %v2306 = vadd.f32 0.0, %v2305
        %v2307 = vpop.f32.mrb[0].mxu0
        %2308 = vmatprep.mubr.f32.mxu0 0.0
        %2309 = vmatmul.mubr.f32.gmra.mrb[0].mxu0 %v2127
        %v2310 = vpop.f32.mrb[0].mxu0
        %v2311 = vadd.f32 0.0, %v2310
        %v2312 = vpop.f32.mrb[0].mxu0
        %2313 = vmatprep.mubr.f32.mxu0 0.0
        %2314 = vmatmul.mubr.f32.gmra.mrb[0].mxu0 %v2130
        %v2315 = vpop.f32.mrb[0].mxu0
        %v2316 = vadd.f32 0.0, %v2315
        %v2317 = vpop.f32.mrb[0].mxu0
        %2318 = vmatprep.mubr.f32.mxu0 0.0
        %2319 = vmatmul.mubr.f32.gmra.mrb[0].mxu0 %v2133
        %v2320 = vpop.f32.mrb[0].mxu0
        %v2321 = vadd.f32 0.0, %v2320
        %v2322 = vpop.f32.mrb[0].mxu0
        %2323 = vmatprep.mubr.f32.mxu0 0.0
        %2324 = vmatmul.mubr.f32.gmra.mrb[0].mxu0 %v2136
        %v2325 = vpop.f32.mrb[0].mxu0
        %v2326 = vadd.f32 0.0, %v2325
        %v2327 = vpop.f32.mrb[0].mxu0
        %2328 = vmatprep.mubr.f32.mxu0 0.0
        %2329 = vmatmul.mubr.f32.gmra.mrb[0].mxu0 %v2139
        %v2330 = vpop.f32.mrb[0].mxu0
        %v2331 = vadd.f32 0.0, %v2330
        %v2332 = vpop.f32.mrb[0].mxu0
        %2333 = vmatprep.mubr.f32.mxu0 0.0
        %2334 = vmatmul.mubr.f32.gmra.mrb[0].mxu0 %v2142
        %v2335 = vpop.f32.mrb[0].mxu0
        %v2336 = vadd.f32 0.0, %v2335
        %v2337 = vpop.f32.mrb[0].mxu0
        %2338 = vmatprep.mubr.f32.mxu0 0.0
        %2339 = vmatmul.mubr.f32.gmra.mrb[0].mxu0 %v2145
        %v2340 = vpop.f32.mrb[0].mxu0
        %v2341 = vadd.f32 0.0, %v2340
        %v2342 = vpop.f32.mrb[0].mxu0
        %2343 = vmatprep.mubr.f32.mxu0 0.0
        %2344 = vmatmul.mubr.f32.gmra.mrb[0].mxu0 %v2148
        %v2345 = vpop.f32.mrb[0].mxu0
        %v2346 = vadd.f32 0.0, %v2345
        %v2347 = vpop.f32.mrb[0].mxu0
        %2348 = vmatprep.mubr.f32.mxu0 0.0
        %2349 = vmatmul.mubr.f32.gmra.mrb[0].mxu0 %v2151
        %v2350 = vpop.f32.mrb[0].mxu0
        %v2351 = vadd.f32 0.0, %v2350
        %v2352 = vpop.f32.mrb[0].mxu0
        %2353 = vmatprep.mubr.f32.mxu0 0.0
        %2354 = vmatmul.mubr.f32.gmra.mrb[0].mxu0 %v2154
        %v2355 = vpop.f32.mrb[0].mxu0
        %v2356 = vadd.f32 0.0, %v2355
        %v2357 = vpop.f32.mrb[0].mxu0
        %2358 = vmatprep.mubr.f32.mxu0 0.0
        %2359 = vmatmul.mubr.f32.gmra.mrb[0].mxu0 %v2157
        %v2360 = vpop.f32.mrb[0].mxu0
        %v2361 = vadd.f32 0.0, %v2360
        %v2362 = vpop.f32.mrb[0].mxu0
        %2363 = vmatprep.mubr.f32.mxu0 0.0
        %2364 = vmatmul.mubr.f32.gmra.mrb[0].mxu0 %v2160
        %v2365 = vpop.f32.mrb[0].mxu0
        %v2366 = vadd.f32 0.0, %v2365
        %v2367 = vpop.f32.mrb[0].mxu0
        %2368 = vmatprep.mubr.f32.mxu0 0.0
        %2369 = vmatmul.mubr.f32.gmra.mrb[0].mxu0 %v2163
        %v2370 = vpop.f32.mrb[0].mxu0
        %v2371 = vadd.f32 0.0, %v2370
        %v2372 = vpop.f32.mrb[0].mxu0
        %2373 = vmatprep.mubr.f32.mxu0 0.0
        %2374 = vmatmul.mubr.f32.gmra.mrb[0].mxu0 %v2166
        %v2375 = vpop.f32.mrb[0].mxu0
        %v2376 = vadd.f32 0.0, %v2375
        %v2377 = vpop.f32.mrb[0].mxu0
        %2378 = vmatprep.mubr.f32.mxu0 0.0
        %2379 = vmatmul.mubr.f32.gmra.mrb[0].mxu0 %v2169
        %v2380 = vpop.f32.mrb[0].mxu0
        %v2381 = vadd.f32 0.0, %v2380
        %v2382 = vpop.f32.mrb[0].mxu0
        %2383 = vmatprep.mubr.f32.mxu0 0.0
        %2384 = vmatmul.mubr.f32.gmra.mrb[0].mxu0 %v2172
        %v2385 = vpop.f32.mrb[0].mxu0
        %v2386 = vadd.f32 0.0, %v2385
        %v2387 = vpop.f32.mrb[0].mxu0
        %2388 = vmatprep.mubr.f32.mxu0 0.0
        %2389 = vmatmul.mubr.f32.gmra.mrb[0].mxu0 %v2175
        %v2390 = vpop.f32.mrb[0].mxu0
        %v2391 = vadd.f32 0.0, %v2390
        %v2392 = vpop.f32.mrb[0].mxu0
        %2393 = vmatprep.mubr.f32.mxu0 0.0
        %2394 = vmatmul.mubr.f32.gmra.mrb[0].mxu0 %v2178
        %v2395 = vpop.f32.mrb[0].mxu0
        %v2396 = vadd.f32 0.0, %v2395
        %v2397 = vpop.f32.mrb[0].mxu0
        %2398 = vmatprep.mubr.f32.mxu0 0.0
        %2399 = vmatmul.mubr.f32.gmra.mrb[0].mxu0 %v2181
        %v2400 = vpop.f32.mrb[0].mxu0
        %v2401 = vadd.f32 0.0, %v2400
        %v2402 = vpop.f32.mrb[0].mxu0
        %2403 = vmatprep.mubr.f32.mxu0 0.0
        %2404 = vmatmul.mubr.f32.gmra.mrb[0].mxu0 %v2184
        %v2405 = vpop.f32.mrb[0].mxu0
        %v2406 = vadd.f32 0.0, %v2405
        %v2407 = vpop.f32.mrb[0].mxu0
        %2408 = vmatprep.mubr.f32.mxu0 0.0
        %2409 = vmatmul.mubr.f32.gmra.mrb[0].mxu0 %v2187
        %v2410 = vpop.f32.mrb[0].mxu0
        %v2411 = vadd.f32 0.0, %v2410
        %v2412 = vpop.f32.mrb[0].mxu0
        %2413 = vdwg.mxu0
        %v2414 = vmul.f32 %v2256, %v2256
        %v2415 = vmul.f32 %v2261, %v2261
        %v2416 = vmul.f32 %v2266, %v2266
        %v2417 = vmul.f32 %v2271, %v2271
        %v2418 = vmul.f32 %v2276, %v2276
        %v2419 = vmul.f32 %v2281, %v2281
        %v2420 = vmul.f32 %v2286, %v2286
        %v2421 = vmul.f32 %v2291, %v2291
        %v2422 = vmul.f32 %v2296, %v2296
        %v2423 = vmul.f32 %v2301, %v2301
        %v2424 = vmul.f32 %v2306, %v2306
        %v2425 = vmul.f32 %v2311, %v2311
        %v2426 = vmul.f32 %v2316, %v2316
        %v2427 = vmul.f32 %v2321, %v2321
        %v2428 = vmul.f32 %v2326, %v2326
        %v2429 = vmul.f32 %v2331, %v2331
        %v2430 = vmul.f32 %v2336, %v2336
        %v2431 = vmul.f32 %v2341, %v2341
        %v2432 = vmul.f32 %v2346, %v2346
        %v2433 = vmul.f32 %v2351, %v2351
        %v2434 = vmul.f32 %v2356, %v2356
        %v2435 = vmul.f32 %v2361, %v2361
        %v2436 = vmul.f32 %v2366, %v2366
        %v2437 = vmul.f32 %v2371, %v2371
        %v2438 = vmul.f32 %v2376, %v2376
        %v2439 = vmul.f32 %v2381, %v2381
        %v2440 = vmul.f32 %v2386, %v2386
        %v2441 = vmul.f32 %v2391, %v2391
        %v2442 = vmul.f32 %v2396, %v2396
        %v2443 = vmul.f32 %v2401, %v2401
        %v2444 = vmul.f32 %v2406, %v2406
        %v2445 = vmul.f32 %v2411, %v2411
        %2478 = vrot.lane.b32.xlu0 %v2414, 96
        %v2479 = vpop.permute.xlu0 %2478
        %2480 = vrot.lane.b32.xlu0 %v2415, 96
        %v2481 = vpop.permute.xlu0 %2480
        %2482 = vrot.lane.b32.xlu0 %v2416, 96
        %v2483 = vpop.permute.xlu0 %2482
        %2484 = vrot.lane.b32.xlu0 %v2417, 96
        %v2485 = vpop.permute.xlu0 %2484
        %2486 = vrot.lane.b32.xlu0 %v2418, 96
        %v2487 = vpop.permute.xlu0 %2486
        %2488 = vrot.lane.b32.xlu0 %v2419, 96
        %v2489 = vpop.permute.xlu0 %2488
        %2490 = vrot.lane.b32.xlu0 %v2420, 96
        %v2491 = vpop.permute.xlu0 %2490
        %2492 = vrot.lane.b32.xlu0 %v2421, 96
        %v2493 = vpop.permute.xlu0 %2492
        %2494 = vrot.lane.b32.xlu0 %v2422, 96
        %v2495 = vpop.permute.xlu0 %2494
        %2496 = vrot.lane.b32.xlu0 %v2423, 96
        %v2497 = vpop.permute.xlu0 %2496
        %2498 = vrot.lane.b32.xlu0 %v2424, 96
        %v2499 = vpop.permute.xlu0 %2498
        %2500 = vrot.lane.b32.xlu0 %v2425, 96
        %v2501 = vpop.permute.xlu0 %2500
        %2502 = vrot.lane.b32.xlu0 %v2426, 96
        %v2503 = vpop.permute.xlu0 %2502
        %2504 = vrot.lane.b32.xlu0 %v2427, 96
        %v2505 = vpop.permute.xlu0 %2504
        %2506 = vrot.lane.b32.xlu0 %v2428, 96
        %v2507 = vpop.permute.xlu0 %2506
        %2508 = vrot.lane.b32.xlu0 %v2429, 96
        %v2509 = vpop.permute.xlu0 %2508
        %2510 = vrot.lane.b32.xlu0 %v2430, 96
        %v2511 = vpop.permute.xlu0 %2510
        %2512 = vrot.lane.b32.xlu0 %v2431, 96
        %v2513 = vpop.permute.xlu0 %2512
        %2514 = vrot.lane.b32.xlu0 %v2432, 96
        %v2515 = vpop.permute.xlu0 %2514
        %2516 = vrot.lane.b32.xlu0 %v2433, 96
        %v2517 = vpop.permute.xlu0 %2516
        %2518 = vrot.lane.b32.xlu0 %v2434, 96
        %v2519 = vpop.permute.xlu0 %2518
        %2520 = vrot.lane.b32.xlu0 %v2435, 96
        %v2521 = vpop.permute.xlu0 %2520
        %2522 = vrot.lane.b32.xlu0 %v2436, 96
        %v2523 = vpop.permute.xlu0 %2522
        %2524 = vrot.lane.b32.xlu0 %v2437, 96
        %v2525 = vpop.permute.xlu0 %2524
        %2526 = vrot.lane.b32.xlu0 %v2438, 96
        %v2527 = vpop.permute.xlu0 %2526
        %2528 = vrot.lane.b32.xlu0 %v2439, 96
        %v2529 = vpop.permute.xlu0 %2528
        %2530 = vrot.lane.b32.xlu0 %v2440, 96
        %v2531 = vpop.permute.xlu0 %2530
        %2532 = vrot.lane.b32.xlu0 %v2441, 96
        %v2533 = vpop.permute.xlu0 %2532
        %2534 = vrot.lane.b32.xlu0 %v2442, 96
        %v2535 = vpop.permute.xlu0 %2534
        %2536 = vrot.lane.b32.xlu0 %v2443, 96
        %v2537 = vpop.permute.xlu0 %2536
        %2538 = vrot.lane.b32.xlu0 %v2444, 96
        %v2539 = vpop.permute.xlu0 %2538
        %2540 = vrot.lane.b32.xlu0 %v2445, 96
        %v2541 = vpop.permute.xlu0 %2540
        %v2574 = vadd.f32 %v2256, %v2479
        %v2575 = vadd.f32 %v2261, %v2481
        %v2576 = vadd.f32 %v2266, %v2483
        %v2577 = vadd.f32 %v2271, %v2485
        %v2578 = vadd.f32 %v2276, %v2487
        %v2579 = vadd.f32 %v2281, %v2489
        %v2580 = vadd.f32 %v2286, %v2491
        %v2581 = vadd.f32 %v2291, %v2493
        %v2582 = vadd.f32 %v2296, %v2495
        %v2583 = vadd.f32 %v2301, %v2497
        %v2584 = vadd.f32 %v2306, %v2499
        %v2585 = vadd.f32 %v2311, %v2501
        %v2586 = vadd.f32 %v2316, %v2503
        %v2587 = vadd.f32 %v2321, %v2505
        %v2588 = vadd.f32 %v2326, %v2507
        %v2589 = vadd.f32 %v2331, %v2509
        %v2590 = vadd.f32 %v2336, %v2511
        %v2591 = vadd.f32 %v2341, %v2513
        %v2592 = vadd.f32 %v2346, %v2515
        %v2593 = vadd.f32 %v2351, %v2517
        %v2594 = vadd.f32 %v2356, %v2519
        %v2595 = vadd.f32 %v2361, %v2521
        %v2596 = vadd.f32 %v2366, %v2523
        %v2597 = vadd.f32 %v2371, %v2525
        %v2598 = vadd.f32 %v2376, %v2527
        %v2599 = vadd.f32 %v2381, %v2529
        %v2600 = vadd.f32 %v2386, %v2531
        %v2601 = vadd.f32 %v2391, %v2533
        %v2602 = vadd.f32 %v2396, %v2535
        %v2603 = vadd.f32 %v2401, %v2537
        %v2604 = vadd.f32 %v2406, %v2539
        %v2605 = vadd.f32 %v2411, %v2541
        %v2606 = vld [vmem:[%s5] sm:$0x1]
        %v2607 = vld [vmem:[%s7] sm:$0x1]
        %v2608 = vld [vmem:[%s4] sm:$0xff]
        %v2609 = vld [vmem:[%s4 + $0x8] sm:$0xff]
        %v2610 = vld [vmem:[%s4 + $0x10] sm:$0xff]
        %v2611 = vld [vmem:[%s4 + $0x18] sm:$0xff]
        %v2613 = vlaneseq
        %v2614 = vshrl.u32 %v2613, 7
        %v2615 = vsub.s32 0, %v2614
        %v2616 = vrot.slane %v2606, %v2615
        %vm2618 = vcmask 261120
        %v2620 = vsel %vm2618, %v2574, 0
        %v2623 = vsel %vm2618, %v2575, 0
        %v2626 = vsel %vm2618, %v2576, 0
        %v2629 = vsel %vm2618, %v2577, 0
        %v2632 = vsel %vm2618, %v2578, 0
        %v2635 = vsel %vm2618, %v2579, 0
        %v2638 = vsel %vm2618, %v2580, 0
        %v2641 = vsel %vm2618, %v2581, 0
        %v2644 = vsel %vm2618, %v2582, 0
        %v2647 = vsel %vm2618, %v2583, 0
        %v2650 = vsel %vm2618, %v2584, 0
        %v2653 = vsel %vm2618, %v2585, 0
        %v2656 = vsel %vm2618, %v2586, 0
        %v2659 = vsel %vm2618, %v2587, 0
        %v2662 = vsel %vm2618, %v2588, 0
        %v2665 = vsel %vm2618, %v2589, 0
        %v2668 = vsel %vm2618, %v2590, 0
        %v2671 = vsel %vm2618, %v2591, 0
        %v2674 = vsel %vm2618, %v2592, 0
        %v2677 = vsel %vm2618, %v2593, 0
        %v2680 = vsel %vm2618, %v2594, 0
        %v2683 = vsel %vm2618, %v2595, 0
        %v2686 = vsel %vm2618, %v2596, 0
        %v2689 = vsel %vm2618, %v2597, 0
        %v2692 = vsel %vm2618, %v2598, 0
        %v2695 = vsel %vm2618, %v2599, 0
        %v2698 = vsel %vm2618, %v2600, 0
        %v2701 = vsel %vm2618, %v2601, 0
        %v2704 = vsel %vm2618, %v2602, 0
        %v2707 = vsel %vm2618, %v2603, 0
        %v2710 = vsel %vm2618, %v2604, 0
        %v2713 = vsel %vm2618, %v2605, 0
        %2715 = vmatprep.subr.mxu0 0.0
        %2716 = vmatpush1.msra.mxu0 %v2608
        %2717 = vmatprep.subr.mxu0 0.0
        %2718 = vmatpush1.msra.mxu0 %v2609
        %2719 = vmatprep.subr.mxu0 0.0
        %2720 = vmatpush1.msra.mxu0 %v2610
        %2721 = vmatprep.subr.mxu0 0.0
        %2722 = vmatpush1.msra.mxu0 %v2611
        %2723 = vmatprep.subr.mxu0 0.0
        %2724 = vmatpush1.msra.mxu0 0.0
        %2725 = vmatprep.subr.mxu0 0.0
        %2726 = vmatpush1.msra.mxu0 0.0
        %2727 = vmatprep.subr.mxu0 0.0
        %2728 = vmatpush1.msra.mxu0 0.0
        %2729 = vmatprep.subr.mxu0 0.0
        %2730 = vmatpush1.msra.mxu0 0.0
        %2731 = vmatprep.subr.mxu0 0.0
        %2732 = vmatpush1.msra.mxu0 0.0
        %2733 = vmatprep.subr.mxu0 0.0
        %2734 = vmatpush1.msra.mxu0 0.0
        %2735 = vmatprep.subr.mxu0 0.0
        %2736 = vmatpush1.msra.mxu0 0.0
        %2737 = vmatprep.subr.mxu0 0.0
        %2738 = vmatpush1.msra.mxu0 0.0
        %2739 = vmatprep.subr.mxu0 0.0
        %2740 = vmatpush1.msra.mxu0 0.0
        %2741 = vmatprep.subr.mxu0 0.0
        %2742 = vmatpush1.msra.mxu0 0.0
        %2743 = vmatprep.subr.mxu0 0.0
        %2744 = vmatpush1.msra.mxu0 0.0
        %2745 = vmatprep.subr.mxu0 0.0
        %2746 = vmatpush1.msra.mxu0 0.0
        %2747 = vmatprep.subr.mxu0 0.0
        %2748 = vmatpush1.msra.mxu0 0.0
        %2749 = vmatprep.subr.mxu0 0.0
        %2750 = vmatpush1.msra.mxu0 0.0
        %2751 = vmatprep.subr.mxu0 0.0
        %2752 = vmatpush1.msra.mxu0 0.0
        %2753 = vmatprep.subr.mxu0 0.0
        %2754 = vmatpush1.msra.mxu0 0.0
        %2755 = vmatprep.subr.mxu0 0.0
        %2756 = vmatpush1.msra.mxu0 0.0
        %2757 = vmatprep.subr.mxu0 0.0
        %2758 = vmatpush1.msra.mxu0 0.0
        %2759 = vmatprep.subr.mxu0 0.0
        %2760 = vmatpush1.msra.mxu0 0.0
        %2761 = vmatprep.subr.mxu0 0.0
        %2762 = vmatpush1.msra.mxu0 0.0
        %2763 = vmatprep.subr.mxu0 0.0
        %2764 = vmatpush1.msra.mxu0 0.0
        %2765 = vmatprep.subr.mxu0 0.0
        %2766 = vmatpush1.msra.mxu0 0.0
        %2767 = vmatprep.subr.mxu0 0.0
        %2768 = vmatpush1.msra.mxu0 0.0
        %2769 = vmatprep.subr.mxu0 0.0
        %2770 = vmatpush1.msra.mxu0 0.0
        %2771 = vmatprep.subr.mxu0 0.0
        %2772 = vmatpush1.msra.mxu0 0.0
        %2773 = vmatprep.subr.mxu0 0.0
        %2774 = vmatpush1.msra.mxu0 0.0
        %2775 = vmatprep.subr.mxu0 0.0
        %2776 = vmatpush1.msra.mxu0 0.0
        %2777 = vmatprep.subr.mxu0 0.0
        %2778 = vmatpush1.msra.mxu0 0.0
        %2779 = vmatprep.mubr.f32.mxu0 0.0
        %2780 = vmatmul.mubr.f32.gmra.mrb[0].mxu0 %v2620
        %v2781 = vpop.f32.mrb[0].mxu0
        %v2782 = vadd.f32 %v2616, %v2781
        %v2783 = vpop.f32.mrb[0].mxu0
        %2784 = vmatprep.mubr.f32.mxu0 0.0
        %2785 = vmatmul.mubr.f32.gmra.mrb[0].mxu0 %v2623
        %v2786 = vpop.f32.mrb[0].mxu0
        %v2787 = vadd.f32 %v2616, %v2786
        %v2788 = vpop.f32.mrb[0].mxu0
        %2789 = vmatprep.mubr.f32.mxu0 0.0
        %2790 = vmatmul.mubr.f32.gmra.mrb[0].mxu0 %v2626
        %v2791 = vpop.f32.mrb[0].mxu0
        %v2792 = vadd.f32 %v2616, %v2791
        %v2793 = vpop.f32.mrb[0].mxu0
        %2794 = vmatprep.mubr.f32.mxu0 0.0
        %2795 = vmatmul.mubr.f32.gmra.mrb[0].mxu0 %v2629
        %v2796 = vpop.f32.mrb[0].mxu0
        %v2797 = vadd.f32 %v2616, %v2796
        %v2798 = vpop.f32.mrb[0].mxu0
        %2799 = vmatprep.mubr.f32.mxu0 0.0
        %2800 = vmatmul.mubr.f32.gmra.mrb[0].mxu0 %v2632
        %v2801 = vpop.f32.mrb[0].mxu0
        %v2802 = vadd.f32 %v2616, %v2801
        %v2803 = vpop.f32.mrb[0].mxu0
        %2804 = vmatprep.mubr.f32.mxu0 0.0
        %2805 = vmatmul.mubr.f32.gmra.mrb[0].mxu0 %v2635
        %v2806 = vpop.f32.mrb[0].mxu0
        %v2807 = vadd.f32 %v2616, %v2806
        %v2808 = vpop.f32.mrb[0].mxu0
        %2809 = vmatprep.mubr.f32.mxu0 0.0
        %2810 = vmatmul.mubr.f32.gmra.mrb[0].mxu0 %v2638
        %v2811 = vpop.f32.mrb[0].mxu0
        %v2812 = vadd.f32 %v2616, %v2811
        %v2813 = vpop.f32.mrb[0].mxu0
        %2814 = vmatprep.mubr.f32.mxu0 0.0
        %2815 = vmatmul.mubr.f32.gmra.mrb[0].mxu0 %v2641
        %v2816 = vpop.f32.mrb[0].mxu0
        %v2817 = vadd.f32 %v2616, %v2816
        %v2818 = vpop.f32.mrb[0].mxu0
        %2819 = vmatprep.mubr.f32.mxu0 0.0
        %2820 = vmatmul.mubr.f32.gmra.mrb[0].mxu0 %v2644
        %v2821 = vpop.f32.mrb[0].mxu0
        %v2822 = vadd.f32 %v2616, %v2821
        %v2823 = vpop.f32.mrb[0].mxu0
        %2824 = vmatprep.mubr.f32.mxu0 0.0
        %2825 = vmatmul.mubr.f32.gmra.mrb[0].mxu0 %v2647
        %v2826 = vpop.f32.mrb[0].mxu0
        %v2827 = vadd.f32 %v2616, %v2826
        %v2828 = vpop.f32.mrb[0].mxu0
        %2829 = vmatprep.mubr.f32.mxu0 0.0
        %2830 = vmatmul.mubr.f32.gmra.mrb[0].mxu0 %v2650
        %v2831 = vpop.f32.mrb[0].mxu0
        %v2832 = vadd.f32 %v2616, %v2831
        %v2833 = vpop.f32.mrb[0].mxu0
        %2834 = vmatprep.mubr.f32.mxu0 0.0
        %2835 = vmatmul.mubr.f32.gmra.mrb[0].mxu0 %v2653
        %v2836 = vpop.f32.mrb[0].mxu0
        %v2837 = vadd.f32 %v2616, %v2836
        %v2838 = vpop.f32.mrb[0].mxu0
        %2839 = vmatprep.mubr.f32.mxu0 0.0
        %2840 = vmatmul.mubr.f32.gmra.mrb[0].mxu0 %v2656
        %v2841 = vpop.f32.mrb[0].mxu0
        %v2842 = vadd.f32 %v2616, %v2841
        %v2843 = vpop.f32.mrb[0].mxu0
        %2844 = vmatprep.mubr.f32.mxu0 0.0
        %2845 = vmatmul.mubr.f32.gmra.mrb[0].mxu0 %v2659
        %v2846 = vpop.f32.mrb[0].mxu0
        %v2847 = vadd.f32 %v2616, %v2846
        %v2848 = vpop.f32.mrb[0].mxu0
        %2849 = vmatprep.mubr.f32.mxu0 0.0
        %2850 = vmatmul.mubr.f32.gmra.mrb[0].mxu0 %v2662
        %v2851 = vpop.f32.mrb[0].mxu0
        %v2852 = vadd.f32 %v2616, %v2851
        %v2853 = vpop.f32.mrb[0].mxu0
        %2854 = vmatprep.mubr.f32.mxu0 0.0
        %2855 = vmatmul.mubr.f32.gmra.mrb[0].mxu0 %v2665
        %v2856 = vpop.f32.mrb[0].mxu0
        %v2857 = vadd.f32 %v2616, %v2856
        %v2858 = vpop.f32.mrb[0].mxu0
        %2859 = vmatprep.mubr.f32.mxu0 0.0
        %2860 = vmatmul.mubr.f32.gmra.mrb[0].mxu0 %v2668
        %v2861 = vpop.f32.mrb[0].mxu0
        %v2862 = vadd.f32 %v2616, %v2861
        %v2863 = vpop.f32.mrb[0].mxu0
        %2864 = vmatprep.mubr.f32.mxu0 0.0
        %2865 = vmatmul.mubr.f32.gmra.mrb[0].mxu0 %v2671
        %v2866 = vpop.f32.mrb[0].mxu0
        %v2867 = vadd.f32 %v2616, %v2866
        %v2868 = vpop.f32.mrb[0].mxu0
        %2869 = vmatprep.mubr.f32.mxu0 0.0
        %2870 = vmatmul.mubr.f32.gmra.mrb[0].mxu0 %v2674
        %v2871 = vpop.f32.mrb[0].mxu0
        %v2872 = vadd.f32 %v2616, %v2871
        %v2873 = vpop.f32.mrb[0].mxu0
        %2874 = vmatprep.mubr.f32.mxu0 0.0
        %2875 = vmatmul.mubr.f32.gmra.mrb[0].mxu0 %v2677
        %v2876 = vpop.f32.mrb[0].mxu0
        %v2877 = vadd.f32 %v2616, %v2876
        %v2878 = vpop.f32.mrb[0].mxu0
        %2879 = vmatprep.mubr.f32.mxu0 0.0
        %2880 = vmatmul.mubr.f32.gmra.mrb[0].mxu0 %v2680
        %v2881 = vpop.f32.mrb[0].mxu0
        %v2882 = vadd.f32 %v2616, %v2881
        %v2883 = vpop.f32.mrb[0].mxu0
        %2884 = vmatprep.mubr.f32.mxu0 0.0
        %2885 = vmatmul.mubr.f32.gmra.mrb[0].mxu0 %v2683
        %v2886 = vpop.f32.mrb[0].mxu0
        %v2887 = vadd.f32 %v2616, %v2886
        %v2888 = vpop.f32.mrb[0].mxu0
        %2889 = vmatprep.mubr.f32.mxu0 0.0
        %2890 = vmatmul.mubr.f32.gmra.mrb[0].mxu0 %v2686
        %v2891 = vpop.f32.mrb[0].mxu0
        %v2892 = vadd.f32 %v2616, %v2891
        %v2893 = vpop.f32.mrb[0].mxu0
        %2894 = vmatprep.mubr.f32.mxu0 0.0
        %2895 = vmatmul.mubr.f32.gmra.mrb[0].mxu0 %v2689
        %v2896 = vpop.f32.mrb[0].mxu0
        %v2897 = vadd.f32 %v2616, %v2896
        %v2898 = vpop.f32.mrb[0].mxu0
        %2899 = vmatprep.mubr.f32.mxu0 0.0
        %2900 = vmatmul.mubr.f32.gmra.mrb[0].mxu0 %v2692
        %v2901 = vpop.f32.mrb[0].mxu0
        %v2902 = vadd.f32 %v2616, %v2901
        %v2903 = vpop.f32.mrb[0].mxu0
        %2904 = vmatprep.mubr.f32.mxu0 0.0
        %2905 = vmatmul.mubr.f32.gmra.mrb[0].mxu0 %v2695
        %v2906 = vpop.f32.mrb[0].mxu0
        %v2907 = vadd.f32 %v2616, %v2906
        %v2908 = vpop.f32.mrb[0].mxu0
        %2909 = vmatprep.mubr.f32.mxu0 0.0
        %2910 = vmatmul.mubr.f32.gmra.mrb[0].mxu0 %v2698
        %v2911 = vpop.f32.mrb[0].mxu0
        %v2912 = vadd.f32 %v2616, %v2911
        %v2913 = vpop.f32.mrb[0].mxu0
        %2914 = vmatprep.mubr.f32.mxu0 0.0
        %2915 = vmatmul.mubr.f32.gmra.mrb[0].mxu0 %v2701
        %v2916 = vpop.f32.mrb[0].mxu0
        %v2917 = vadd.f32 %v2616, %v2916
        %v2918 = vpop.f32.mrb[0].mxu0
        %2919 = vmatprep.mubr.f32.mxu0 0.0
        %2920 = vmatmul.mubr.f32.gmra.mrb[0].mxu0 %v2704
        %v2921 = vpop.f32.mrb[0].mxu0
        %v2922 = vadd.f32 %v2616, %v2921
        %v2923 = vpop.f32.mrb[0].mxu0
        %2924 = vmatprep.mubr.f32.mxu0 0.0
        %2925 = vmatmul.mubr.f32.gmra.mrb[0].mxu0 %v2707
        %v2926 = vpop.f32.mrb[0].mxu0
        %v2927 = vadd.f32 %v2616, %v2926
        %v2928 = vpop.f32.mrb[0].mxu0
        %2929 = vmatprep.mubr.f32.mxu0 0.0
        %2930 = vmatmul.mubr.f32.gmra.mrb[0].mxu0 %v2710
        %v2931 = vpop.f32.mrb[0].mxu0
        %v2932 = vadd.f32 %v2616, %v2931
        %v2933 = vpop.f32.mrb[0].mxu0
        %2934 = vmatprep.mubr.f32.mxu0 0.0
        %2935 = vmatmul.mubr.f32.gmra.mrb[0].mxu0 %v2713
        %v2936 = vpop.f32.mrb[0].mxu0
        %v2937 = vadd.f32 %v2616, %v2936
        %v2938 = vpop.f32.mrb[0].mxu0
        %2939 = vdwg.mxu0
        %v2940 = vmax.f32 %v2782, 0.0
        %v2941 = vmax.f32 %v2787, 0.0
        %v2942 = vmax.f32 %v2792, 0.0
        %v2943 = vmax.f32 %v2797, 0.0
        %v2944 = vmax.f32 %v2802, 0.0
        %v2945 = vmax.f32 %v2807, 0.0
        %v2946 = vmax.f32 %v2812, 0.0
        %v2947 = vmax.f32 %v2817, 0.0
        %v2948 = vmax.f32 %v2822, 0.0
        %v2949 = vmax.f32 %v2827, 0.0
        %v2950 = vmax.f32 %v2832, 0.0
        %v2951 = vmax.f32 %v2837, 0.0
        %v2952 = vmax.f32 %v2842, 0.0
        %v2953 = vmax.f32 %v2847, 0.0
        %v2954 = vmax.f32 %v2852, 0.0
        %v2955 = vmax.f32 %v2857, 0.0
        %v2956 = vmax.f32 %v2862, 0.0
        %v2957 = vmax.f32 %v2867, 0.0
        %v2958 = vmax.f32 %v2872, 0.0
        %v2959 = vmax.f32 %v2877, 0.0
        %v2960 = vmax.f32 %v2882, 0.0
        %v2961 = vmax.f32 %v2887, 0.0
        %v2962 = vmax.f32 %v2892, 0.0
        %v2963 = vmax.f32 %v2897, 0.0
        %v2964 = vmax.f32 %v2902, 0.0
        %v2965 = vmax.f32 %v2907, 0.0
        %v2966 = vmax.f32 %v2912, 0.0
        %v2967 = vmax.f32 %v2917, 0.0
        %v2968 = vmax.f32 %v2922, 0.0
        %v2969 = vmax.f32 %v2927, 0.0
        %v2970 = vmax.f32 %v2932, 0.0
        %v2971 = vmax.f32 %v2937, 0.0
        %v2972 = vld [vmem:[%s6] sm:$0xff]
        %v2973 = vld [vmem:[%s6 + $0x8] sm:$0xff]
        %v2974 = vld [vmem:[%s6 + $0x10] sm:$0xff]
        %v2975 = vld [vmem:[%s6 + $0x18] sm:$0xff]
        %v2977 = vlaneseq
        %v2978 = vshrl.u32 %v2977, 7
        %v2979 = vsub.s32 0, %v2978
        %v2980 = vrot.slane %v2607, %v2979
        %v2983 = vsel %vm2618, %v2940, 0
        %v2986 = vsel %vm2618, %v2941, 0
        %v2989 = vsel %vm2618, %v2942, 0
        %v2992 = vsel %vm2618, %v2943, 0
        %v2995 = vsel %vm2618, %v2944, 0
        %v2998 = vsel %vm2618, %v2945, 0
        %v3001 = vsel %vm2618, %v2946, 0
        %v3004 = vsel %vm2618, %v2947, 0
        %v3007 = vsel %vm2618, %v2948, 0
        %v3010 = vsel %vm2618, %v2949, 0
        %v3013 = vsel %vm2618, %v2950, 0
        %v3016 = vsel %vm2618, %v2951, 0
        %v3019 = vsel %vm2618, %v2952, 0
        %v3022 = vsel %vm2618, %v2953, 0
        %v3025 = vsel %vm2618, %v2954, 0
        %v3028 = vsel %vm2618, %v2955, 0
        %v3031 = vsel %vm2618, %v2956, 0
        %v3034 = vsel %vm2618, %v2957, 0
        %v3037 = vsel %vm2618, %v2958, 0
        %v3040 = vsel %vm2618, %v2959, 0
        %v3043 = vsel %vm2618, %v2960, 0
        %v3046 = vsel %vm2618, %v2961, 0
        %v3049 = vsel %vm2618, %v2962, 0
        %v3052 = vsel %vm2618, %v2963, 0
        %v3055 = vsel %vm2618, %v2964, 0
        %v3058 = vsel %vm2618, %v2965, 0
        %v3061 = vsel %vm2618, %v2966, 0
        %v3064 = vsel %vm2618, %v2967, 0
        %v3067 = vsel %vm2618, %v2968, 0
        %v3070 = vsel %vm2618, %v2969, 0
        %v3073 = vsel %vm2618, %v2970, 0
        %v3076 = vsel %vm2618, %v2971, 0
        %3078 = vmatprep.subr.mxu0 0.0
        %3079 = vmatpush1.msra.mxu0 %v2972
        %3080 = vmatprep.subr.mxu0 0.0
        %3081 = vmatpush1.msra.mxu0 %v2973
        %3082 = vmatprep.subr.mxu0 0.0
        %3083 = vmatpush1.msra.mxu0 %v2974
        %3084 = vmatprep.subr.mxu0 0.0
        %3085 = vmatpush1.msra.mxu0 %v2975
        %3086 = vmatprep.subr.mxu0 0.0
        %3087 = vmatpush1.msra.mxu0 0.0
        %3088 = vmatprep.subr.mxu0 0.0
        %3089 = vmatpush1.msra.mxu0 0.0
        %3090 = vmatprep.subr.mxu0 0.0
        %3091 = vmatpush1.msra.mxu0 0.0
        %3092 = vmatprep.subr.mxu0 0.0
        %3093 = vmatpush1.msra.mxu0 0.0
        %3094 = vmatprep.subr.mxu0 0.0
        %3095 = vmatpush1.msra.mxu0 0.0
        %3096 = vmatprep.subr.mxu0 0.0
        %3097 = vmatpush1.msra.mxu0 0.0
        %3098 = vmatprep.subr.mxu0 0.0
        %3099 = vmatpush1.msra.mxu0 0.0
        %3100 = vmatprep.subr.mxu0 0.0
        %3101 = vmatpush1.msra.mxu0 0.0
        %3102 = vmatprep.subr.mxu0 0.0
        %3103 = vmatpush1.msra.mxu0 0.0
        %3104 = vmatprep.subr.mxu0 0.0
        %3105 = vmatpush1.msra.mxu0 0.0
        %3106 = vmatprep.subr.mxu0 0.0
        %3107 = vmatpush1.msra.mxu0 0.0
        %3108 = vmatprep.subr.mxu0 0.0
        %3109 = vmatpush1.msra.mxu0 0.0
        %3110 = vmatprep.subr.mxu0 0.0
        %3111 = vmatpush1.msra.mxu0 0.0
        %3112 = vmatprep.subr.mxu0 0.0
        %3113 = vmatpush1.msra.mxu0 0.0
        %3114 = vmatprep.subr.mxu0 0.0
        %3115 = vmatpush1.msra.mxu0 0.0
        %3116 = vmatprep.subr.mxu0 0.0
        %3117 = vmatpush1.msra.mxu0 0.0
        %3118 = vmatprep.subr.mxu0 0.0
        %3119 = vmatpush1.msra.mxu0 0.0
        %3120 = vmatprep.subr.mxu0 0.0
        %3121 = vmatpush1.msra.mxu0 0.0
        %3122 = vmatprep.subr.mxu0 0.0
        %3123 = vmatpush1.msra.mxu0 0.0
        %3124 = vmatprep.subr.mxu0 0.0
        %3125 = vmatpush1.msra.mxu0 0.0
        %3126 = vmatprep.subr.mxu0 0.0
        %3127 = vmatpush1.msra.mxu0 0.0
        %3128 = vmatprep.subr.mxu0 0.0
        %3129 = vmatpush1.msra.mxu0 0.0
        %3130 = vmatprep.subr.mxu0 0.0
        %3131 = vmatpush1.msra.mxu0 0.0
        %3132 = vmatprep.subr.mxu0 0.0
        %3133 = vmatpush1.msra.mxu0 0.0
        %3134 = vmatprep.subr.mxu0 0.0
        %3135 = vmatpush1.msra.mxu0 0.0
        %3136 = vmatprep.subr.mxu0 0.0
        %3137 = vmatpush1.msra.mxu0 0.0
        %3138 = vmatprep.subr.mxu0 0.0
        %3139 = vmatpush1.msra.mxu0 0.0
        %3140 = vmatprep.subr.mxu0 0.0
        %3141 = vmatpush1.msra.mxu0 0.0
        %3142 = vmatprep.mubr.f32.mxu0 0.0
        %3143 = vmatmul.mubr.f32.gmra.mrb[0].mxu0 %v2983
        %v3144 = vpop.f32.mrb[0].mxu0
        %v3145 = vadd.f32 %v2980, %v3144
        %v3146 = vpop.f32.mrb[0].mxu0
        %3147 = vmatprep.mubr.f32.mxu0 0.0
        %3148 = vmatmul.mubr.f32.gmra.mrb[0].mxu0 %v2986
        %v3149 = vpop.f32.mrb[0].mxu0
        %v3150 = vadd.f32 %v2980, %v3149
        %v3151 = vpop.f32.mrb[0].mxu0
        %3152 = vmatprep.mubr.f32.mxu0 0.0
        %3153 = vmatmul.mubr.f32.gmra.mrb[0].mxu0 %v2989
        %v3154 = vpop.f32.mrb[0].mxu0
        %v3155 = vadd.f32 %v2980, %v3154
        %v3156 = vpop.f32.mrb[0].mxu0
        %3157 = vmatprep.mubr.f32.mxu0 0.0
        %3158 = vmatmul.mubr.f32.gmra.mrb[0].mxu0 %v2992
        %v3159 = vpop.f32.mrb[0].mxu0
        %v3160 = vadd.f32 %v2980, %v3159
        %v3161 = vpop.f32.mrb[0].mxu0
        %3162 = vmatprep.mubr.f32.mxu0 0.0
        %3163 = vmatmul.mubr.f32.gmra.mrb[0].mxu0 %v2995
        %v3164 = vpop.f32.mrb[0].mxu0
        %v3165 = vadd.f32 %v2980, %v3164
        %v3166 = vpop.f32.mrb[0].mxu0
        %3167 = vmatprep.mubr.f32.mxu0 0.0
        %3168 = vmatmul.mubr.f32.gmra.mrb[0].mxu0 %v2998
        %v3169 = vpop.f32.mrb[0].mxu0
        %v3170 = vadd.f32 %v2980, %v3169
        %v3171 = vpop.f32.mrb[0].mxu0
        %3172 = vmatprep.mubr.f32.mxu0 0.0
        %3173 = vmatmul.mubr.f32.gmra.mrb[0].mxu0 %v3001
        %v3174 = vpop.f32.mrb[0].mxu0
        %v3175 = vadd.f32 %v2980, %v3174
        %v3176 = vpop.f32.mrb[0].mxu0
        %3177 = vmatprep.mubr.f32.mxu0 0.0
        %3178 = vmatmul.mubr.f32.gmra.mrb[0].mxu0 %v3004
        %v3179 = vpop.f32.mrb[0].mxu0
        %v3180 = vadd.f32 %v2980, %v3179
        %v3181 = vpop.f32.mrb[0].mxu0
        %3182 = vmatprep.mubr.f32.mxu0 0.0
        %3183 = vmatmul.mubr.f32.gmra.mrb[0].mxu0 %v3007
        %v3184 = vpop.f32.mrb[0].mxu0
        %v3185 = vadd.f32 %v2980, %v3184
        %v3186 = vpop.f32.mrb[0].mxu0
        %3187 = vmatprep.mubr.f32.mxu0 0.0
        %3188 = vmatmul.mubr.f32.gmra.mrb[0].mxu0 %v3010
        %v3189 = vpop.f32.mrb[0].mxu0
        %v3190 = vadd.f32 %v2980, %v3189
        %v3191 = vpop.f32.mrb[0].mxu0
        %3192 = vmatprep.mubr.f32.mxu0 0.0
        %3193 = vmatmul.mubr.f32.gmra.mrb[0].mxu0 %v3013
        %v3194 = vpop.f32.mrb[0].mxu0
        %v3195 = vadd.f32 %v2980, %v3194
        %v3196 = vpop.f32.mrb[0].mxu0
        %3197 = vmatprep.mubr.f32.mxu0 0.0
        %3198 = vmatmul.mubr.f32.gmra.mrb[0].mxu0 %v3016
        %v3199 = vpop.f32.mrb[0].mxu0
        %v3200 = vadd.f32 %v2980, %v3199
        %v3201 = vpop.f32.mrb[0].mxu0
        %3202 = vmatprep.mubr.f32.mxu0 0.0
        %3203 = vmatmul.mubr.f32.gmra.mrb[0].mxu0 %v3019
        %v3204 = vpop.f32.mrb[0].mxu0
        %v3205 = vadd.f32 %v2980, %v3204
        %v3206 = vpop.f32.mrb[0].mxu0
        %3207 = vmatprep.mubr.f32.mxu0 0.0
        %3208 = vmatmul.mubr.f32.gmra.mrb[0].mxu0 %v3022
        %v3209 = vpop.f32.mrb[0].mxu0
        %v3210 = vadd.f32 %v2980, %v3209
        %v3211 = vpop.f32.mrb[0].mxu0
        %3212 = vmatprep.mubr.f32.mxu0 0.0
        %3213 = vmatmul.mubr.f32.gmra.mrb[0].mxu0 %v3025
        %v3214 = vpop.f32.mrb[0].mxu0
        %v3215 = vadd.f32 %v2980, %v3214
        %v3216 = vpop.f32.mrb[0].mxu0
        %3217 = vmatprep.mubr.f32.mxu0 0.0
        %3218 = vmatmul.mubr.f32.gmra.mrb[0].mxu0 %v3028
        %v3219 = vpop.f32.mrb[0].mxu0
        %v3220 = vadd.f32 %v2980, %v3219
        %v3221 = vpop.f32.mrb[0].mxu0
        %3222 = vmatprep.mubr.f32.mxu0 0.0
        %3223 = vmatmul.mubr.f32.gmra.mrb[0].mxu0 %v3031
        %v3224 = vpop.f32.mrb[0].mxu0
        %v3225 = vadd.f32 %v2980, %v3224
        %v3226 = vpop.f32.mrb[0].mxu0
        %3227 = vmatprep.mubr.f32.mxu0 0.0
        %3228 = vmatmul.mubr.f32.gmra.mrb[0].mxu0 %v3034
        %v3229 = vpop.f32.mrb[0].mxu0
        %v3230 = vadd.f32 %v2980, %v3229
        %v3231 = vpop.f32.mrb[0].mxu0
        %3232 = vmatprep.mubr.f32.mxu0 0.0
        %3233 = vmatmul.mubr.f32.gmra.mrb[0].mxu0 %v3037
        %v3234 = vpop.f32.mrb[0].mxu0
        %v3235 = vadd.f32 %v2980, %v3234
        %v3236 = vpop.f32.mrb[0].mxu0
        %3237 = vmatprep.mubr.f32.mxu0 0.0
        %3238 = vmatmul.mubr.f32.gmra.mrb[0].mxu0 %v3040
        %v3239 = vpop.f32.mrb[0].mxu0
        %v3240 = vadd.f32 %v2980, %v3239
        %v3241 = vpop.f32.mrb[0].mxu0
        %3242 = vmatprep.mubr.f32.mxu0 0.0
        %3243 = vmatmul.mubr.f32.gmra.mrb[0].mxu0 %v3043
        %v3244 = vpop.f32.mrb[0].mxu0
        %v3245 = vadd.f32 %v2980, %v3244
        %v3246 = vpop.f32.mrb[0].mxu0
        %3247 = vmatprep.mubr.f32.mxu0 0.0
        %3248 = vmatmul.mubr.f32.gmra.mrb[0].mxu0 %v3046
        %v3249 = vpop.f32.mrb[0].mxu0
        %v3250 = vadd.f32 %v2980, %v3249
        %v3251 = vpop.f32.mrb[0].mxu0
        %3252 = vmatprep.mubr.f32.mxu0 0.0
        %3253 = vmatmul.mubr.f32.gmra.mrb[0].mxu0 %v3049
        %v3254 = vpop.f32.mrb[0].mxu0
        %v3255 = vadd.f32 %v2980, %v3254
        %v3256 = vpop.f32.mrb[0].mxu0
        %3257 = vmatprep.mubr.f32.mxu0 0.0
        %3258 = vmatmul.mubr.f32.gmra.mrb[0].mxu0 %v3052
        %v3259 = vpop.f32.mrb[0].mxu0
        %v3260 = vadd.f32 %v2980, %v3259
        %v3261 = vpop.f32.mrb[0].mxu0
        %3262 = vmatprep.mubr.f32.mxu0 0.0
        %3263 = vmatmul.mubr.f32.gmra.mrb[0].mxu0 %v3055
        %v3264 = vpop.f32.mrb[0].mxu0
        %v3265 = vadd.f32 %v2980, %v3264
        %v3266 = vpop.f32.mrb[0].mxu0
        %3267 = vmatprep.mubr.f32.mxu0 0.0
        %3268 = vmatmul.mubr.f32.gmra.mrb[0].mxu0 %v3058
        %v3269 = vpop.f32.mrb[0].mxu0
        %v3270 = vadd.f32 %v2980, %v3269
        %v3271 = vpop.f32.mrb[0].mxu0
        %3272 = vmatprep.mubr.f32.mxu0 0.0
        %3273 = vmatmul.mubr.f32.gmra.mrb[0].mxu0 %v3061
        %v3274 = vpop.f32.mrb[0].mxu0
        %v3275 = vadd.f32 %v2980, %v3274
        %v3276 = vpop.f32.mrb[0].mxu0
        %3277 = vmatprep.mubr.f32.mxu0 0.0
        %3278 = vmatmul.mubr.f32.gmra.mrb[0].mxu0 %v3064
        %v3279 = vpop.f32.mrb[0].mxu0
        %v3280 = vadd.f32 %v2980, %v3279
        %v3281 = vpop.f32.mrb[0].mxu0
        %3282 = vmatprep.mubr.f32.mxu0 0.0
        %3283 = vmatmul.mubr.f32.gmra.mrb[0].mxu0 %v3067
        %v3284 = vpop.f32.mrb[0].mxu0
        %v3285 = vadd.f32 %v2980, %v3284
        %v3286 = vpop.f32.mrb[0].mxu0
        %3287 = vmatprep.mubr.f32.mxu0 0.0
        %3288 = vmatmul.mubr.f32.gmra.mrb[0].mxu0 %v3070
        %v3289 = vpop.f32.mrb[0].mxu0
        %v3290 = vadd.f32 %v2980, %v3289
        %v3291 = vpop.f32.mrb[0].mxu0
        %3292 = vmatprep.mubr.f32.mxu0 0.0
        %3293 = vmatmul.mubr.f32.gmra.mrb[0].mxu0 %v3073
        %v3294 = vpop.f32.mrb[0].mxu0
        %v3295 = vadd.f32 %v2980, %v3294
        %v3296 = vpop.f32.mrb[0].mxu0
        %3297 = vmatprep.mubr.f32.mxu0 0.0
        %3298 = vmatmul.mubr.f32.gmra.mrb[0].mxu0 %v3076
        %v3299 = vpop.f32.mrb[0].mxu0
        %v3300 = vadd.f32 %v2980, %v3299
        %v3301 = vpop.f32.mrb[0].mxu0
        %3302 = vdwg.mxu0
        %v3303 = vmax.f32 %v3145, 0.0
        %v3304 = vmax.f32 %v3150, 0.0
        %v3305 = vmax.f32 %v3155, 0.0
        %v3306 = vmax.f32 %v3160, 0.0
        %v3307 = vmax.f32 %v3165, 0.0
        %v3308 = vmax.f32 %v3170, 0.0
        %v3309 = vmax.f32 %v3175, 0.0
        %v3310 = vmax.f32 %v3180, 0.0
        %v3311 = vmax.f32 %v3185, 0.0
        %v3312 = vmax.f32 %v3190, 0.0
        %v3313 = vmax.f32 %v3195, 0.0
        %v3314 = vmax.f32 %v3200, 0.0
        %v3315 = vmax.f32 %v3205, 0.0
        %v3316 = vmax.f32 %v3210, 0.0
        %v3317 = vmax.f32 %v3215, 0.0
        %v3318 = vmax.f32 %v3220, 0.0
        %v3319 = vmax.f32 %v3225, 0.0
        %v3320 = vmax.f32 %v3230, 0.0
        %v3321 = vmax.f32 %v3235, 0.0
        %v3322 = vmax.f32 %v3240, 0.0
        %v3323 = vmax.f32 %v3245, 0.0
        %v3324 = vmax.f32 %v3250, 0.0
        %v3325 = vmax.f32 %v3255, 0.0
        %v3326 = vmax.f32 %v3260, 0.0
        %v3327 = vmax.f32 %v3265, 0.0
        %v3328 = vmax.f32 %v3270, 0.0
        %v3329 = vmax.f32 %v3275, 0.0
        %v3330 = vmax.f32 %v3280, 0.0
        %v3331 = vmax.f32 %v3285, 0.0
        %v3332 = vmax.f32 %v3290, 0.0
        %v3333 = vmax.f32 %v3295, 0.0
        %v3334 = vmax.f32 %v3300, 0.0
        %v3335 = vld [vmem:[%s8] sm:$0x1]
        %v3336 = vld [vmem:[#allocation2] sm:$0x1]
        %s3337 = vtos %v3336
        %v3338 = vstv %s3337
        %v3340 = vsel %vm2618, %v3335, 0
        %v3343 = vsel %vm2618, %v3303, 0
        %v3346 = vsel %vm2618, %v3304, 0
        %v3349 = vsel %vm2618, %v3305, 0
        %v3352 = vsel %vm2618, %v3306, 0
        %v3355 = vsel %vm2618, %v3307, 0
        %v3358 = vsel %vm2618, %v3308, 0
        %v3361 = vsel %vm2618, %v3309, 0
        %v3364 = vsel %vm2618, %v3310, 0
        %v3367 = vsel %vm2618, %v3311, 0
        %v3370 = vsel %vm2618, %v3312, 0
        %v3373 = vsel %vm2618, %v3313, 0
        %v3376 = vsel %vm2618, %v3314, 0
        %v3379 = vsel %vm2618, %v3315, 0
        %v3382 = vsel %vm2618, %v3316, 0
        %v3385 = vsel %vm2618, %v3317, 0
        %v3388 = vsel %vm2618, %v3318, 0
        %v3391 = vsel %vm2618, %v3319, 0
        %v3394 = vsel %vm2618, %v3320, 0
        %v3397 = vsel %vm2618, %v3321, 0
        %v3400 = vsel %vm2618, %v3322, 0
        %v3403 = vsel %vm2618, %v3323, 0
        %v3406 = vsel %vm2618, %v3324, 0
        %v3409 = vsel %vm2618, %v3325, 0
        %v3412 = vsel %vm2618, %v3326, 0
        %v3415 = vsel %vm2618, %v3327, 0
        %v3418 = vsel %vm2618, %v3328, 0
        %v3421 = vsel %vm2618, %v3329, 0
        %v3424 = vsel %vm2618, %v3330, 0
        %v3427 = vsel %vm2618, %v3331, 0
        %v3430 = vsel %vm2618, %v3332, 0
        %v3433 = vsel %vm2618, %v3333, 0
        %v3436 = vsel %vm2618, %v3334, 0
        %3438 = vmatprep.subr.mxu0 0.0
        %3439 = vmatpush1.xpose.msra.mxu0 %v3343
        %3440 = vmatprep.subr.mxu0 0.0
        %3441 = vmatpush1.xpose.msra.mxu0 %v3346
        %3442 = vmatprep.subr.mxu0 0.0
        %3443 = vmatpush1.xpose.msra.mxu0 %v3349
        %3444 = vmatprep.subr.mxu0 0.0
        %3445 = vmatpush1.xpose.msra.mxu0 %v3352
        %3446 = vmatprep.subr.mxu0 0.0
        %3447 = vmatpush1.xpose.msra.mxu0 %v3355
        %3448 = vmatprep.subr.mxu0 0.0
        %3449 = vmatpush1.xpose.msra.mxu0 %v3358
        %3450 = vmatprep.subr.mxu0 0.0
        %3451 = vmatpush1.xpose.msra.mxu0 %v3361
        %3452 = vmatprep.subr.mxu0 0.0
        %3453 = vmatpush1.xpose.msra.mxu0 %v3364
        %3454 = vmatprep.subr.mxu0 0.0
        %3455 = vmatpush1.xpose.msra.mxu0 %v3367
        %3456 = vmatprep.subr.mxu0 0.0
        %3457 = vmatpush1.xpose.msra.mxu0 %v3370
        %3458 = vmatprep.subr.mxu0 0.0
        %3459 = vmatpush1.xpose.msra.mxu0 %v3373
        %3460 = vmatprep.subr.mxu0 0.0
        %3461 = vmatpush1.xpose.msra.mxu0 %v3376
        %3462 = vmatprep.subr.mxu0 0.0
        %3463 = vmatpush1.xpose.msra.mxu0 %v3379
        %3464 = vmatprep.subr.mxu0 0.0
        %3465 = vmatpush1.xpose.msra.mxu0 %v3382
        %3466 = vmatprep.subr.mxu0 0.0
        %3467 = vmatpush1.xpose.msra.mxu0 %v3385
        %3468 = vmatprep.subr.mxu0 0.0
        %3469 = vmatpush1.xpose.msra.mxu0 %v3388
        %3470 = vmatprep.subr.mxu0 0.0
        %3471 = vmatpush1.xpose.msra.mxu0 %v3391
        %3472 = vmatprep.subr.mxu0 0.0
        %3473 = vmatpush1.xpose.msra.mxu0 %v3394
        %3474 = vmatprep.subr.mxu0 0.0
        %3475 = vmatpush1.xpose.msra.mxu0 %v3397
        %3476 = vmatprep.subr.mxu0 0.0
        %3477 = vmatpush1.xpose.msra.mxu0 %v3400
        %3478 = vmatprep.subr.mxu0 0.0
        %3479 = vmatpush1.xpose.msra.mxu0 %v3403
        %3480 = vmatprep.subr.mxu0 0.0
        %3481 = vmatpush1.xpose.msra.mxu0 %v3406
        %3482 = vmatprep.subr.mxu0 0.0
        %3483 = vmatpush1.xpose.msra.mxu0 %v3409
        %3484 = vmatprep.subr.mxu0 0.0
        %3485 = vmatpush1.xpose.msra.mxu0 %v3412
        %3486 = vmatprep.subr.mxu0 0.0
        %3487 = vmatpush1.xpose.msra.mxu0 %v3415
        %3488 = vmatprep.subr.mxu0 0.0
        %3489 = vmatpush1.xpose.msra.mxu0 %v3418
        %3490 = vmatprep.subr.mxu0 0.0
        %3491 = vmatpush1.xpose.msra.mxu0 %v3421
        %3492 = vmatprep.subr.mxu0 0.0
        %3493 = vmatpush1.xpose.msra.mxu0 %v3424
        %3494 = vmatprep.subr.mxu0 0.0
        %3495 = vmatpush1.xpose.msra.mxu0 %v3427
        %3496 = vmatprep.subr.mxu0 0.0
        %3497 = vmatpush1.xpose.msra.mxu0 %v3430
        %3498 = vmatprep.subr.mxu0 0.0
        %3499 = vmatpush1.xpose.msra.mxu0 %v3433
        %3500 = vmatprep.subr.mxu0 0.0
        %3501 = vmatpush1.xpose.msra.mxu0 %v3436
        %3502 = vmatprep.mubr.f32.mxu0 0.0
        %3503 = vmatmul.mubr.f32.gmra.mrb[0].mxu0 %v3340
        %v3504 = vpop.f32.mrb[0].mxu0
        %v3505 = vadd.f32 %v3338, %v3504
        %v3506 = vpop.f32.mrb[0].mxu0
        %v3507 = vadd.f32 %v3338, %v3506
        %3508 = vdwg.mxu0
        %v3511 = vcombine.low %v3505, %v3507
        %v3513 = vunpack.c.l.s4 1966171168
        %v3514 = vunpack.c.0.s8 %v3513
        %v3515 = vlaneseq
        %v3516 = vshrl.u32 %v3515, 7
        %v3517 = vsub.s32 %v3514, %v3516
        %v3518 = vrot.slane %v3511, %v3517
        %v3520 = vunpack.c.l.s4 1966171168
        %v3521 = vunpack.c.0.s8 %v3520
        %v3522 = vlaneseq
        %v3523 = vshrl.u32 %v3522, 7
        %v3524 = vsub.s32 %v3521, %v3523
        %v3525 = vrot.slane %v3518, %v3524
        %v3527 = vlaneseq
        %vm3528 = vcmp.ge.s32.totalorder %v3527, 0
        %vm3529 = vcmp.lt.s32.totalorder %v3527, 256
        %vm3530 = vmand %vm3528, %vm3529
        %3531 = vst.msk [vmem:[%s371] sm:$0x3] %vm3530, %v3525
        %s3532 = sand.u32 %s254, 1
        %s3533 = scalar_lea.sflag [#allocation4], %s3532
        %s3534 = sand.u32 %s254, 1
        %s3535 = smul.addr %s3534, 2
        %s3536 = scalar_lea.vmem [#allocation3], %s3535
        // Predicated region
        $region61: #{tpu_custom_call.1} parent=59 // pred_check
          %p3537 = pneg %p264
        $region62: #{tpu_custom_call.1} parent=59 // pred_check_branch
          %3539 = sbr.rel (%p3537) target = $region64
        $region63: #{tpu_custom_call.1} parent=59 // pred_region
          %s3540 = smul.u32 2, %s26
          %s3542 = ssub.s32 32, 32
          %3543 = vsyncadd %s3533, %s3542
          %s3544 = smul.addr %s3540, 16
          %s3545 = scalar_lea.hbm %s10, %s3544
          %s3547 = sshll.u32 %s3536, 4
          %s3548 = int_to_ptr.vmem [resolvable:$true] %s3547
          %3550 = dma.vmem_to_hbm [thread:$0]  %s3548, 32, %s3545, %s3533
        $region64: #{tpu_custom_call.1} parent=59 // pred_fallthru
          _
      $region60: #{tpu_custom_call.1} parent=5 // pred_fallthru
        _
      %p3551 = scmp.le.s32.totalorder 2, %s21
      // Predicated region
      $region65: #{tpu_custom_call.1} parent=5 // pred_check
        %p3552 = pneg %p3551
      $region66: #{tpu_custom_call.1} parent=5 // pred_check_branch
        %3554 = sbr.rel (%p3552) target = $region68
      $region67: #{tpu_custom_call.1} parent=5 // pred_region
        %s3555 = ssub.s32 %s21, 2
        // Predicated region
        $region69: #{tpu_custom_call.1} parent=67 // pred_check
          %p3556 = pneg %p270
        $region70: #{tpu_custom_call.1} parent=67 // pred_check_branch
          %3558 = sbr.rel (%p3556) target = $region72
        $region71: #{tpu_custom_call.1} parent=67 // pred_region
          %s3559 = sand.u32 %s255, 1
          %s3560 = scalar_lea.sflag [#allocation4], %s3559
          %s3561 = sand.u32 %s255, 1
          %s3562 = smul.addr %s3561, 2
          %s3563 = scalar_lea.vmem [#allocation3], %s3562
          %3564 = dma.done %s3560, 32
        $region72: #{tpu_custom_call.1} parent=67 // pred_fallthru
          _
      $region68: #{tpu_custom_call.1} parent=5 // pred_fallthru
        _
    $region6: #{tpu_custom_call.1} parent=1 // loop_footer
      %s25 = sadd.s32 1, %s21
    $region7: #{tpu_custom_call.1} parent=1 // loop_footer_branch
      %20 = sbr.rel target = $region3
    $region8: #{tpu_custom_call.1} parent=1 // loop_exit
      _
    %3565 = vsyncpa [#allocation4], 1
    %s3566 = scalar_lea.sflag [#allocation4], 1
    %3567 = vsyncpa %s3566, 1

</llo_original>
